<compile_context>
chip_gen: v6e
topology: v6e:2x2x1
jax: 0.10.0
libtpu: 0.0.40
codegen_flags: <defaults>
</compile_context>

<pallas_src>
import jax
import jax.numpy as jnp
from jax.experimental import pallas as pl
from jax.experimental.pallas import tpu as pltpu

C_IN = 336
C_OUT = 888
EPS = 1e-5

CO_TILE = 512                 # lane-aligned output tile (multiple of 128)
CO_PAD = 1024                 # C_OUT padded so the grid is 2 equal tiles (also the v7x 2-core split)
Q_PAD_MULT = 8                # pad conv-output positions to a sublane multiple -> unmasked stores


def _fused_kernel(x_ref, r_ref, g_ref, b_ref, sel_ref, w_ref, o_ref):
    """BN(batch stats) -> +residual -> ReLU -> stride-2 1x1 conv (lane-dense matmul)."""
    x = x_ref[...]                                        # [C, P] f32, all spatial positions
    inv_n = 1.0 / x.shape[1]

    # One-pass batch statistics (biased variance, training-mode BatchNorm semantics).
    mean = jnp.sum(x, axis=1, keepdims=True) * inv_n      # [C, 1]   (XLU lane reduce)
    ex2 = jnp.sum(x * x, axis=1, keepdims=True) * inv_n   # [C, 1]
    var = ex2 - mean * mean
    inv_std = jax.lax.rsqrt(var + EPS)                    # EUP

    scale = g_ref[...] * inv_std                          # [C, 1]
    shift = b_ref[...] - mean * scale                     # [C, 1]

    # x407/x408/x409 over the full slab (cheap VPU work), f32 precision.
    y = jnp.maximum(r_ref[...] + x * scale + shift, 0.0)  # [C, P]
    y_bf = y.astype(jnp.bfloat16)

    # Stride-2 subsample + transpose in one tiny MXU op:
    #   sel [Qp, P] (0/1) contracted with y [C, P] over P  ->  y_sel^T [Qp, C]
    y_sel_t = jax.lax.dot_general(
        sel_ref[...], y_bf,
        dimension_numbers=(((1,), (1,)), ((), ())),
        preferred_element_type=jnp.float32,
    )

    # Main matmul: [Qp, C_in] @ [C_in, CO_TILE] -> lane-dense [Qp, CO_TILE] output tile.
    o_ref[...] = jnp.dot(
        y_sel_t.astype(jnp.bfloat16), w_ref[...],
        preferred_element_type=jnp.float32,
    )


@jax.jit
def fused_bn_add_relu_conv(x406, x393, gamma, beta, weight):
    """x406, x393: [N, C_IN, H, W] f32; gamma/beta: [C_IN]; weight: [C_OUT, C_IN]."""
    N, C, H, W = x406.shape
    assert C == C_IN
    Ho, Wo = (H - 1) // 2 + 1, (W - 1) // 2 + 1
    P = N * H * W                      # all positions (BN stats + elementwise)
    Q = N * Ho * Wo                    # stride-2 positions (conv output)
    Qp = ((Q + Q_PAD_MULT - 1) // Q_PAD_MULT) * Q_PAD_MULT   # sublane-aligned row count

    # Channels-major slabs.  At N=1 this is a free reshape (no data movement).
    xf = jnp.transpose(x406, (1, 0, 2, 3)).reshape(C, P)
    rf = jnp.transpose(x393, (1, 0, 2, 3)).reshape(C, P)

    g2 = gamma.reshape(C, 1).astype(jnp.float32)
    b2 = beta.reshape(C, 1).astype(jnp.float32)

    # Constant 0/1 selection matrix picking the stride-2 positions (exact in bf16).
    # Rows Q..Qp-1 are all-zero padding -> zero output rows, sliced off below.
    n_ix = jnp.arange(N)[:, None, None]
    ho_ix = jnp.arange(Ho)[None, :, None]
    wo_ix = jnp.arange(Wo)[None, None, :]
    p_sel = (n_ix * (H * W) + (2 * ho_ix) * W + (2 * wo_ix)).reshape(-1)          # [Q]
    p_sel = jnp.pad(p_sel, (0, Qp - Q), constant_values=-1)                        # [Qp]
    sel = (jnp.arange(P)[None, :] == p_sel[:, None]).astype(jnp.bfloat16)          # [Qp, P]

    # Weight: [C_out, C_in] -> transposed, bf16, zero-padded to CO_PAD lanes (one-time prep).
    wt = jnp.pad(weight.astype(jnp.bfloat16).T, ((0, 0), (0, CO_PAD - C_OUT)))     # [C_in, CO_PAD]

    out2d = pl.pallas_call(
        _fused_kernel,
        out_shape=jax.ShapeDtypeStruct((Qp, CO_PAD), jnp.float32),
        grid_spec=pltpu.PrefetchScalarGridSpec(
            num_scalar_prefetch=0,
            grid=(CO_PAD // CO_TILE,),
            in_specs=[
                pl.BlockSpec((C, P), lambda j: (0, 0)),        # x406 slab (fetched once, resident)
                pl.BlockSpec((C, P), lambda j: (0, 0)),        # x393 slab (fetched once, resident)
                pl.BlockSpec((C, 1), lambda j: (0, 0)),        # gamma
                pl.BlockSpec((C, 1), lambda j: (0, 0)),        # beta
                pl.BlockSpec((Qp, P), lambda j: (0, 0)),       # selection matrix
                pl.BlockSpec((C, CO_TILE), lambda j: (0, j)),  # weight tile (pipelined DMA)
            ],
            out_specs=pl.BlockSpec((Qp, CO_TILE), lambda j: (0, j)),
        ),
        compiler_params=pltpu.CompilerParams(
            dimension_semantics=("parallel",),                 # v7x: shard C_out tiles across TCs
        ),
    )(xf, rf, g2, b2, sel, wt)

    # [Qp, CO_PAD] -> drop row/lane padding -> [N, C_out, Ho, Wo]
    out = out2d[:Q, :C_OUT].reshape(N, Ho, Wo, C_OUT).transpose(0, 3, 1, 2)
    return out


def _reference(x406, x393, gamma, beta, weight):
    """Pure-JAX f32 reference matching the PyTorch training-mode forward."""
    mean = jnp.mean(x406, axis=(0, 2, 3), keepdims=True)
    var = jnp.var(x406, axis=(0, 2, 3), keepdims=True)      # biased
    bn = (x406 - mean) / jnp.sqrt(var + EPS) * gamma.reshape(1, -1, 1, 1) + beta.reshape(1, -1, 1, 1)
    y = jnp.maximum(x393 + bn, 0.0)
    ys = y[:, :, ::2, ::2]                                   # 1x1 conv, stride 2, no bias
    return jnp.einsum("oc,nchw->nohw", weight, ys, precision=jax.lax.Precision.HIGHEST)


if __name__ == "__main__":
    key = jax.random.PRNGKey(0)
    k1, k2, k3, k4, k5 = jax.random.split(key, 5)

    # Shapes implied by the module: 336 -> 888 channels, 14x14 spatial, batch 1.
    N, H, W = 1, 14, 14
    x406 = jax.random.normal(k1, (N, C_IN, H, W), dtype=jnp.float32)
    x393 = jax.random.normal(k2, (N, C_IN, H, W), dtype=jnp.float32)

    gamma = 1.0 + 0.1 * jax.random.normal(k3, (C_IN,), dtype=jnp.float32)
    beta = 0.1 * jax.random.normal(k4, (C_IN,), dtype=jnp.float32)
    weight = jax.random.normal(k5, (C_OUT, C_IN), dtype=jnp.float32) * (1.0 / jnp.sqrt(C_IN))

    out = fused_bn_add_relu_conv(x406, x393, gamma, beta, weight)
    out = jax.block_until_ready(out)
    assert out.shape == (N, C_OUT, 7, 7), out.shape

    ref = _reference(x406, x393, gamma, beta, weight)
    max_err = float(jnp.max(jnp.abs(out - ref)))
    # bf16 MXU operands with f32 accumulation over K=336 -> relax tolerance vs pure-f32.
    assert jnp.allclose(out, ref, atol=2e-2, rtol=2e-2), max_err

    print("KERNEL_OK")
</pallas_src>

<mosaic_0001>
module attributes {stable_mosaic.version = 11 : i64} {
  func.func @_fused_kernel(%arg0: i32, %arg1: memref<336x196xf32, #tpu.memory_space<vmem>>, %arg2: memref<336x196xf32, #tpu.memory_space<vmem>>, %arg3: memref<336x1xf32, #tpu.memory_space<vmem>>, %arg4: memref<336x1xf32, #tpu.memory_space<vmem>>, %arg5: memref<56x196xbf16, #tpu.memory_space<vmem>>, %arg6: memref<336x512xbf16, #tpu.memory_space<vmem>>, %arg7: memref<56x512xf32, #tpu.memory_space<vmem>>) attributes {dimension_semantics = [#tpu.dimension_semantics<parallel>], iteration_bounds = array<i64: 2>, scalar_prefetch = 0 : i64, scratch_operands = 0 : i64, tpu.core_type = #tpu.core_type<tc>, window_params = [{pipeline_mode = #tpu.pipeline_mode<synchronous>, transform_indices = @transform_0, window_bounds = array<i64: 336, 196>}, {pipeline_mode = #tpu.pipeline_mode<synchronous>, transform_indices = @transform_1, window_bounds = array<i64: 336, 196>}, {pipeline_mode = #tpu.pipeline_mode<synchronous>, transform_indices = @transform_2, window_bounds = array<i64: 336, 1>}, {pipeline_mode = #tpu.pipeline_mode<synchronous>, transform_indices = @transform_3, window_bounds = array<i64: 336, 1>}, {pipeline_mode = #tpu.pipeline_mode<synchronous>, transform_indices = @transform_4, window_bounds = array<i64: 56, 196>}, {transform_indices = @transform_5, window_bounds = array<i64: 336, 512>}, {transform_indices = @transform_6, window_bounds = array<i64: 56, 512>}]} {
    %c0 = arith.constant 0 : index
    %c0_0 = arith.constant 0 : index
    %0 = vector.load %arg1[%c0, %c0_0] : memref<336x196xf32, #tpu.memory_space<vmem>>, vector<336x196xf32>
    %cst = arith.constant dense<0.000000e+00> : vector<336xf32>
    %1 = vector.multi_reduction <add>, %0, %cst [1] : vector<336x196xf32> to vector<336xf32>
    %2 = vector.shape_cast %1 : vector<336xf32> to vector<336x1xf32>
    %cst_1 = arith.constant 0.00510204071 : f32
    %3 = vector.broadcast %cst_1 : f32 to vector<336x1xf32>
    %4 = arith.mulf %2, %3 : vector<336x1xf32>
    %5 = arith.mulf %0, %0 : vector<336x196xf32>
    %cst_2 = arith.constant dense<0.000000e+00> : vector<336xf32>
    %6 = vector.multi_reduction <add>, %5, %cst_2 [1] : vector<336x196xf32> to vector<336xf32>
    %7 = vector.shape_cast %6 : vector<336xf32> to vector<336x1xf32>
    %cst_3 = arith.constant 0.00510204071 : f32
    %8 = vector.broadcast %cst_3 : f32 to vector<336x1xf32>
    %9 = arith.mulf %7, %8 : vector<336x1xf32>
    %10 = arith.mulf %4, %4 : vector<336x1xf32>
    %11 = arith.subf %9, %10 : vector<336x1xf32>
    %cst_4 = arith.constant 9.99999974E-6 : f32
    %12 = vector.broadcast %cst_4 : f32 to vector<336x1xf32>
    %13 = arith.addf %11, %12 : vector<336x1xf32>
    %14 = math.rsqrt %13 : vector<336x1xf32>
    %c0_5 = arith.constant 0 : index
    %c0_6 = arith.constant 0 : index
    %15 = vector.load %arg3[%c0_5, %c0_6] : memref<336x1xf32, #tpu.memory_space<vmem>>, vector<336x1xf32>
    %16 = arith.mulf %15, %14 : vector<336x1xf32>
    %c0_7 = arith.constant 0 : index
    %c0_8 = arith.constant 0 : index
    %17 = vector.load %arg4[%c0_7, %c0_8] : memref<336x1xf32, #tpu.memory_space<vmem>>, vector<336x1xf32>
    %18 = arith.mulf %4, %16 : vector<336x1xf32>
    %19 = arith.subf %17, %18 : vector<336x1xf32>
    %c0_9 = arith.constant 0 : index
    %c0_10 = arith.constant 0 : index
    %20 = vector.load %arg2[%c0_9, %c0_10] : memref<336x196xf32, #tpu.memory_space<vmem>>, vector<336x196xf32>
    %21 = vector.broadcast %16 : vector<336x1xf32> to vector<336x196xf32>
    %22 = arith.mulf %0, %21 : vector<336x196xf32>
    %23 = arith.addf %20, %22 : vector<336x196xf32>
    %24 = vector.broadcast %19 : vector<336x1xf32> to vector<336x196xf32>
    %25 = arith.addf %23, %24 : vector<336x196xf32>
    %cst_11 = arith.constant 0.000000e+00 : f32
    %26 = vector.broadcast %cst_11 : f32 to vector<336x196xf32>
    %27 = arith.maximumf %25, %26 : vector<336x196xf32>
    %28 = arith.truncf %27 : vector<336x196xf32> to vector<336x196xbf16>
    %c0_12 = arith.constant 0 : index
    %c0_13 = arith.constant 0 : index
    %29 = vector.load %arg5[%c0_12, %c0_13] : memref<56x196xbf16, #tpu.memory_space<vmem>>, vector<56x196xbf16>
    %cst_14 = arith.constant dense<0.000000e+00> : vector<56x336xf32>
    %30 = tpu.matmul %29, %28, %cst_14 {dimension_numbers = #tpu.dot_dimension_numbers<[1], [1], [0], [0], [0, 0, 1, 0], [], []>} : vector<56x196xbf16>, vector<336x196xbf16>, vector<56x336xf32> -> vector<56x336xf32>
    %31 = arith.truncf %30 : vector<56x336xf32> to vector<56x336xbf16>
    %c0_15 = arith.constant 0 : index
    %c0_16 = arith.constant 0 : index
    %32 = vector.load %arg6[%c0_15, %c0_16] : memref<336x512xbf16, #tpu.memory_space<vmem>>, vector<336x512xbf16>
    %cst_17 = arith.constant dense<0.000000e+00> : vector<56x512xf32>
    %33 = tpu.matmul %31, %32, %cst_17 {dimension_numbers = #tpu.dot_dimension_numbers<[1], [0], [0], [1], [0, 0, 1, 1], [], []>} : vector<56x336xbf16>, vector<336x512xbf16>, vector<56x512xf32> -> vector<56x512xf32>
    %c0_18 = arith.constant 0 : index
    %c0_19 = arith.constant 0 : index
    %34 = vector.load %arg7[%c0_18, %c0_19] : memref<56x512xf32, #tpu.memory_space<vmem>>, vector<56x512xf32>
    tpu.vector_store %arg7[%c0_18, %c0_19], %33 {strides = array<i32>} : memref<56x512xf32, #tpu.memory_space<vmem>>, vector<56x512xf32>,
    return
  }
  func.func @transform_0(%arg0: i32) -> (i32, i32) {
    %c0_i32 = arith.constant 0 : i32
    %c0_i32_0 = arith.constant 0 : i32
    %c0_i32_1 = arith.constant 0 : i32
    return %c0_i32, %c0_i32_0 : i32, i32
  }
  func.func @transform_1(%arg0: i32) -> (i32, i32) {
    %c0_i32 = arith.constant 0 : i32
    %c0_i32_0 = arith.constant 0 : i32
    %c0_i32_1 = arith.constant 0 : i32
    return %c0_i32, %c0_i32_0 : i32, i32
  }
  func.func @transform_2(%arg0: i32) -> (i32, i32) {
    %c0_i32 = arith.constant 0 : i32
    %c0_i32_0 = arith.constant 0 : i32
    %c0_i32_1 = arith.constant 0 : i32
    return %c0_i32, %c0_i32_0 : i32, i32
  }
  func.func @transform_3(%arg0: i32) -> (i32, i32) {
    %c0_i32 = arith.constant 0 : i32
    %c0_i32_0 = arith.constant 0 : i32
    %c0_i32_1 = arith.constant 0 : i32
    return %c0_i32, %c0_i32_0 : i32, i32
  }
  func.func @transform_4(%arg0: i32) -> (i32, i32) {
    %c0_i32 = arith.constant 0 : i32
    %c0_i32_0 = arith.constant 0 : i32
    %c0_i32_1 = arith.constant 0 : i32
    return %c0_i32, %c0_i32_0 : i32, i32
  }
  func.func @transform_5(%arg0: i32) -> (i32, i32) {
    %c0_i32 = arith.constant 0 : i32
    %c0_i32_0 = arith.constant 0 : i32
    return %c0_i32, %arg0 : i32, i32
  }
  func.func @transform_6(%arg0: i32) -> (i32, i32) {
    %c0_i32 = arith.constant 0 : i32
    %c0_i32_0 = arith.constant 0 : i32
    return %c0_i32, %arg0 : i32, i32
  }
}

</mosaic_0001>

<llo_original>
// kernel: fused_bn_add_relu_conv.1
$region0: #{fused_bn_add_relu_conv.1}
  #allocation0 [shape = 'u32[]', space=smem, size = 0x4, offset = 0x4, fixed_abs, tag = 'smem constant byte address 0x4 - core index']
  #allocation1 [shape = 'u32[144,128]{1,0:T(1,128)}', space=vmem, size = 0x12000, scoped, tag = 'internal scratch']
  %s0 = inlined_call_operand.vmem [shape: f32[336,196], index: 0, kind: input, shape index: {}]
  %s1 = inlined_call_operand.vmem [shape: f32[336,196], index: 1, kind: input, shape index: {}]
  %s2 = inlined_call_operand.vmem [shape: f32[336,1], index: 2, kind: input, shape index: {}]
  %s3 = inlined_call_operand.vmem [shape: f32[336,1], index: 3, kind: input, shape index: {}]
  %s4 = inlined_call_operand.vmem [shape: bf16[56,196], index: 4, kind: input, shape index: {}]
  %s5 = inlined_call_operand.vmem [shape: bf16[336,1024], index: 5, kind: input, shape index: {}]
  %s6 = inlined_call_operand.vmem [shape: f32[56,1024], index: 6, kind: output, shape index: {}]
  %s7 = sld [smem:[#allocation0]]
  $region99: #{fused_bn_add_relu_conv.1} parent=0
    _
  %s9 = ssub.s32 1, %s7
  %s10 = scalar_select 0, %s9, %s7
  $region1: #{fused_bn_add_relu_conv.1} parent=0
    #allocation2 [shape = 'u8[688128]{0}', space=vmem, size = 0xa8000, scoped, tag = 'input window, operand 5']
    #allocation3 [shape = 'u8[229376]{0}', space=vmem, size = 0x38000, scoped, tag = 'output window, operand 0']
    loop: start=0, step=1, limit=4
    $region2: #{fused_bn_add_relu_conv.1} parent=1 // loop_pre_header
      _
    $region3: #{fused_bn_add_relu_conv.1} parent=1 // loop_header
      %s12 = sphi 0, %s16
      %p13 = scmp.ge.s32.totalorder %s12, 4
      %s20 = sphi 0, %s20
      %s22 = sphi 0, %s20
      %s23 = sphi 0, %s22
      %s37 = sphi 0, %s23
      %s41 = sphi 0, %s41
      %s43 = sphi 0, %s41
      %s44 = sphi 0, %s43
      %s58 = sphi 0, %s44
      %s62 = sphi 0, %s62
      %s64 = sphi 0, %s62
      %s65 = sphi 0, %s64
      %s79 = sphi 0, %s65
      %s83 = sphi 0, %s83
      %s85 = sphi 0, %s83
      %s86 = sphi 0, %s85
      %s100 = sphi 0, %s86
      %s104 = sphi 0, %s104
      %s106 = sphi 0, %s104
      %s107 = sphi 0, %s106
      %s121 = sphi 0, %s107
      %s127 = sphi 0, %s129
      %s130 = sphi 0, %s127
      %s131 = sphi 0, %s130
      %s147 = sphi 0, %s131
      %s153 = sphi 0, %s155
      %s156 = sphi 0, %s153
      %s157 = sphi 0, %s156
      %s173 = sphi 0, %s157
    $region4: #{fused_bn_add_relu_conv.1} parent=1 // loop_header_branch
      %15 = sbr.rel (%p13) target = $region8
    $region5: #{fused_bn_add_relu_conv.1} parent=1 // loop_body
      %s17 = ssub.s32 %s12, 1
      %s18 = ssub.s32 %s12, 2
      %s19 = sadd.s32 %s12, 1
      %s21 = sadd.s32 %s20, 1
      %p24 = scmp.eq.s32.totalorder %s12, 1
      %p25 = scmp.ne.s32.totalorder %s20, %s22
      %p26 = scmp.eq.s32.totalorder %s12, 0
      %p27 = por %p25, %p26
      %p28 = scmp.ne.s32.totalorder %s20, %s22
      %p29 = scmp.eq.s32.totalorder %s17, 1
      %p30 = por %p28, %p29
      %p31 = scmp.ne.s32.totalorder %s22, %s23
      %p32 = scmp.eq.s32.totalorder %s17, 0
      %p33 = por %p31, %p32
      %p34 = scmp.ne.s32.totalorder %s22, %s23
      %p35 = scmp.eq.s32.totalorder %s18, 1
      %p36 = por %p34, %p35
      %p38 = scmp.ne.s32.totalorder %s23, %s37
      %p39 = scmp.eq.s32.totalorder %s18, 0
      %p40 = por %p38, %p39
      %s42 = sadd.s32 %s41, 1
      %p45 = scmp.eq.s32.totalorder %s12, 1
      %p46 = scmp.ne.s32.totalorder %s41, %s43
      %p47 = scmp.eq.s32.totalorder %s12, 0
      %p48 = por %p46, %p47
      %p49 = scmp.ne.s32.totalorder %s41, %s43
      %p50 = scmp.eq.s32.totalorder %s17, 1
      %p51 = por %p49, %p50
      %p52 = scmp.ne.s32.totalorder %s43, %s44
      %p53 = scmp.eq.s32.totalorder %s17, 0
      %p54 = por %p52, %p53
      %p55 = scmp.ne.s32.totalorder %s43, %s44
      %p56 = scmp.eq.s32.totalorder %s18, 1
      %p57 = por %p55, %p56
      %p59 = scmp.ne.s32.totalorder %s44, %s58
      %p60 = scmp.eq.s32.totalorder %s18, 0
      %p61 = por %p59, %p60
      %s63 = sadd.s32 %s62, 1
      %p66 = scmp.eq.s32.totalorder %s12, 1
      %p67 = scmp.ne.s32.totalorder %s62, %s64
      %p68 = scmp.eq.s32.totalorder %s12, 0
      %p69 = por %p67, %p68
      %p70 = scmp.ne.s32.totalorder %s62, %s64
      %p71 = scmp.eq.s32.totalorder %s17, 1
      %p72 = por %p70, %p71
      %p73 = scmp.ne.s32.totalorder %s64, %s65
      %p74 = scmp.eq.s32.totalorder %s17, 0
      %p75 = por %p73, %p74
      %p76 = scmp.ne.s32.totalorder %s64, %s65
      %p77 = scmp.eq.s32.totalorder %s18, 1
      %p78 = por %p76, %p77
      %p80 = scmp.ne.s32.totalorder %s65, %s79
      %p81 = scmp.eq.s32.totalorder %s18, 0
      %p82 = por %p80, %p81
      %s84 = sadd.s32 %s83, 1
      %p87 = scmp.eq.s32.totalorder %s12, 1
      %p88 = scmp.ne.s32.totalorder %s83, %s85
      %p89 = scmp.eq.s32.totalorder %s12, 0
      %p90 = por %p88, %p89
      %p91 = scmp.ne.s32.totalorder %s83, %s85
      %p92 = scmp.eq.s32.totalorder %s17, 1
      %p93 = por %p91, %p92
      %p94 = scmp.ne.s32.totalorder %s85, %s86
      %p95 = scmp.eq.s32.totalorder %s17, 0
      %p96 = por %p94, %p95
      %p97 = scmp.ne.s32.totalorder %s85, %s86
      %p98 = scmp.eq.s32.totalorder %s18, 1
      %p99 = por %p97, %p98
      %p101 = scmp.ne.s32.totalorder %s86, %s100
      %p102 = scmp.eq.s32.totalorder %s18, 0
      %p103 = por %p101, %p102
      %s105 = sadd.s32 %s104, 1
      %p108 = scmp.eq.s32.totalorder %s12, 1
      %p109 = scmp.ne.s32.totalorder %s104, %s106
      %p110 = scmp.eq.s32.totalorder %s12, 0
      %p111 = por %p109, %p110
      %p112 = scmp.ne.s32.totalorder %s104, %s106
      %p113 = scmp.eq.s32.totalorder %s17, 1
      %p114 = por %p112, %p113
      %p115 = scmp.ne.s32.totalorder %s106, %s107
      %p116 = scmp.eq.s32.totalorder %s17, 0
      %p117 = por %p115, %p116
      %p118 = scmp.ne.s32.totalorder %s106, %s107
      %p119 = scmp.eq.s32.totalorder %s18, 1
      %p120 = por %p118, %p119
      %p122 = scmp.ne.s32.totalorder %s107, %s121
      %p123 = scmp.eq.s32.totalorder %s18, 0
      %p124 = por %p122, %p123
      %s125 = ssub.s32 %s12, %s19
      %p126 = scmp.eq.s32.totalorder %s125, 0
      %s128 = sadd.s32 %s127, 1
      %s129 = scalar_select %p126, %s127, %s128
      %p132 = pneg %p126
      %p133 = scmp.eq.s32.totalorder %s12, 1
      %p134 = por %p132, %p133
      %p135 = scmp.ne.s32.totalorder %s127, %s130
      %p136 = scmp.eq.s32.totalorder %s12, 0
      %p137 = por %p135, %p136
      %p138 = scmp.ne.s32.totalorder %s127, %s130
      %p139 = scmp.eq.s32.totalorder %s17, 1
      %p140 = por %p138, %p139
      %p141 = scmp.ne.s32.totalorder %s130, %s131
      %p142 = scmp.eq.s32.totalorder %s17, 0
      %p143 = por %p141, %p142
      %p144 = scmp.ne.s32.totalorder %s130, %s131
      %p145 = scmp.eq.s32.totalorder %s18, 1
      %p146 = por %p144, %p145
      %p148 = scmp.ne.s32.totalorder %s131, %s147
      %p149 = scmp.eq.s32.totalorder %s18, 0
      %p150 = por %p148, %p149
      %s151 = ssub.s32 %s12, %s19
      %p152 = scmp.eq.s32.totalorder %s151, 0
      %s154 = sadd.s32 %s153, 1
      %s155 = scalar_select %p152, %s153, %s154
      %p158 = pneg %p152
      %p159 = scmp.eq.s32.totalorder %s12, 1
      %p160 = por %p158, %p159
      %p161 = scmp.ne.s32.totalorder %s153, %s156
      %p162 = scmp.eq.s32.totalorder %s12, 0
      %p163 = por %p161, %p162
      %p164 = scmp.ne.s32.totalorder %s153, %s156
      %p165 = scmp.eq.s32.totalorder %s17, 1
      %p166 = por %p164, %p165
      %p167 = scmp.ne.s32.totalorder %s156, %s157
      %p168 = scmp.eq.s32.totalorder %s17, 0
      %p169 = por %p167, %p168
      %p170 = scmp.ne.s32.totalorder %s156, %s157
      %p171 = scmp.eq.s32.totalorder %s18, 1
      %p172 = por %p170, %p171
      %p174 = scmp.ne.s32.totalorder %s157, %s173
      %p175 = scmp.eq.s32.totalorder %s18, 0
      %p176 = por %p174, %p175
      %p177 = scmp.le.s32.totalorder 1, %s12
      %p178 = scmp.lt.s32.totalorder %s12, 3
      %p179 = pnand %p177, %p178
      %p180 = pneg %p179
      // Predicated region
      $region9: #{fused_bn_add_relu_conv.1} parent=5 // pred_check
        _
      $region10: #{fused_bn_add_relu_conv.1} parent=5 // pred_check_branch
        %182 = sbr.rel (%p179) target = $region12
      $region11: #{fused_bn_add_relu_conv.1} parent=5 // pred_region
        %s183 = ssub.s32 %s12, 1
        // Predicated region
        $region13: #{fused_bn_add_relu_conv.1} parent=11 // pred_check
          %p184 = pneg %p33
        $region14: #{fused_bn_add_relu_conv.1} parent=11 // pred_check_branch
          %186 = sbr.rel (%p184) target = $region16
        $region15: #{fused_bn_add_relu_conv.1} parent=11 // pred_region
          _
        $region16: #{fused_bn_add_relu_conv.1} parent=11 // pred_fallthru
          _
        // Predicated region
        $region17: #{fused_bn_add_relu_conv.1} parent=11 // pred_check
          %p187 = pneg %p54
        $region18: #{fused_bn_add_relu_conv.1} parent=11 // pred_check_branch
          %189 = sbr.rel (%p187) target = $region20
        $region19: #{fused_bn_add_relu_conv.1} parent=11 // pred_region
          _
        $region20: #{fused_bn_add_relu_conv.1} parent=11 // pred_fallthru
          _
        // Predicated region
        $region21: #{fused_bn_add_relu_conv.1} parent=11 // pred_check
          %p190 = pneg %p75
        $region22: #{fused_bn_add_relu_conv.1} parent=11 // pred_check_branch
          %192 = sbr.rel (%p190) target = $region24
        $region23: #{fused_bn_add_relu_conv.1} parent=11 // pred_region
          _
        $region24: #{fused_bn_add_relu_conv.1} parent=11 // pred_fallthru
          _
        // Predicated region
        $region25: #{fused_bn_add_relu_conv.1} parent=11 // pred_check
          %p193 = pneg %p96
        $region26: #{fused_bn_add_relu_conv.1} parent=11 // pred_check_branch
          %195 = sbr.rel (%p193) target = $region28
        $region27: #{fused_bn_add_relu_conv.1} parent=11 // pred_region
          _
        $region28: #{fused_bn_add_relu_conv.1} parent=11 // pred_fallthru
          _
        // Predicated region
        $region29: #{fused_bn_add_relu_conv.1} parent=11 // pred_check
          %p196 = pneg %p117
        $region30: #{fused_bn_add_relu_conv.1} parent=11 // pred_check_branch
          %198 = sbr.rel (%p196) target = $region32
        $region31: #{fused_bn_add_relu_conv.1} parent=11 // pred_region
          _
        $region32: #{fused_bn_add_relu_conv.1} parent=11 // pred_fallthru
          _
      $region12: #{fused_bn_add_relu_conv.1} parent=5 // pred_fallthru
        _
      %p199 = scmp.lt.s32.totalorder %s12, 2
      // Predicated region
      $region33: #{fused_bn_add_relu_conv.1} parent=5 // pred_check
        %p200 = pneg %p199
      $region34: #{fused_bn_add_relu_conv.1} parent=5 // pred_check_branch
        %202 = sbr.rel (%p200) target = $region36
      $region35: #{fused_bn_add_relu_conv.1} parent=5 // pred_region
        // Predicated region
        $region37: #{fused_bn_add_relu_conv.1} parent=35 // pred_check
          %p203 = pneg %p137
        $region38: #{fused_bn_add_relu_conv.1} parent=35 // pred_check_branch
          %205 = sbr.rel (%p203) target = $region40
        $region39: #{fused_bn_add_relu_conv.1} parent=35 // pred_region
          %s206 = sand.u32 %s127, 1
          %s207 = sand.u32 %s127, 1
          %s208 = smul.addr %s207, 672
          %s209 = scalar_lea.vmem [#allocation2], %s208
          %s210 = smul.u32 4, %s12
          %s211 = smul.addr %s210, 4
          %s212 = scalar_lea.vmem %s5, %s211
          // Predicated region
          $region41: #{fused_bn_add_relu_conv.1} parent=39 // pred_check
            _
          $region42: #{fused_bn_add_relu_conv.1} parent=39 // pred_check_branch
            %214 = sbr.rel (0) target = $region44
          $region43: #{fused_bn_add_relu_conv.1} parent=39 // pred_region
            // Predicated region
            $region45: #{fused_bn_add_relu_conv.1} parent=43 // pred_check
              _
            $region46: #{fused_bn_add_relu_conv.1} parent=43 // pred_check_branch
              %216 = sbr.rel (0) target = $region48
            $region47: #{fused_bn_add_relu_conv.1} parent=43 // pred_region
              loop: start=0, step=1, limit=1
              $region49: #{fused_bn_add_relu_conv.1} parent=47 // loop_pre_header
                _
              $region50: #{fused_bn_add_relu_conv.1} parent=47 // loop_header
                %s218 = sphi 0, %s222
                %p219 = scmp.ge.s32.totalorder %s218, 1
                %s223 = sphi %s212, %s212
                %s224 = sphi %s209, %s209
              $region51: #{fused_bn_add_relu_conv.1} parent=47 // loop_header_branch
                %221 = sbr.rel (%p219) target = $region55
              $region52: #{fused_bn_add_relu_conv.1} parent=47 // loop_body
                %v225 = vld [vmem:[%s223] sm:$0xff]
                %226 = vst [vmem:[%s224] sm:$0xff] %v225
                %v227 = vld [vmem:[%s223 + $0x8] sm:$0xff]
                %228 = vst [vmem:[%s224 + $0x8] sm:$0xff] %v227
                %v229 = vld [vmem:[%s223 + $0x20] sm:$0xff]
                %230 = vst [vmem:[%s224 + $0x10] sm:$0xff] %v229
                %v231 = vld [vmem:[%s223 + $0x28] sm:$0xff]
                %232 = vst [vmem:[%s224 + $0x18] sm:$0xff] %v231
                %v233 = vld [vmem:[%s223 + $0x40] sm:$0xff]
                %234 = vst [vmem:[%s224 + $0x20] sm:$0xff] %v233
                %v235 = vld [vmem:[%s223 + $0x48] sm:$0xff]
                %236 = vst [vmem:[%s224 + $0x28] sm:$0xff] %v235
                %v237 = vld [vmem:[%s223 + $0x60] sm:$0xff]
                %238 = vst [vmem:[%s224 + $0x30] sm:$0xff] %v237
                %v239 = vld [vmem:[%s223 + $0x68] sm:$0xff]
                %240 = vst [vmem:[%s224 + $0x38] sm:$0xff] %v239
                %v241 = vld [vmem:[%s223 + $0x80] sm:$0xff]
                %242 = vst [vmem:[%s224 + $0x40] sm:$0xff] %v241
                %v243 = vld [vmem:[%s223 + $0x88] sm:$0xff]
                %244 = vst [vmem:[%s224 + $0x48] sm:$0xff] %v243
                %v245 = vld [vmem:[%s223 + $0xa0] sm:$0xff]
                %246 = vst [vmem:[%s224 + $0x50] sm:$0xff] %v245
                %v247 = vld [vmem:[%s223 + $0xa8] sm:$0xff]
                %248 = vst [vmem:[%s224 + $0x58] sm:$0xff] %v247
                %v249 = vld [vmem:[%s223 + $0xc0] sm:$0xff]
                %250 = vst [vmem:[%s224 + $0x60] sm:$0xff] %v249
                %v251 = vld [vmem:[%s223 + $0xc8] sm:$0xff]
                %252 = vst [vmem:[%s224 + $0x68] sm:$0xff] %v251
                %v253 = vld [vmem:[%s223 + $0xe0] sm:$0xff]
                %254 = vst [vmem:[%s224 + $0x70] sm:$0xff] %v253
                %v255 = vld [vmem:[%s223 + $0xe8] sm:$0xff]
                %256 = vst [vmem:[%s224 + $0x78] sm:$0xff] %v255
                %v257 = vld [vmem:[%s223 + $0x100] sm:$0xff]
                %258 = vst [vmem:[%s224 + $0x80] sm:$0xff] %v257
                %v259 = vld [vmem:[%s223 + $0x108] sm:$0xff]
                %260 = vst [vmem:[%s224 + $0x88] sm:$0xff] %v259
                %v261 = vld [vmem:[%s223 + $0x120] sm:$0xff]
                %262 = vst [vmem:[%s224 + $0x90] sm:$0xff] %v261
                %v263 = vld [vmem:[%s223 + $0x128] sm:$0xff]
                %264 = vst [vmem:[%s224 + $0x98] sm:$0xff] %v263
                %v265 = vld [vmem:[%s223 + $0x140] sm:$0xff]
                %266 = vst [vmem:[%s224 + $0xa0] sm:$0xff] %v265
                %v267 = vld [vmem:[%s223 + $0x148] sm:$0xff]
                %268 = vst [vmem:[%s224 + $0xa8] sm:$0xff] %v267
                %v269 = vld [vmem:[%s223 + $0x160] sm:$0xff]
                %270 = vst [vmem:[%s224 + $0xb0] sm:$0xff] %v269
                %v271 = vld [vmem:[%s223 + $0x168] sm:$0xff]
                %272 = vst [vmem:[%s224 + $0xb8] sm:$0xff] %v271
                %v273 = vld [vmem:[%s223 + $0x180] sm:$0xff]
                %274 = vst [vmem:[%s224 + $0xc0] sm:$0xff] %v273
                %v275 = vld [vmem:[%s223 + $0x188] sm:$0xff]
                %276 = vst [vmem:[%s224 + $0xc8] sm:$0xff] %v275
                %v277 = vld [vmem:[%s223 + $0x1a0] sm:$0xff]
                %278 = vst [vmem:[%s224 + $0xd0] sm:$0xff] %v277
                %v279 = vld [vmem:[%s223 + $0x1a8] sm:$0xff]
                %280 = vst [vmem:[%s224 + $0xd8] sm:$0xff] %v279
                %v281 = vld [vmem:[%s223 + $0x1c0] sm:$0xff]
                %282 = vst [vmem:[%s224 + $0xe0] sm:$0xff] %v281
                %v283 = vld [vmem:[%s223 + $0x1c8] sm:$0xff]
                %284 = vst [vmem:[%s224 + $0xe8] sm:$0xff] %v283
                %v285 = vld [vmem:[%s223 + $0x1e0] sm:$0xff]
                %286 = vst [vmem:[%s224 + $0xf0] sm:$0xff] %v285
                %v287 = vld [vmem:[%s223 + $0x1e8] sm:$0xff]
                %288 = vst [vmem:[%s224 + $0xf8] sm:$0xff] %v287
                %v289 = vld [vmem:[%s223 + $0x200] sm:$0xff]
                %290 = vst [vmem:[%s224 + $0x100] sm:$0xff] %v289
                %v291 = vld [vmem:[%s223 + $0x208] sm:$0xff]
                %292 = vst [vmem:[%s224 + $0x108] sm:$0xff] %v291
                %v293 = vld [vmem:[%s223 + $0x220] sm:$0xff]
                %294 = vst [vmem:[%s224 + $0x110] sm:$0xff] %v293
                %v295 = vld [vmem:[%s223 + $0x228] sm:$0xff]
                %296 = vst [vmem:[%s224 + $0x118] sm:$0xff] %v295
                %v297 = vld [vmem:[%s223 + $0x240] sm:$0xff]
                %298 = vst [vmem:[%s224 + $0x120] sm:$0xff] %v297
                %v299 = vld [vmem:[%s223 + $0x248] sm:$0xff]
                %300 = vst [vmem:[%s224 + $0x128] sm:$0xff] %v299
                %v301 = vld [vmem:[%s223 + $0x260] sm:$0xff]
                %302 = vst [vmem:[%s224 + $0x130] sm:$0xff] %v301
                %v303 = vld [vmem:[%s223 + $0x268] sm:$0xff]
                %304 = vst [vmem:[%s224 + $0x138] sm:$0xff] %v303
                %v305 = vld [vmem:[%s223 + $0x280] sm:$0xff]
                %306 = vst [vmem:[%s224 + $0x140] sm:$0xff] %v305
                %v307 = vld [vmem:[%s223 + $0x288] sm:$0xff]
                %308 = vst [vmem:[%s224 + $0x148] sm:$0xff] %v307
                %v309 = vld [vmem:[%s223 + $0x2a0] sm:$0xff]
                %310 = vst [vmem:[%s224 + $0x150] sm:$0xff] %v309
                %v311 = vld [vmem:[%s223 + $0x2a8] sm:$0xff]
                %312 = vst [vmem:[%s224 + $0x158] sm:$0xff] %v311
                %v313 = vld [vmem:[%s223 + $0x2c0] sm:$0xff]
                %314 = vst [vmem:[%s224 + $0x160] sm:$0xff] %v313
                %v315 = vld [vmem:[%s223 + $0x2c8] sm:$0xff]
                %316 = vst [vmem:[%s224 + $0x168] sm:$0xff] %v315
                %v317 = vld [vmem:[%s223 + $0x2e0] sm:$0xff]
                %318 = vst [vmem:[%s224 + $0x170] sm:$0xff] %v317
                %v319 = vld [vmem:[%s223 + $0x2e8] sm:$0xff]
                %320 = vst [vmem:[%s224 + $0x178] sm:$0xff] %v319
                %v321 = vld [vmem:[%s223 + $0x300] sm:$0xff]
                %322 = vst [vmem:[%s224 + $0x180] sm:$0xff] %v321
                %v323 = vld [vmem:[%s223 + $0x308] sm:$0xff]
                %324 = vst [vmem:[%s224 + $0x188] sm:$0xff] %v323
                %v325 = vld [vmem:[%s223 + $0x320] sm:$0xff]
                %326 = vst [vmem:[%s224 + $0x190] sm:$0xff] %v325
                %v327 = vld [vmem:[%s223 + $0x328] sm:$0xff]
                %328 = vst [vmem:[%s224 + $0x198] sm:$0xff] %v327
                %v329 = vld [vmem:[%s223 + $0x340] sm:$0xff]
                %330 = vst [vmem:[%s224 + $0x1a0] sm:$0xff] %v329
                %v331 = vld [vmem:[%s223 + $0x348] sm:$0xff]
                %332 = vst [vmem:[%s224 + $0x1a8] sm:$0xff] %v331
                %v333 = vld [vmem:[%s223 + $0x360] sm:$0xff]
                %334 = vst [vmem:[%s224 + $0x1b0] sm:$0xff] %v333
                %v335 = vld [vmem:[%s223 + $0x368] sm:$0xff]
                %336 = vst [vmem:[%s224 + $0x1b8] sm:$0xff] %v335
                %v337 = vld [vmem:[%s223 + $0x380] sm:$0xff]
                %338 = vst [vmem:[%s224 + $0x1c0] sm:$0xff] %v337
                %v339 = vld [vmem:[%s223 + $0x388] sm:$0xff]
                %340 = vst [vmem:[%s224 + $0x1c8] sm:$0xff] %v339
                %v341 = vld [vmem:[%s223 + $0x3a0] sm:$0xff]
                %342 = vst [vmem:[%s224 + $0x1d0] sm:$0xff] %v341
                %v343 = vld [vmem:[%s223 + $0x3a8] sm:$0xff]
                %344 = vst [vmem:[%s224 + $0x1d8] sm:$0xff] %v343
                %v345 = vld [vmem:[%s223 + $0x3c0] sm:$0xff]
                %346 = vst [vmem:[%s224 + $0x1e0] sm:$0xff] %v345
                %v347 = vld [vmem:[%s223 + $0x3c8] sm:$0xff]
                %348 = vst [vmem:[%s224 + $0x1e8] sm:$0xff] %v347
                %v349 = vld [vmem:[%s223 + $0x3e0] sm:$0xff]
                %350 = vst [vmem:[%s224 + $0x1f0] sm:$0xff] %v349
                %v351 = vld [vmem:[%s223 + $0x3e8] sm:$0xff]
                %352 = vst [vmem:[%s224 + $0x1f8] sm:$0xff] %v351
                %v353 = vld [vmem:[%s223 + $0x400] sm:$0xff]
                %354 = vst [vmem:[%s224 + $0x200] sm:$0xff] %v353
                %v355 = vld [vmem:[%s223 + $0x408] sm:$0xff]
                %356 = vst [vmem:[%s224 + $0x208] sm:$0xff] %v355
                %v357 = vld [vmem:[%s223 + $0x420] sm:$0xff]
                %358 = vst [vmem:[%s224 + $0x210] sm:$0xff] %v357
                %v359 = vld [vmem:[%s223 + $0x428] sm:$0xff]
                %360 = vst [vmem:[%s224 + $0x218] sm:$0xff] %v359
                %v361 = vld [vmem:[%s223 + $0x440] sm:$0xff]
                %362 = vst [vmem:[%s224 + $0x220] sm:$0xff] %v361
                %v363 = vld [vmem:[%s223 + $0x448] sm:$0xff]
                %364 = vst [vmem:[%s224 + $0x228] sm:$0xff] %v363
                %v365 = vld [vmem:[%s223 + $0x460] sm:$0xff]
                %366 = vst [vmem:[%s224 + $0x230] sm:$0xff] %v365
                %v367 = vld [vmem:[%s223 + $0x468] sm:$0xff]
                %368 = vst [vmem:[%s224 + $0x238] sm:$0xff] %v367
                %v369 = vld [vmem:[%s223 + $0x480] sm:$0xff]
                %370 = vst [vmem:[%s224 + $0x240] sm:$0xff] %v369
                %v371 = vld [vmem:[%s223 + $0x488] sm:$0xff]
                %372 = vst [vmem:[%s224 + $0x248] sm:$0xff] %v371
                %v373 = vld [vmem:[%s223 + $0x4a0] sm:$0xff]
                %374 = vst [vmem:[%s224 + $0x250] sm:$0xff] %v373
                %v375 = vld [vmem:[%s223 + $0x4a8] sm:$0xff]
                %376 = vst [vmem:[%s224 + $0x258] sm:$0xff] %v375
                %v377 = vld [vmem:[%s223 + $0x4c0] sm:$0xff]
                %378 = vst [vmem:[%s224 + $0x260] sm:$0xff] %v377
                %v379 = vld [vmem:[%s223 + $0x4c8] sm:$0xff]
                %380 = vst [vmem:[%s224 + $0x268] sm:$0xff] %v379
                %v381 = vld [vmem:[%s223 + $0x4e0] sm:$0xff]
                %382 = vst [vmem:[%s224 + $0x270] sm:$0xff] %v381
                %v383 = vld [vmem:[%s223 + $0x4e8] sm:$0xff]
                %384 = vst [vmem:[%s224 + $0x278] sm:$0xff] %v383
                %v385 = vld [vmem:[%s223 + $0x500] sm:$0xff]
                %386 = vst [vmem:[%s224 + $0x280] sm:$0xff] %v385
                %v387 = vld [vmem:[%s223 + $0x508] sm:$0xff]
                %388 = vst [vmem:[%s224 + $0x288] sm:$0xff] %v387
                %v389 = vld [vmem:[%s223 + $0x520] sm:$0xff]
                %390 = vst [vmem:[%s224 + $0x290] sm:$0xff] %v389
                %v391 = vld [vmem:[%s223 + $0x528] sm:$0xff]
                %392 = vst [vmem:[%s224 + $0x298] sm:$0xff] %v391
              $region53: #{fused_bn_add_relu_conv.1} parent=47 // loop_footer
                %s222 = sadd.s32 1, %s218
              $region54: #{fused_bn_add_relu_conv.1} parent=47 // loop_footer_branch
                %217 = sbr.rel target = $region50
              $region55: #{fused_bn_add_relu_conv.1} parent=47 // loop_exit
                _
            $region48: #{fused_bn_add_relu_conv.1} parent=43 // pred_fallthru
              _
            // Predicated region
            $region56: #{fused_bn_add_relu_conv.1} parent=43 // pred_check
              _
            $region57: #{fused_bn_add_relu_conv.1} parent=43 // pred_check_branch
              %394 = sbr.rel target = $region59
            $region58: #{fused_bn_add_relu_conv.1} parent=43 // pred_region
              _
            $region59: #{fused_bn_add_relu_conv.1} parent=43 // pred_fallthru
              _
          $region44: #{fused_bn_add_relu_conv.1} parent=39 // pred_fallthru
            _
          %395 = vnop
        $region40: #{fused_bn_add_relu_conv.1} parent=35 // pred_fallthru
          _
      $region36: #{fused_bn_add_relu_conv.1} parent=5 // pred_fallthru
        _
      %p396 = scmp.le.s32.totalorder 1, %s12
      %p397 = scmp.lt.s32.totalorder %s12, 3
      %p398 = pnand %p396, %p397
      %p399 = pneg %p398
      // Predicated region
      $region60: #{fused_bn_add_relu_conv.1} parent=5 // pred_check
        _
      $region61: #{fused_bn_add_relu_conv.1} parent=5 // pred_check_branch
        %401 = sbr.rel (%p398) target = $region63
      $region62: #{fused_bn_add_relu_conv.1} parent=5 // pred_region
        %s402 = ssub.s32 %s12, 1
        %s403 = sand.u32 %s130, 1
        %s404 = sand.u32 %s130, 1
        %s405 = smul.addr %s404, 672
        %s406 = scalar_lea.vmem [#allocation2], %s405
        // Predicated region
        $region64: #{fused_bn_add_relu_conv.1} parent=62 // pred_check
          %p407 = pneg %p143
        $region65: #{fused_bn_add_relu_conv.1} parent=62 // pred_check_branch
          %409 = sbr.rel (%p407) target = $region67
        $region66: #{fused_bn_add_relu_conv.1} parent=62 // pred_region
          _
        $region67: #{fused_bn_add_relu_conv.1} parent=62 // pred_fallthru
          _
        %p410 = pneg %p33
        %p411 = pneg %p30
        %p412 = pneg %p54
        %p413 = pneg %p51
        %p414 = pneg %p75
        %p415 = pneg %p72
        %p416 = pneg %p96
        %p417 = pneg %p93
        %p418 = pneg %p117
        %p419 = pneg %p114
        %s420 = sand.u32 %s130, 1
        %s421 = sand.u32 %s130, 1
        %s422 = smul.addr %s421, 672
        %s423 = scalar_lea.vmem [#allocation2], %s422
        %p424 = pneg %p143
        %p425 = pneg %p140
        %p426 = pneg %p169
        %p427 = pneg %p166
        %s428 = sand.u32 %s156, 1
        %s429 = sand.u32 %s156, 1
        %s430 = smul.addr %s429, 224
        %s431 = scalar_lea.vmem [#allocation3], %s430
        %s432 = smul.u32 4, %s17
        %s433 = smul.u32 4, %s17
        %v435 = vld [vmem:[%s0] sm:$0xff]
        %v436 = vld [vmem:[%s0 + $0x8] sm:$0xff]
        %v437 = vld [vmem:[%s0 + $0x10] sm:$0xff]
        %v438 = vld [vmem:[%s0 + $0x18] sm:$0xff]
        %v439 = vld [vmem:[%s0 + $0x20] sm:$0xff]
        %v440 = vld [vmem:[%s0 + $0x28] sm:$0xff]
        %v441 = vld [vmem:[%s0 + $0x30] sm:$0xff]
        %v442 = vld [vmem:[%s0 + $0x38] sm:$0xff]
        %v443 = vld [vmem:[%s0 + $0x40] sm:$0xff]
        %v444 = vld [vmem:[%s0 + $0x48] sm:$0xff]
        %v445 = vld [vmem:[%s0 + $0x50] sm:$0xff]
        %v446 = vld [vmem:[%s0 + $0x58] sm:$0xff]
        %v447 = vld [vmem:[%s0 + $0x60] sm:$0xff]
        %v448 = vld [vmem:[%s0 + $0x68] sm:$0xff]
        %v449 = vld [vmem:[%s0 + $0x70] sm:$0xff]
        %v450 = vld [vmem:[%s0 + $0x78] sm:$0xff]
        %v451 = vld [vmem:[%s0 + $0x80] sm:$0xff]
        %v452 = vld [vmem:[%s0 + $0x88] sm:$0xff]
        %v453 = vld [vmem:[%s0 + $0x90] sm:$0xff]
        %v454 = vld [vmem:[%s0 + $0x98] sm:$0xff]
        %v455 = vld [vmem:[%s0 + $0xa0] sm:$0xff]
        %v456 = vld [vmem:[%s0 + $0xa8] sm:$0xff]
        %v457 = vld [vmem:[%s0 + $0xb0] sm:$0xff]
        %v458 = vld [vmem:[%s0 + $0xb8] sm:$0xff]
        %v459 = vld [vmem:[%s0 + $0xc0] sm:$0xff]
        %v460 = vld [vmem:[%s0 + $0xc8] sm:$0xff]
        %v461 = vld [vmem:[%s0 + $0xd0] sm:$0xff]
        %v462 = vld [vmem:[%s0 + $0xd8] sm:$0xff]
        %v463 = vld [vmem:[%s0 + $0xe0] sm:$0xff]
        %v464 = vld [vmem:[%s0 + $0xe8] sm:$0xff]
        %v465 = vld [vmem:[%s0 + $0xf0] sm:$0xff]
        %v466 = vld [vmem:[%s0 + $0xf8] sm:$0xff]
        %v467 = vld [vmem:[%s0 + $0x100] sm:$0xff]
        %v468 = vld [vmem:[%s0 + $0x108] sm:$0xff]
        %v469 = vld [vmem:[%s0 + $0x110] sm:$0xff]
        %v470 = vld [vmem:[%s0 + $0x118] sm:$0xff]
        %v471 = vld [vmem:[%s0 + $0x120] sm:$0xff]
        %v472 = vld [vmem:[%s0 + $0x128] sm:$0xff]
        %v473 = vld [vmem:[%s0 + $0x130] sm:$0xff]
        %v474 = vld [vmem:[%s0 + $0x138] sm:$0xff]
        %v475 = vld [vmem:[%s0 + $0x140] sm:$0xff]
        %v476 = vld [vmem:[%s0 + $0x148] sm:$0xff]
        %v477 = vld [vmem:[%s0 + $0x150] sm:$0xff]
        %v478 = vld [vmem:[%s0 + $0x158] sm:$0xff]
        %v479 = vld [vmem:[%s0 + $0x160] sm:$0xff]
        %v480 = vld [vmem:[%s0 + $0x168] sm:$0xff]
        %v481 = vld [vmem:[%s0 + $0x170] sm:$0xff]
        %v482 = vld [vmem:[%s0 + $0x178] sm:$0xff]
        %v483 = vld [vmem:[%s0 + $0x180] sm:$0xff]
        %v484 = vld [vmem:[%s0 + $0x188] sm:$0xff]
        %v485 = vld [vmem:[%s0 + $0x190] sm:$0xff]
        %v486 = vld [vmem:[%s0 + $0x198] sm:$0xff]
        %v487 = vld [vmem:[%s0 + $0x1a0] sm:$0xff]
        %v488 = vld [vmem:[%s0 + $0x1a8] sm:$0xff]
        %v489 = vld [vmem:[%s0 + $0x1b0] sm:$0xff]
        %v490 = vld [vmem:[%s0 + $0x1b8] sm:$0xff]
        %v491 = vld [vmem:[%s0 + $0x1c0] sm:$0xff]
        %v492 = vld [vmem:[%s0 + $0x1c8] sm:$0xff]
        %v493 = vld [vmem:[%s0 + $0x1d0] sm:$0xff]
        %v494 = vld [vmem:[%s0 + $0x1d8] sm:$0xff]
        %v495 = vld [vmem:[%s0 + $0x1e0] sm:$0xff]
        %v496 = vld [vmem:[%s0 + $0x1e8] sm:$0xff]
        %v497 = vld [vmem:[%s0 + $0x1f0] sm:$0xff]
        %v498 = vld [vmem:[%s0 + $0x1f8] sm:$0xff]
        %v499 = vld [vmem:[%s0 + $0x200] sm:$0xff]
        %v500 = vld [vmem:[%s0 + $0x208] sm:$0xff]
        %v501 = vld [vmem:[%s0 + $0x210] sm:$0xff]
        %v502 = vld [vmem:[%s0 + $0x218] sm:$0xff]
        %v503 = vld [vmem:[%s0 + $0x220] sm:$0xff]
        %v504 = vld [vmem:[%s0 + $0x228] sm:$0xff]
        %v505 = vld [vmem:[%s0 + $0x230] sm:$0xff]
        %v506 = vld [vmem:[%s0 + $0x238] sm:$0xff]
        %v507 = vld [vmem:[%s0 + $0x240] sm:$0xff]
        %v508 = vld [vmem:[%s0 + $0x248] sm:$0xff]
        %v509 = vld [vmem:[%s0 + $0x250] sm:$0xff]
        %v510 = vld [vmem:[%s0 + $0x258] sm:$0xff]
        %v511 = vld [vmem:[%s0 + $0x260] sm:$0xff]
        %v512 = vld [vmem:[%s0 + $0x268] sm:$0xff]
        %v513 = vld [vmem:[%s0 + $0x270] sm:$0xff]
        %v514 = vld [vmem:[%s0 + $0x278] sm:$0xff]
        %v515 = vld [vmem:[%s0 + $0x280] sm:$0xff]
        %v516 = vld [vmem:[%s0 + $0x288] sm:$0xff]
        %v517 = vld [vmem:[%s0 + $0x290] sm:$0xff]
        %v518 = vld [vmem:[%s0 + $0x298] sm:$0xff]
        %vm519 = vcmask 556032
        %v520 = vsel %vm519, %v436, 0.0
        %v521 = vadd.f32 %v435, %v520
        %522 = vadd.xlane.f32.xlu0 %v521
        %v523 = vpop.xlane.xlu0 %522
        %v524 = vsel %vm519, %v438, 0.0
        %v525 = vadd.f32 %v437, %v524
        %526 = vadd.xlane.f32.xlu0 %v525
        %v527 = vpop.xlane.xlu0 %526
        %v528 = vsel %vm519, %v440, 0.0
        %v529 = vadd.f32 %v439, %v528
        %530 = vadd.xlane.f32.xlu0 %v529
        %v531 = vpop.xlane.xlu0 %530
        %v532 = vsel %vm519, %v442, 0.0
        %v533 = vadd.f32 %v441, %v532
        %534 = vadd.xlane.f32.xlu0 %v533
        %v535 = vpop.xlane.xlu0 %534
        %v536 = vsel %vm519, %v444, 0.0
        %v537 = vadd.f32 %v443, %v536
        %538 = vadd.xlane.f32.xlu0 %v537
        %v539 = vpop.xlane.xlu0 %538
        %v540 = vsel %vm519, %v446, 0.0
        %v541 = vadd.f32 %v445, %v540
        %542 = vadd.xlane.f32.xlu0 %v541
        %v543 = vpop.xlane.xlu0 %542
        %v544 = vsel %vm519, %v448, 0.0
        %v545 = vadd.f32 %v447, %v544
        %546 = vadd.xlane.f32.xlu0 %v545
        %v547 = vpop.xlane.xlu0 %546
        %v548 = vsel %vm519, %v450, 0.0
        %v549 = vadd.f32 %v449, %v548
        %550 = vadd.xlane.f32.xlu0 %v549
        %v551 = vpop.xlane.xlu0 %550
        %v552 = vsel %vm519, %v452, 0.0
        %v553 = vadd.f32 %v451, %v552
        %554 = vadd.xlane.f32.xlu0 %v553
        %v555 = vpop.xlane.xlu0 %554
        %v556 = vsel %vm519, %v454, 0.0
        %v557 = vadd.f32 %v453, %v556
        %558 = vadd.xlane.f32.xlu0 %v557
        %v559 = vpop.xlane.xlu0 %558
        %v560 = vsel %vm519, %v456, 0.0
        %v561 = vadd.f32 %v455, %v560
        %562 = vadd.xlane.f32.xlu0 %v561
        %v563 = vpop.xlane.xlu0 %562
        %v564 = vsel %vm519, %v458, 0.0
        %v565 = vadd.f32 %v457, %v564
        %566 = vadd.xlane.f32.xlu0 %v565
        %v567 = vpop.xlane.xlu0 %566
        %v568 = vsel %vm519, %v460, 0.0
        %v569 = vadd.f32 %v459, %v568
        %570 = vadd.xlane.f32.xlu0 %v569
        %v571 = vpop.xlane.xlu0 %570
        %v572 = vsel %vm519, %v462, 0.0
        %v573 = vadd.f32 %v461, %v572
        %574 = vadd.xlane.f32.xlu0 %v573
        %v575 = vpop.xlane.xlu0 %574
        %v576 = vsel %vm519, %v464, 0.0
        %v577 = vadd.f32 %v463, %v576
        %578 = vadd.xlane.f32.xlu0 %v577
        %v579 = vpop.xlane.xlu0 %578
        %v580 = vsel %vm519, %v466, 0.0
        %v581 = vadd.f32 %v465, %v580
        %582 = vadd.xlane.f32.xlu0 %v581
        %v583 = vpop.xlane.xlu0 %582
        %v584 = vsel %vm519, %v468, 0.0
        %v585 = vadd.f32 %v467, %v584
        %586 = vadd.xlane.f32.xlu0 %v585
        %v587 = vpop.xlane.xlu0 %586
        %v588 = vsel %vm519, %v470, 0.0
        %v589 = vadd.f32 %v469, %v588
        %590 = vadd.xlane.f32.xlu0 %v589
        %v591 = vpop.xlane.xlu0 %590
        %v592 = vsel %vm519, %v472, 0.0
        %v593 = vadd.f32 %v471, %v592
        %594 = vadd.xlane.f32.xlu0 %v593
        %v595 = vpop.xlane.xlu0 %594
        %v596 = vsel %vm519, %v474, 0.0
        %v597 = vadd.f32 %v473, %v596
        %598 = vadd.xlane.f32.xlu0 %v597
        %v599 = vpop.xlane.xlu0 %598
        %v600 = vsel %vm519, %v476, 0.0
        %v601 = vadd.f32 %v475, %v600
        %602 = vadd.xlane.f32.xlu0 %v601
        %v603 = vpop.xlane.xlu0 %602
        %v604 = vsel %vm519, %v478, 0.0
        %v605 = vadd.f32 %v477, %v604
        %606 = vadd.xlane.f32.xlu0 %v605
        %v607 = vpop.xlane.xlu0 %606
        %v608 = vsel %vm519, %v480, 0.0
        %v609 = vadd.f32 %v479, %v608
        %610 = vadd.xlane.f32.xlu0 %v609
        %v611 = vpop.xlane.xlu0 %610
        %v612 = vsel %vm519, %v482, 0.0
        %v613 = vadd.f32 %v481, %v612
        %614 = vadd.xlane.f32.xlu0 %v613
        %v615 = vpop.xlane.xlu0 %614
        %v616 = vsel %vm519, %v484, 0.0
        %v617 = vadd.f32 %v483, %v616
        %618 = vadd.xlane.f32.xlu0 %v617
        %v619 = vpop.xlane.xlu0 %618
        %v620 = vsel %vm519, %v486, 0.0
        %v621 = vadd.f32 %v485, %v620
        %622 = vadd.xlane.f32.xlu0 %v621
        %v623 = vpop.xlane.xlu0 %622
        %v624 = vsel %vm519, %v488, 0.0
        %v625 = vadd.f32 %v487, %v624
        %626 = vadd.xlane.f32.xlu0 %v625
        %v627 = vpop.xlane.xlu0 %626
        %v628 = vsel %vm519, %v490, 0.0
        %v629 = vadd.f32 %v489, %v628
        %630 = vadd.xlane.f32.xlu0 %v629
        %v631 = vpop.xlane.xlu0 %630
        %v632 = vsel %vm519, %v492, 0.0
        %v633 = vadd.f32 %v491, %v632
        %634 = vadd.xlane.f32.xlu0 %v633
        %v635 = vpop.xlane.xlu0 %634
        %v636 = vsel %vm519, %v494, 0.0
        %v637 = vadd.f32 %v493, %v636
        %638 = vadd.xlane.f32.xlu0 %v637
        %v639 = vpop.xlane.xlu0 %638
        %v640 = vsel %vm519, %v496, 0.0
        %v641 = vadd.f32 %v495, %v640
        %642 = vadd.xlane.f32.xlu0 %v641
        %v643 = vpop.xlane.xlu0 %642
        %v644 = vsel %vm519, %v498, 0.0
        %v645 = vadd.f32 %v497, %v644
        %646 = vadd.xlane.f32.xlu0 %v645
        %v647 = vpop.xlane.xlu0 %646
        %v648 = vsel %vm519, %v500, 0.0
        %v649 = vadd.f32 %v499, %v648
        %650 = vadd.xlane.f32.xlu0 %v649
        %v651 = vpop.xlane.xlu0 %650
        %v652 = vsel %vm519, %v502, 0.0
        %v653 = vadd.f32 %v501, %v652
        %654 = vadd.xlane.f32.xlu0 %v653
        %v655 = vpop.xlane.xlu0 %654
        %v656 = vsel %vm519, %v504, 0.0
        %v657 = vadd.f32 %v503, %v656
        %658 = vadd.xlane.f32.xlu0 %v657
        %v659 = vpop.xlane.xlu0 %658
        %v660 = vsel %vm519, %v506, 0.0
        %v661 = vadd.f32 %v505, %v660
        %662 = vadd.xlane.f32.xlu0 %v661
        %v663 = vpop.xlane.xlu0 %662
        %v664 = vsel %vm519, %v508, 0.0
        %v665 = vadd.f32 %v507, %v664
        %666 = vadd.xlane.f32.xlu0 %v665
        %v667 = vpop.xlane.xlu0 %666
        %v668 = vsel %vm519, %v510, 0.0
        %v669 = vadd.f32 %v509, %v668
        %670 = vadd.xlane.f32.xlu0 %v669
        %v671 = vpop.xlane.xlu0 %670
        %v672 = vsel %vm519, %v512, 0.0
        %v673 = vadd.f32 %v511, %v672
        %674 = vadd.xlane.f32.xlu0 %v673
        %v675 = vpop.xlane.xlu0 %674
        %v676 = vsel %vm519, %v514, 0.0
        %v677 = vadd.f32 %v513, %v676
        %678 = vadd.xlane.f32.xlu0 %v677
        %v679 = vpop.xlane.xlu0 %678
        %v680 = vsel %vm519, %v516, 0.0
        %v681 = vadd.f32 %v515, %v680
        %682 = vadd.xlane.f32.xlu0 %v681
        %v683 = vpop.xlane.xlu0 %682
        %v684 = vsel %vm519, %v518, 0.0
        %v685 = vadd.f32 %v517, %v684
        %686 = vadd.xlane.f32.xlu0 %v685
        %v687 = vpop.xlane.xlu0 %686
        %v688 = vmul.f32 %v523, 0.0051020407
        %v689 = vmul.f32 %v527, 0.0051020407
        %v690 = vmul.f32 %v531, 0.0051020407
        %v691 = vmul.f32 %v535, 0.0051020407
        %v692 = vmul.f32 %v539, 0.0051020407
        %v693 = vmul.f32 %v543, 0.0051020407
        %v694 = vmul.f32 %v547, 0.0051020407
        %v695 = vmul.f32 %v551, 0.0051020407
        %v696 = vmul.f32 %v555, 0.0051020407
        %v697 = vmul.f32 %v559, 0.0051020407
        %v698 = vmul.f32 %v563, 0.0051020407
        %v699 = vmul.f32 %v567, 0.0051020407
        %v700 = vmul.f32 %v571, 0.0051020407
        %v701 = vmul.f32 %v575, 0.0051020407
        %v702 = vmul.f32 %v579, 0.0051020407
        %v703 = vmul.f32 %v583, 0.0051020407
        %v704 = vmul.f32 %v587, 0.0051020407
        %v705 = vmul.f32 %v591, 0.0051020407
        %v706 = vmul.f32 %v595, 0.0051020407
        %v707 = vmul.f32 %v599, 0.0051020407
        %v708 = vmul.f32 %v603, 0.0051020407
        %v709 = vmul.f32 %v607, 0.0051020407
        %v710 = vmul.f32 %v611, 0.0051020407
        %v711 = vmul.f32 %v615, 0.0051020407
        %v712 = vmul.f32 %v619, 0.0051020407
        %v713 = vmul.f32 %v623, 0.0051020407
        %v714 = vmul.f32 %v627, 0.0051020407
        %v715 = vmul.f32 %v631, 0.0051020407
        %v716 = vmul.f32 %v635, 0.0051020407
        %v717 = vmul.f32 %v639, 0.0051020407
        %v718 = vmul.f32 %v643, 0.0051020407
        %v719 = vmul.f32 %v647, 0.0051020407
        %v720 = vmul.f32 %v651, 0.0051020407
        %v721 = vmul.f32 %v655, 0.0051020407
        %v722 = vmul.f32 %v659, 0.0051020407
        %v723 = vmul.f32 %v663, 0.0051020407
        %v724 = vmul.f32 %v667, 0.0051020407
        %v725 = vmul.f32 %v671, 0.0051020407
        %v726 = vmul.f32 %v675, 0.0051020407
        %v727 = vmul.f32 %v679, 0.0051020407
        %v728 = vmul.f32 %v683, 0.0051020407
        %v729 = vmul.f32 %v687, 0.0051020407
        %v730 = vmul.f32 %v435, %v435
        %v731 = vmul.f32 %v436, %v436
        %v732 = vmul.f32 %v437, %v437
        %v733 = vmul.f32 %v438, %v438
        %v734 = vmul.f32 %v439, %v439
        %v735 = vmul.f32 %v440, %v440
        %v736 = vmul.f32 %v441, %v441
        %v737 = vmul.f32 %v442, %v442
        %v738 = vmul.f32 %v443, %v443
        %v739 = vmul.f32 %v444, %v444
        %v740 = vmul.f32 %v445, %v445
        %v741 = vmul.f32 %v446, %v446
        %v742 = vmul.f32 %v447, %v447
        %v743 = vmul.f32 %v448, %v448
        %v744 = vmul.f32 %v449, %v449
        %v745 = vmul.f32 %v450, %v450
        %v746 = vmul.f32 %v451, %v451
        %v747 = vmul.f32 %v452, %v452
        %v748 = vmul.f32 %v453, %v453
        %v749 = vmul.f32 %v454, %v454
        %v750 = vmul.f32 %v455, %v455
        %v751 = vmul.f32 %v456, %v456
        %v752 = vmul.f32 %v457, %v457
        %v753 = vmul.f32 %v458, %v458
        %v754 = vmul.f32 %v459, %v459
        %v755 = vmul.f32 %v460, %v460
        %v756 = vmul.f32 %v461, %v461
        %v757 = vmul.f32 %v462, %v462
        %v758 = vmul.f32 %v463, %v463
        %v759 = vmul.f32 %v464, %v464
        %v760 = vmul.f32 %v465, %v465
        %v761 = vmul.f32 %v466, %v466
        %v762 = vmul.f32 %v467, %v467
        %v763 = vmul.f32 %v468, %v468
        %v764 = vmul.f32 %v469, %v469
        %v765 = vmul.f32 %v470, %v470
        %v766 = vmul.f32 %v471, %v471
        %v767 = vmul.f32 %v472, %v472
        %v768 = vmul.f32 %v473, %v473
        %v769 = vmul.f32 %v474, %v474
        %v770 = vmul.f32 %v475, %v475
        %v771 = vmul.f32 %v476, %v476
        %v772 = vmul.f32 %v477, %v477
        %v773 = vmul.f32 %v478, %v478
        %v774 = vmul.f32 %v479, %v479
        %v775 = vmul.f32 %v480, %v480
        %v776 = vmul.f32 %v481, %v481
        %v777 = vmul.f32 %v482, %v482
        %v778 = vmul.f32 %v483, %v483
        %v779 = vmul.f32 %v484, %v484
        %v780 = vmul.f32 %v485, %v485
        %v781 = vmul.f32 %v486, %v486
        %v782 = vmul.f32 %v487, %v487
        %v783 = vmul.f32 %v488, %v488
        %v784 = vmul.f32 %v489, %v489
        %v785 = vmul.f32 %v490, %v490
        %v786 = vmul.f32 %v491, %v491
        %v787 = vmul.f32 %v492, %v492
        %v788 = vmul.f32 %v493, %v493
        %v789 = vmul.f32 %v494, %v494
        %v790 = vmul.f32 %v495, %v495
        %v791 = vmul.f32 %v496, %v496
        %v792 = vmul.f32 %v497, %v497
        %v793 = vmul.f32 %v498, %v498
        %v794 = vmul.f32 %v499, %v499
        %v795 = vmul.f32 %v500, %v500
        %v796 = vmul.f32 %v501, %v501
        %v797 = vmul.f32 %v502, %v502
        %v798 = vmul.f32 %v503, %v503
        %v799 = vmul.f32 %v504, %v504
        %v800 = vmul.f32 %v505, %v505
        %v801 = vmul.f32 %v506, %v506
        %v802 = vmul.f32 %v507, %v507
        %v803 = vmul.f32 %v508, %v508
        %v804 = vmul.f32 %v509, %v509
        %v805 = vmul.f32 %v510, %v510
        %v806 = vmul.f32 %v511, %v511
        %v807 = vmul.f32 %v512, %v512
        %v808 = vmul.f32 %v513, %v513
        %v809 = vmul.f32 %v514, %v514
        %v810 = vmul.f32 %v515, %v515
        %v811 = vmul.f32 %v516, %v516
        %v812 = vmul.f32 %v517, %v517
        %v813 = vmul.f32 %v518, %v518
        %v814 = vsel %vm519, %v731, 0.0
        %v815 = vadd.f32 %v730, %v814
        %816 = vadd.xlane.f32.xlu0 %v815
        %v817 = vpop.xlane.xlu0 %816
        %v818 = vsel %vm519, %v733, 0.0
        %v819 = vadd.f32 %v732, %v818
        %820 = vadd.xlane.f32.xlu0 %v819
        %v821 = vpop.xlane.xlu0 %820
        %v822 = vsel %vm519, %v735, 0.0
        %v823 = vadd.f32 %v734, %v822
        %824 = vadd.xlane.f32.xlu0 %v823
        %v825 = vpop.xlane.xlu0 %824
        %v826 = vsel %vm519, %v737, 0.0
        %v827 = vadd.f32 %v736, %v826
        %828 = vadd.xlane.f32.xlu0 %v827
        %v829 = vpop.xlane.xlu0 %828
        %v830 = vsel %vm519, %v739, 0.0
        %v831 = vadd.f32 %v738, %v830
        %832 = vadd.xlane.f32.xlu0 %v831
        %v833 = vpop.xlane.xlu0 %832
        %v834 = vsel %vm519, %v741, 0.0
        %v835 = vadd.f32 %v740, %v834
        %836 = vadd.xlane.f32.xlu0 %v835
        %v837 = vpop.xlane.xlu0 %836
        %v838 = vsel %vm519, %v743, 0.0
        %v839 = vadd.f32 %v742, %v838
        %840 = vadd.xlane.f32.xlu0 %v839
        %v841 = vpop.xlane.xlu0 %840
        %v842 = vsel %vm519, %v745, 0.0
        %v843 = vadd.f32 %v744, %v842
        %844 = vadd.xlane.f32.xlu0 %v843
        %v845 = vpop.xlane.xlu0 %844
        %v846 = vsel %vm519, %v747, 0.0
        %v847 = vadd.f32 %v746, %v846
        %848 = vadd.xlane.f32.xlu0 %v847
        %v849 = vpop.xlane.xlu0 %848
        %v850 = vsel %vm519, %v749, 0.0
        %v851 = vadd.f32 %v748, %v850
        %852 = vadd.xlane.f32.xlu0 %v851
        %v853 = vpop.xlane.xlu0 %852
        %v854 = vsel %vm519, %v751, 0.0
        %v855 = vadd.f32 %v750, %v854
        %856 = vadd.xlane.f32.xlu0 %v855
        %v857 = vpop.xlane.xlu0 %856
        %v858 = vsel %vm519, %v753, 0.0
        %v859 = vadd.f32 %v752, %v858
        %860 = vadd.xlane.f32.xlu0 %v859
        %v861 = vpop.xlane.xlu0 %860
        %v862 = vsel %vm519, %v755, 0.0
        %v863 = vadd.f32 %v754, %v862
        %864 = vadd.xlane.f32.xlu0 %v863
        %v865 = vpop.xlane.xlu0 %864
        %v866 = vsel %vm519, %v757, 0.0
        %v867 = vadd.f32 %v756, %v866
        %868 = vadd.xlane.f32.xlu0 %v867
        %v869 = vpop.xlane.xlu0 %868
        %v870 = vsel %vm519, %v759, 0.0
        %v871 = vadd.f32 %v758, %v870
        %872 = vadd.xlane.f32.xlu0 %v871
        %v873 = vpop.xlane.xlu0 %872
        %v874 = vsel %vm519, %v761, 0.0
        %v875 = vadd.f32 %v760, %v874
        %876 = vadd.xlane.f32.xlu0 %v875
        %v877 = vpop.xlane.xlu0 %876
        %v878 = vsel %vm519, %v763, 0.0
        %v879 = vadd.f32 %v762, %v878
        %880 = vadd.xlane.f32.xlu0 %v879
        %v881 = vpop.xlane.xlu0 %880
        %v882 = vsel %vm519, %v765, 0.0
        %v883 = vadd.f32 %v764, %v882
        %884 = vadd.xlane.f32.xlu0 %v883
        %v885 = vpop.xlane.xlu0 %884
        %v886 = vsel %vm519, %v767, 0.0
        %v887 = vadd.f32 %v766, %v886
        %888 = vadd.xlane.f32.xlu0 %v887
        %v889 = vpop.xlane.xlu0 %888
        %v890 = vsel %vm519, %v769, 0.0
        %v891 = vadd.f32 %v768, %v890
        %892 = vadd.xlane.f32.xlu0 %v891
        %v893 = vpop.xlane.xlu0 %892
        %v894 = vsel %vm519, %v771, 0.0
        %v895 = vadd.f32 %v770, %v894
        %896 = vadd.xlane.f32.xlu0 %v895
        %v897 = vpop.xlane.xlu0 %896
        %v898 = vsel %vm519, %v773, 0.0
        %v899 = vadd.f32 %v772, %v898
        %900 = vadd.xlane.f32.xlu0 %v899
        %v901 = vpop.xlane.xlu0 %900
        %v902 = vsel %vm519, %v775, 0.0
        %v903 = vadd.f32 %v774, %v902
        %904 = vadd.xlane.f32.xlu0 %v903
        %v905 = vpop.xlane.xlu0 %904
        %v906 = vsel %vm519, %v777, 0.0
        %v907 = vadd.f32 %v776, %v906
        %908 = vadd.xlane.f32.xlu0 %v907
        %v909 = vpop.xlane.xlu0 %908
        %v910 = vsel %vm519, %v779, 0.0
        %v911 = vadd.f32 %v778, %v910
        %912 = vadd.xlane.f32.xlu0 %v911
        %v913 = vpop.xlane.xlu0 %912
        %v914 = vsel %vm519, %v781, 0.0
        %v915 = vadd.f32 %v780, %v914
        %916 = vadd.xlane.f32.xlu0 %v915
        %v917 = vpop.xlane.xlu0 %916
        %v918 = vsel %vm519, %v783, 0.0
        %v919 = vadd.f32 %v782, %v918
        %920 = vadd.xlane.f32.xlu0 %v919
        %v921 = vpop.xlane.xlu0 %920
        %v922 = vsel %vm519, %v785, 0.0
        %v923 = vadd.f32 %v784, %v922
        %924 = vadd.xlane.f32.xlu0 %v923
        %v925 = vpop.xlane.xlu0 %924
        %v926 = vsel %vm519, %v787, 0.0
        %v927 = vadd.f32 %v786, %v926
        %928 = vadd.xlane.f32.xlu0 %v927
        %v929 = vpop.xlane.xlu0 %928
        %v930 = vsel %vm519, %v789, 0.0
        %v931 = vadd.f32 %v788, %v930
        %932 = vadd.xlane.f32.xlu0 %v931
        %v933 = vpop.xlane.xlu0 %932
        %v934 = vsel %vm519, %v791, 0.0
        %v935 = vadd.f32 %v790, %v934
        %936 = vadd.xlane.f32.xlu0 %v935
        %v937 = vpop.xlane.xlu0 %936
        %v938 = vsel %vm519, %v793, 0.0
        %v939 = vadd.f32 %v792, %v938
        %940 = vadd.xlane.f32.xlu0 %v939
        %v941 = vpop.xlane.xlu0 %940
        %v942 = vsel %vm519, %v795, 0.0
        %v943 = vadd.f32 %v794, %v942
        %944 = vadd.xlane.f32.xlu0 %v943
        %v945 = vpop.xlane.xlu0 %944
        %v946 = vsel %vm519, %v797, 0.0
        %v947 = vadd.f32 %v796, %v946
        %948 = vadd.xlane.f32.xlu0 %v947
        %v949 = vpop.xlane.xlu0 %948
        %v950 = vsel %vm519, %v799, 0.0
        %v951 = vadd.f32 %v798, %v950
        %952 = vadd.xlane.f32.xlu0 %v951
        %v953 = vpop.xlane.xlu0 %952
        %v954 = vsel %vm519, %v801, 0.0
        %v955 = vadd.f32 %v800, %v954
        %956 = vadd.xlane.f32.xlu0 %v955
        %v957 = vpop.xlane.xlu0 %956
        %v958 = vsel %vm519, %v803, 0.0
        %v959 = vadd.f32 %v802, %v958
        %960 = vadd.xlane.f32.xlu0 %v959
        %v961 = vpop.xlane.xlu0 %960
        %v962 = vsel %vm519, %v805, 0.0
        %v963 = vadd.f32 %v804, %v962
        %964 = vadd.xlane.f32.xlu0 %v963
        %v965 = vpop.xlane.xlu0 %964
        %v966 = vsel %vm519, %v807, 0.0
        %v967 = vadd.f32 %v806, %v966
        %968 = vadd.xlane.f32.xlu0 %v967
        %v969 = vpop.xlane.xlu0 %968
        %v970 = vsel %vm519, %v809, 0.0
        %v971 = vadd.f32 %v808, %v970
        %972 = vadd.xlane.f32.xlu0 %v971
        %v973 = vpop.xlane.xlu0 %972
        %v974 = vsel %vm519, %v811, 0.0
        %v975 = vadd.f32 %v810, %v974
        %976 = vadd.xlane.f32.xlu0 %v975
        %v977 = vpop.xlane.xlu0 %976
        %v978 = vsel %vm519, %v813, 0.0
        %v979 = vadd.f32 %v812, %v978
        %980 = vadd.xlane.f32.xlu0 %v979
        %v981 = vpop.xlane.xlu0 %980
        %v982 = vmul.f32 %v817, 0.0051020407
        %v983 = vmul.f32 %v821, 0.0051020407
        %v984 = vmul.f32 %v825, 0.0051020407
        %v985 = vmul.f32 %v829, 0.0051020407
        %v986 = vmul.f32 %v833, 0.0051020407
        %v987 = vmul.f32 %v837, 0.0051020407
        %v988 = vmul.f32 %v841, 0.0051020407
        %v989 = vmul.f32 %v845, 0.0051020407
        %v990 = vmul.f32 %v849, 0.0051020407
        %v991 = vmul.f32 %v853, 0.0051020407
        %v992 = vmul.f32 %v857, 0.0051020407
        %v993 = vmul.f32 %v861, 0.0051020407
        %v994 = vmul.f32 %v865, 0.0051020407
        %v995 = vmul.f32 %v869, 0.0051020407
        %v996 = vmul.f32 %v873, 0.0051020407
        %v997 = vmul.f32 %v877, 0.0051020407
        %v998 = vmul.f32 %v881, 0.0051020407
        %v999 = vmul.f32 %v885, 0.0051020407
        %v1000 = vmul.f32 %v889, 0.0051020407
        %v1001 = vmul.f32 %v893, 0.0051020407
        %v1002 = vmul.f32 %v897, 0.0051020407
        %v1003 = vmul.f32 %v901, 0.0051020407
        %v1004 = vmul.f32 %v905, 0.0051020407
        %v1005 = vmul.f32 %v909, 0.0051020407
        %v1006 = vmul.f32 %v913, 0.0051020407
        %v1007 = vmul.f32 %v917, 0.0051020407
        %v1008 = vmul.f32 %v921, 0.0051020407
        %v1009 = vmul.f32 %v925, 0.0051020407
        %v1010 = vmul.f32 %v929, 0.0051020407
        %v1011 = vmul.f32 %v933, 0.0051020407
        %v1012 = vmul.f32 %v937, 0.0051020407
        %v1013 = vmul.f32 %v941, 0.0051020407
        %v1014 = vmul.f32 %v945, 0.0051020407
        %v1015 = vmul.f32 %v949, 0.0051020407
        %v1016 = vmul.f32 %v953, 0.0051020407
        %v1017 = vmul.f32 %v957, 0.0051020407
        %v1018 = vmul.f32 %v961, 0.0051020407
        %v1019 = vmul.f32 %v965, 0.0051020407
        %v1020 = vmul.f32 %v969, 0.0051020407
        %v1021 = vmul.f32 %v973, 0.0051020407
        %v1022 = vmul.f32 %v977, 0.0051020407
        %v1023 = vmul.f32 %v981, 0.0051020407
        %v1024 = vmul.f32 %v688, %v688
        %v1025 = vmul.f32 %v689, %v689
        %v1026 = vmul.f32 %v690, %v690
        %v1027 = vmul.f32 %v691, %v691
        %v1028 = vmul.f32 %v692, %v692
        %v1029 = vmul.f32 %v693, %v693
        %v1030 = vmul.f32 %v694, %v694
        %v1031 = vmul.f32 %v695, %v695
        %v1032 = vmul.f32 %v696, %v696
        %v1033 = vmul.f32 %v697, %v697
        %v1034 = vmul.f32 %v698, %v698
        %v1035 = vmul.f32 %v699, %v699
        %v1036 = vmul.f32 %v700, %v700
        %v1037 = vmul.f32 %v701, %v701
        %v1038 = vmul.f32 %v702, %v702
        %v1039 = vmul.f32 %v703, %v703
        %v1040 = vmul.f32 %v704, %v704
        %v1041 = vmul.f32 %v705, %v705
        %v1042 = vmul.f32 %v706, %v706
        %v1043 = vmul.f32 %v707, %v707
        %v1044 = vmul.f32 %v708, %v708
        %v1045 = vmul.f32 %v709, %v709
        %v1046 = vmul.f32 %v710, %v710
        %v1047 = vmul.f32 %v711, %v711
        %v1048 = vmul.f32 %v712, %v712
        %v1049 = vmul.f32 %v713, %v713
        %v1050 = vmul.f32 %v714, %v714
        %v1051 = vmul.f32 %v715, %v715
        %v1052 = vmul.f32 %v716, %v716
        %v1053 = vmul.f32 %v717, %v717
        %v1054 = vmul.f32 %v718, %v718
        %v1055 = vmul.f32 %v719, %v719
        %v1056 = vmul.f32 %v720, %v720
        %v1057 = vmul.f32 %v721, %v721
        %v1058 = vmul.f32 %v722, %v722
        %v1059 = vmul.f32 %v723, %v723
        %v1060 = vmul.f32 %v724, %v724
        %v1061 = vmul.f32 %v725, %v725
        %v1062 = vmul.f32 %v726, %v726
        %v1063 = vmul.f32 %v727, %v727
        %v1064 = vmul.f32 %v728, %v728
        %v1065 = vmul.f32 %v729, %v729
        %v1066 = vsub.f32 %v982, %v1024
        %v1067 = vsub.f32 %v983, %v1025
        %v1068 = vsub.f32 %v984, %v1026
        %v1069 = vsub.f32 %v985, %v1027
        %v1070 = vsub.f32 %v986, %v1028
        %v1071 = vsub.f32 %v987, %v1029
        %v1072 = vsub.f32 %v988, %v1030
        %v1073 = vsub.f32 %v989, %v1031
        %v1074 = vsub.f32 %v990, %v1032
        %v1075 = vsub.f32 %v991, %v1033
        %v1076 = vsub.f32 %v992, %v1034
        %v1077 = vsub.f32 %v993, %v1035
        %v1078 = vsub.f32 %v994, %v1036
        %v1079 = vsub.f32 %v995, %v1037
        %v1080 = vsub.f32 %v996, %v1038
        %v1081 = vsub.f32 %v997, %v1039
        %v1082 = vsub.f32 %v998, %v1040
        %v1083 = vsub.f32 %v999, %v1041
        %v1084 = vsub.f32 %v1000, %v1042
        %v1085 = vsub.f32 %v1001, %v1043
        %v1086 = vsub.f32 %v1002, %v1044
        %v1087 = vsub.f32 %v1003, %v1045
        %v1088 = vsub.f32 %v1004, %v1046
        %v1089 = vsub.f32 %v1005, %v1047
        %v1090 = vsub.f32 %v1006, %v1048
        %v1091 = vsub.f32 %v1007, %v1049
        %v1092 = vsub.f32 %v1008, %v1050
        %v1093 = vsub.f32 %v1009, %v1051
        %v1094 = vsub.f32 %v1010, %v1052
        %v1095 = vsub.f32 %v1011, %v1053
        %v1096 = vsub.f32 %v1012, %v1054
        %v1097 = vsub.f32 %v1013, %v1055
        %v1098 = vsub.f32 %v1014, %v1056
        %v1099 = vsub.f32 %v1015, %v1057
        %v1100 = vsub.f32 %v1016, %v1058
        %v1101 = vsub.f32 %v1017, %v1059
        %v1102 = vsub.f32 %v1018, %v1060
        %v1103 = vsub.f32 %v1019, %v1061
        %v1104 = vsub.f32 %v1020, %v1062
        %v1105 = vsub.f32 %v1021, %v1063
        %v1106 = vsub.f32 %v1022, %v1064
        %v1107 = vsub.f32 %v1023, %v1065
        %v1108 = vadd.f32 %v1066, 1e-05
        %v1109 = vadd.f32 %v1067, 1e-05
        %v1110 = vadd.f32 %v1068, 1e-05
        %v1111 = vadd.f32 %v1069, 1e-05
        %v1112 = vadd.f32 %v1070, 1e-05
        %v1113 = vadd.f32 %v1071, 1e-05
        %v1114 = vadd.f32 %v1072, 1e-05
        %v1115 = vadd.f32 %v1073, 1e-05
        %v1116 = vadd.f32 %v1074, 1e-05
        %v1117 = vadd.f32 %v1075, 1e-05
        %v1118 = vadd.f32 %v1076, 1e-05
        %v1119 = vadd.f32 %v1077, 1e-05
        %v1120 = vadd.f32 %v1078, 1e-05
        %v1121 = vadd.f32 %v1079, 1e-05
        %v1122 = vadd.f32 %v1080, 1e-05
        %v1123 = vadd.f32 %v1081, 1e-05
        %v1124 = vadd.f32 %v1082, 1e-05
        %v1125 = vadd.f32 %v1083, 1e-05
        %v1126 = vadd.f32 %v1084, 1e-05
        %v1127 = vadd.f32 %v1085, 1e-05
        %v1128 = vadd.f32 %v1086, 1e-05
        %v1129 = vadd.f32 %v1087, 1e-05
        %v1130 = vadd.f32 %v1088, 1e-05
        %v1131 = vadd.f32 %v1089, 1e-05
        %v1132 = vadd.f32 %v1090, 1e-05
        %v1133 = vadd.f32 %v1091, 1e-05
        %v1134 = vadd.f32 %v1092, 1e-05
        %v1135 = vadd.f32 %v1093, 1e-05
        %v1136 = vadd.f32 %v1094, 1e-05
        %v1137 = vadd.f32 %v1095, 1e-05
        %v1138 = vadd.f32 %v1096, 1e-05
        %v1139 = vadd.f32 %v1097, 1e-05
        %v1140 = vadd.f32 %v1098, 1e-05
        %v1141 = vadd.f32 %v1099, 1e-05
        %v1142 = vadd.f32 %v1100, 1e-05
        %v1143 = vadd.f32 %v1101, 1e-05
        %v1144 = vadd.f32 %v1102, 1e-05
        %v1145 = vadd.f32 %v1103, 1e-05
        %v1146 = vadd.f32 %v1104, 1e-05
        %v1147 = vadd.f32 %v1105, 1e-05
        %v1148 = vadd.f32 %v1106, 1e-05
        %v1149 = vadd.f32 %v1107, 1e-05
        %v1150 = vrsqrt.pop %v1108
        %v1151 = vrsqrt.pop %v1109
        %v1152 = vrsqrt.pop %v1110
        %v1153 = vrsqrt.pop %v1111
        %v1154 = vrsqrt.pop %v1112
        %v1155 = vrsqrt.pop %v1113
        %v1156 = vrsqrt.pop %v1114
        %v1157 = vrsqrt.pop %v1115
        %v1158 = vrsqrt.pop %v1116
        %v1159 = vrsqrt.pop %v1117
        %v1160 = vrsqrt.pop %v1118
        %v1161 = vrsqrt.pop %v1119
        %v1162 = vrsqrt.pop %v1120
        %v1163 = vrsqrt.pop %v1121
        %v1164 = vrsqrt.pop %v1122
        %v1165 = vrsqrt.pop %v1123
        %v1166 = vrsqrt.pop %v1124
        %v1167 = vrsqrt.pop %v1125
        %v1168 = vrsqrt.pop %v1126
        %v1169 = vrsqrt.pop %v1127
        %v1170 = vrsqrt.pop %v1128
        %v1171 = vrsqrt.pop %v1129
        %v1172 = vrsqrt.pop %v1130
        %v1173 = vrsqrt.pop %v1131
        %v1174 = vrsqrt.pop %v1132
        %v1175 = vrsqrt.pop %v1133
        %v1176 = vrsqrt.pop %v1134
        %v1177 = vrsqrt.pop %v1135
        %v1178 = vrsqrt.pop %v1136
        %v1179 = vrsqrt.pop %v1137
        %v1180 = vrsqrt.pop %v1138
        %v1181 = vrsqrt.pop %v1139
        %v1182 = vrsqrt.pop %v1140
        %v1183 = vrsqrt.pop %v1141
        %v1184 = vrsqrt.pop %v1142
        %v1185 = vrsqrt.pop %v1143
        %v1186 = vrsqrt.pop %v1144
        %v1187 = vrsqrt.pop %v1145
        %v1188 = vrsqrt.pop %v1146
        %v1189 = vrsqrt.pop %v1147
        %v1190 = vrsqrt.pop %v1148
        %v1191 = vrsqrt.pop %v1149
        %v1192 = vld [vmem:[%s2] sm:$0xff]
        %v1193 = vld [vmem:[%s2 + $0x8] sm:$0xff]
        %v1194 = vld [vmem:[%s2 + $0x10] sm:$0xff]
        %v1195 = vld [vmem:[%s2 + $0x18] sm:$0xff]
        %v1196 = vld [vmem:[%s2 + $0x20] sm:$0xff]
        %v1197 = vld [vmem:[%s2 + $0x28] sm:$0xff]
        %v1198 = vld [vmem:[%s2 + $0x30] sm:$0xff]
        %v1199 = vld [vmem:[%s2 + $0x38] sm:$0xff]
        %v1200 = vld [vmem:[%s2 + $0x40] sm:$0xff]
        %v1201 = vld [vmem:[%s2 + $0x48] sm:$0xff]
        %v1202 = vld [vmem:[%s2 + $0x50] sm:$0xff]
        %v1203 = vld [vmem:[%s2 + $0x58] sm:$0xff]
        %v1204 = vld [vmem:[%s2 + $0x60] sm:$0xff]
        %v1205 = vld [vmem:[%s2 + $0x68] sm:$0xff]
        %v1206 = vld [vmem:[%s2 + $0x70] sm:$0xff]
        %v1207 = vld [vmem:[%s2 + $0x78] sm:$0xff]
        %v1208 = vld [vmem:[%s2 + $0x80] sm:$0xff]
        %v1209 = vld [vmem:[%s2 + $0x88] sm:$0xff]
        %v1210 = vld [vmem:[%s2 + $0x90] sm:$0xff]
        %v1211 = vld [vmem:[%s2 + $0x98] sm:$0xff]
        %v1212 = vld [vmem:[%s2 + $0xa0] sm:$0xff]
        %v1213 = vld [vmem:[%s2 + $0xa8] sm:$0xff]
        %v1214 = vld [vmem:[%s2 + $0xb0] sm:$0xff]
        %v1215 = vld [vmem:[%s2 + $0xb8] sm:$0xff]
        %v1216 = vld [vmem:[%s2 + $0xc0] sm:$0xff]
        %v1217 = vld [vmem:[%s2 + $0xc8] sm:$0xff]
        %v1218 = vld [vmem:[%s2 + $0xd0] sm:$0xff]
        %v1219 = vld [vmem:[%s2 + $0xd8] sm:$0xff]
        %v1220 = vld [vmem:[%s2 + $0xe0] sm:$0xff]
        %v1221 = vld [vmem:[%s2 + $0xe8] sm:$0xff]
        %v1222 = vld [vmem:[%s2 + $0xf0] sm:$0xff]
        %v1223 = vld [vmem:[%s2 + $0xf8] sm:$0xff]
        %v1224 = vld [vmem:[%s2 + $0x100] sm:$0xff]
        %v1225 = vld [vmem:[%s2 + $0x108] sm:$0xff]
        %v1226 = vld [vmem:[%s2 + $0x110] sm:$0xff]
        %v1227 = vld [vmem:[%s2 + $0x118] sm:$0xff]
        %v1228 = vld [vmem:[%s2 + $0x120] sm:$0xff]
        %v1229 = vld [vmem:[%s2 + $0x128] sm:$0xff]
        %v1230 = vld [vmem:[%s2 + $0x130] sm:$0xff]
        %v1231 = vld [vmem:[%s2 + $0x138] sm:$0xff]
        %v1232 = vld [vmem:[%s2 + $0x140] sm:$0xff]
        %v1233 = vld [vmem:[%s2 + $0x148] sm:$0xff]
        %v1234 = vmul.f32 %v1192, %v1150
        %v1235 = vmul.f32 %v1193, %v1151
        %v1236 = vmul.f32 %v1194, %v1152
        %v1237 = vmul.f32 %v1195, %v1153
        %v1238 = vmul.f32 %v1196, %v1154
        %v1239 = vmul.f32 %v1197, %v1155
        %v1240 = vmul.f32 %v1198, %v1156
        %v1241 = vmul.f32 %v1199, %v1157
        %v1242 = vmul.f32 %v1200, %v1158
        %v1243 = vmul.f32 %v1201, %v1159
        %v1244 = vmul.f32 %v1202, %v1160
        %v1245 = vmul.f32 %v1203, %v1161
        %v1246 = vmul.f32 %v1204, %v1162
        %v1247 = vmul.f32 %v1205, %v1163
        %v1248 = vmul.f32 %v1206, %v1164
        %v1249 = vmul.f32 %v1207, %v1165
        %v1250 = vmul.f32 %v1208, %v1166
        %v1251 = vmul.f32 %v1209, %v1167
        %v1252 = vmul.f32 %v1210, %v1168
        %v1253 = vmul.f32 %v1211, %v1169
        %v1254 = vmul.f32 %v1212, %v1170
        %v1255 = vmul.f32 %v1213, %v1171
        %v1256 = vmul.f32 %v1214, %v1172
        %v1257 = vmul.f32 %v1215, %v1173
        %v1258 = vmul.f32 %v1216, %v1174
        %v1259 = vmul.f32 %v1217, %v1175
        %v1260 = vmul.f32 %v1218, %v1176
        %v1261 = vmul.f32 %v1219, %v1177
        %v1262 = vmul.f32 %v1220, %v1178
        %v1263 = vmul.f32 %v1221, %v1179
        %v1264 = vmul.f32 %v1222, %v1180
        %v1265 = vmul.f32 %v1223, %v1181
        %v1266 = vmul.f32 %v1224, %v1182
        %v1267 = vmul.f32 %v1225, %v1183
        %v1268 = vmul.f32 %v1226, %v1184
        %v1269 = vmul.f32 %v1227, %v1185
        %v1270 = vmul.f32 %v1228, %v1186
        %v1271 = vmul.f32 %v1229, %v1187
        %v1272 = vmul.f32 %v1230, %v1188
        %v1273 = vmul.f32 %v1231, %v1189
        %v1274 = vmul.f32 %v1232, %v1190
        %v1275 = vmul.f32 %v1233, %v1191
        %v1276 = vld [vmem:[%s3] sm:$0xff]
        %v1277 = vld [vmem:[%s3 + $0x8] sm:$0xff]
        %v1278 = vld [vmem:[%s3 + $0x10] sm:$0xff]
        %v1279 = vld [vmem:[%s3 + $0x18] sm:$0xff]
        %v1280 = vld [vmem:[%s3 + $0x20] sm:$0xff]
        %v1281 = vld [vmem:[%s3 + $0x28] sm:$0xff]
        %v1282 = vld [vmem:[%s3 + $0x30] sm:$0xff]
        %v1283 = vld [vmem:[%s3 + $0x38] sm:$0xff]
        %v1284 = vld [vmem:[%s3 + $0x40] sm:$0xff]
        %v1285 = vld [vmem:[%s3 + $0x48] sm:$0xff]
        %v1286 = vld [vmem:[%s3 + $0x50] sm:$0xff]
        %v1287 = vld [vmem:[%s3 + $0x58] sm:$0xff]
        %v1288 = vld [vmem:[%s3 + $0x60] sm:$0xff]
        %v1289 = vld [vmem:[%s3 + $0x68] sm:$0xff]
        %v1290 = vld [vmem:[%s3 + $0x70] sm:$0xff]
        %v1291 = vld [vmem:[%s3 + $0x78] sm:$0xff]
        %v1292 = vld [vmem:[%s3 + $0x80] sm:$0xff]
        %v1293 = vld [vmem:[%s3 + $0x88] sm:$0xff]
        %v1294 = vld [vmem:[%s3 + $0x90] sm:$0xff]
        %v1295 = vld [vmem:[%s3 + $0x98] sm:$0xff]
        %v1296 = vld [vmem:[%s3 + $0xa0] sm:$0xff]
        %v1297 = vld [vmem:[%s3 + $0xa8] sm:$0xff]
        %v1298 = vld [vmem:[%s3 + $0xb0] sm:$0xff]
        %v1299 = vld [vmem:[%s3 + $0xb8] sm:$0xff]
        %v1300 = vld [vmem:[%s3 + $0xc0] sm:$0xff]
        %v1301 = vld [vmem:[%s3 + $0xc8] sm:$0xff]
        %v1302 = vld [vmem:[%s3 + $0xd0] sm:$0xff]
        %v1303 = vld [vmem:[%s3 + $0xd8] sm:$0xff]
        %v1304 = vld [vmem:[%s3 + $0xe0] sm:$0xff]
        %v1305 = vld [vmem:[%s3 + $0xe8] sm:$0xff]
        %v1306 = vld [vmem:[%s3 + $0xf0] sm:$0xff]
        %v1307 = vld [vmem:[%s3 + $0xf8] sm:$0xff]
        %v1308 = vld [vmem:[%s3 + $0x100] sm:$0xff]
        %v1309 = vld [vmem:[%s3 + $0x108] sm:$0xff]
        %v1310 = vld [vmem:[%s3 + $0x110] sm:$0xff]
        %v1311 = vld [vmem:[%s3 + $0x118] sm:$0xff]
        %v1312 = vld [vmem:[%s3 + $0x120] sm:$0xff]
        %v1313 = vld [vmem:[%s3 + $0x128] sm:$0xff]
        %v1314 = vld [vmem:[%s3 + $0x130] sm:$0xff]
        %v1315 = vld [vmem:[%s3 + $0x138] sm:$0xff]
        %v1316 = vld [vmem:[%s3 + $0x140] sm:$0xff]
        %v1317 = vld [vmem:[%s3 + $0x148] sm:$0xff]
        %v1318 = vmul.f32 %v688, %v1234
        %v1319 = vmul.f32 %v689, %v1235
        %v1320 = vmul.f32 %v690, %v1236
        %v1321 = vmul.f32 %v691, %v1237
        %v1322 = vmul.f32 %v692, %v1238
        %v1323 = vmul.f32 %v693, %v1239
        %v1324 = vmul.f32 %v694, %v1240
        %v1325 = vmul.f32 %v695, %v1241
        %v1326 = vmul.f32 %v696, %v1242
        %v1327 = vmul.f32 %v697, %v1243
        %v1328 = vmul.f32 %v698, %v1244
        %v1329 = vmul.f32 %v699, %v1245
        %v1330 = vmul.f32 %v700, %v1246
        %v1331 = vmul.f32 %v701, %v1247
        %v1332 = vmul.f32 %v702, %v1248
        %v1333 = vmul.f32 %v703, %v1249
        %v1334 = vmul.f32 %v704, %v1250
        %v1335 = vmul.f32 %v705, %v1251
        %v1336 = vmul.f32 %v706, %v1252
        %v1337 = vmul.f32 %v707, %v1253
        %v1338 = vmul.f32 %v708, %v1254
        %v1339 = vmul.f32 %v709, %v1255
        %v1340 = vmul.f32 %v710, %v1256
        %v1341 = vmul.f32 %v711, %v1257
        %v1342 = vmul.f32 %v712, %v1258
        %v1343 = vmul.f32 %v713, %v1259
        %v1344 = vmul.f32 %v714, %v1260
        %v1345 = vmul.f32 %v715, %v1261
        %v1346 = vmul.f32 %v716, %v1262
        %v1347 = vmul.f32 %v717, %v1263
        %v1348 = vmul.f32 %v718, %v1264
        %v1349 = vmul.f32 %v719, %v1265
        %v1350 = vmul.f32 %v720, %v1266
        %v1351 = vmul.f32 %v721, %v1267
        %v1352 = vmul.f32 %v722, %v1268
        %v1353 = vmul.f32 %v723, %v1269
        %v1354 = vmul.f32 %v724, %v1270
        %v1355 = vmul.f32 %v725, %v1271
        %v1356 = vmul.f32 %v726, %v1272
        %v1357 = vmul.f32 %v727, %v1273
        %v1358 = vmul.f32 %v728, %v1274
        %v1359 = vmul.f32 %v729, %v1275
        %v1360 = vsub.f32 %v1276, %v1318
        %v1361 = vsub.f32 %v1277, %v1319
        %v1362 = vsub.f32 %v1278, %v1320
        %v1363 = vsub.f32 %v1279, %v1321
        %v1364 = vsub.f32 %v1280, %v1322
        %v1365 = vsub.f32 %v1281, %v1323
        %v1366 = vsub.f32 %v1282, %v1324
        %v1367 = vsub.f32 %v1283, %v1325
        %v1368 = vsub.f32 %v1284, %v1326
        %v1369 = vsub.f32 %v1285, %v1327
        %v1370 = vsub.f32 %v1286, %v1328
        %v1371 = vsub.f32 %v1287, %v1329
        %v1372 = vsub.f32 %v1288, %v1330
        %v1373 = vsub.f32 %v1289, %v1331
        %v1374 = vsub.f32 %v1290, %v1332
        %v1375 = vsub.f32 %v1291, %v1333
        %v1376 = vsub.f32 %v1292, %v1334
        %v1377 = vsub.f32 %v1293, %v1335
        %v1378 = vsub.f32 %v1294, %v1336
        %v1379 = vsub.f32 %v1295, %v1337
        %v1380 = vsub.f32 %v1296, %v1338
        %v1381 = vsub.f32 %v1297, %v1339
        %v1382 = vsub.f32 %v1298, %v1340
        %v1383 = vsub.f32 %v1299, %v1341
        %v1384 = vsub.f32 %v1300, %v1342
        %v1385 = vsub.f32 %v1301, %v1343
        %v1386 = vsub.f32 %v1302, %v1344
        %v1387 = vsub.f32 %v1303, %v1345
        %v1388 = vsub.f32 %v1304, %v1346
        %v1389 = vsub.f32 %v1305, %v1347
        %v1390 = vsub.f32 %v1306, %v1348
        %v1391 = vsub.f32 %v1307, %v1349
        %v1392 = vsub.f32 %v1308, %v1350
        %v1393 = vsub.f32 %v1309, %v1351
        %v1394 = vsub.f32 %v1310, %v1352
        %v1395 = vsub.f32 %v1311, %v1353
        %v1396 = vsub.f32 %v1312, %v1354
        %v1397 = vsub.f32 %v1313, %v1355
        %v1398 = vsub.f32 %v1314, %v1356
        %v1399 = vsub.f32 %v1315, %v1357
        %v1400 = vsub.f32 %v1316, %v1358
        %v1401 = vsub.f32 %v1317, %v1359
        %v1402 = vld [vmem:[%s1] sm:$0xff]
        %v1403 = vld [vmem:[%s1 + $0x8] sm:$0xff]
        %v1404 = vld [vmem:[%s1 + $0x10] sm:$0xff]
        %v1405 = vld [vmem:[%s1 + $0x18] sm:$0xff]
        %v1406 = vld [vmem:[%s1 + $0x20] sm:$0xff]
        %v1407 = vld [vmem:[%s1 + $0x28] sm:$0xff]
        %v1408 = vld [vmem:[%s1 + $0x30] sm:$0xff]
        %v1409 = vld [vmem:[%s1 + $0x38] sm:$0xff]
        %v1410 = vld [vmem:[%s1 + $0x40] sm:$0xff]
        %v1411 = vld [vmem:[%s1 + $0x48] sm:$0xff]
        %v1412 = vld [vmem:[%s1 + $0x50] sm:$0xff]
        %v1413 = vld [vmem:[%s1 + $0x58] sm:$0xff]
        %v1414 = vld [vmem:[%s1 + $0x60] sm:$0xff]
        %v1415 = vld [vmem:[%s1 + $0x68] sm:$0xff]
        %v1416 = vld [vmem:[%s1 + $0x70] sm:$0xff]
        %v1417 = vld [vmem:[%s1 + $0x78] sm:$0xff]
        %v1418 = vld [vmem:[%s1 + $0x80] sm:$0xff]
        %v1419 = vld [vmem:[%s1 + $0x88] sm:$0xff]
        %v1420 = vld [vmem:[%s1 + $0x90] sm:$0xff]
        %v1421 = vld [vmem:[%s1 + $0x98] sm:$0xff]
        %v1422 = vld [vmem:[%s1 + $0xa0] sm:$0xff]
        %v1423 = vld [vmem:[%s1 + $0xa8] sm:$0xff]
        %v1424 = vld [vmem:[%s1 + $0xb0] sm:$0xff]
        %v1425 = vld [vmem:[%s1 + $0xb8] sm:$0xff]
        %v1426 = vld [vmem:[%s1 + $0xc0] sm:$0xff]
        %v1427 = vld [vmem:[%s1 + $0xc8] sm:$0xff]
        %v1428 = vld [vmem:[%s1 + $0xd0] sm:$0xff]
        %v1429 = vld [vmem:[%s1 + $0xd8] sm:$0xff]
        %v1430 = vld [vmem:[%s1 + $0xe0] sm:$0xff]
        %v1431 = vld [vmem:[%s1 + $0xe8] sm:$0xff]
        %v1432 = vld [vmem:[%s1 + $0xf0] sm:$0xff]
        %v1433 = vld [vmem:[%s1 + $0xf8] sm:$0xff]
        %v1434 = vld [vmem:[%s1 + $0x100] sm:$0xff]
        %v1435 = vld [vmem:[%s1 + $0x108] sm:$0xff]
        %v1436 = vld [vmem:[%s1 + $0x110] sm:$0xff]
        %v1437 = vld [vmem:[%s1 + $0x118] sm:$0xff]
        %v1438 = vld [vmem:[%s1 + $0x120] sm:$0xff]
        %v1439 = vld [vmem:[%s1 + $0x128] sm:$0xff]
        %v1440 = vld [vmem:[%s1 + $0x130] sm:$0xff]
        %v1441 = vld [vmem:[%s1 + $0x138] sm:$0xff]
        %v1442 = vld [vmem:[%s1 + $0x140] sm:$0xff]
        %v1443 = vld [vmem:[%s1 + $0x148] sm:$0xff]
        %v1444 = vld [vmem:[%s1 + $0x150] sm:$0xff]
        %v1445 = vld [vmem:[%s1 + $0x158] sm:$0xff]
        %v1446 = vld [vmem:[%s1 + $0x160] sm:$0xff]
        %v1447 = vld [vmem:[%s1 + $0x168] sm:$0xff]
        %v1448 = vld [vmem:[%s1 + $0x170] sm:$0xff]
        %v1449 = vld [vmem:[%s1 + $0x178] sm:$0xff]
        %v1450 = vld [vmem:[%s1 + $0x180] sm:$0xff]
        %v1451 = vld [vmem:[%s1 + $0x188] sm:$0xff]
        %v1452 = vld [vmem:[%s1 + $0x190] sm:$0xff]
        %v1453 = vld [vmem:[%s1 + $0x198] sm:$0xff]
        %v1454 = vld [vmem:[%s1 + $0x1a0] sm:$0xff]
        %v1455 = vld [vmem:[%s1 + $0x1a8] sm:$0xff]
        %v1456 = vld [vmem:[%s1 + $0x1b0] sm:$0xff]
        %v1457 = vld [vmem:[%s1 + $0x1b8] sm:$0xff]
        %v1458 = vld [vmem:[%s1 + $0x1c0] sm:$0xff]
        %v1459 = vld [vmem:[%s1 + $0x1c8] sm:$0xff]
        %v1460 = vld [vmem:[%s1 + $0x1d0] sm:$0xff]
        %v1461 = vld [vmem:[%s1 + $0x1d8] sm:$0xff]
        %v1462 = vld [vmem:[%s1 + $0x1e0] sm:$0xff]
        %v1463 = vld [vmem:[%s1 + $0x1e8] sm:$0xff]
        %v1464 = vld [vmem:[%s1 + $0x1f0] sm:$0xff]
        %v1465 = vld [vmem:[%s1 + $0x1f8] sm:$0xff]
        %v1466 = vld [vmem:[%s1 + $0x200] sm:$0xff]
        %v1467 = vld [vmem:[%s1 + $0x208] sm:$0xff]
        %v1468 = vld [vmem:[%s1 + $0x210] sm:$0xff]
        %v1469 = vld [vmem:[%s1 + $0x218] sm:$0xff]
        %v1470 = vld [vmem:[%s1 + $0x220] sm:$0xff]
        %v1471 = vld [vmem:[%s1 + $0x228] sm:$0xff]
        %v1472 = vld [vmem:[%s1 + $0x230] sm:$0xff]
        %v1473 = vld [vmem:[%s1 + $0x238] sm:$0xff]
        %v1474 = vld [vmem:[%s1 + $0x240] sm:$0xff]
        %v1475 = vld [vmem:[%s1 + $0x248] sm:$0xff]
        %v1476 = vld [vmem:[%s1 + $0x250] sm:$0xff]
        %v1477 = vld [vmem:[%s1 + $0x258] sm:$0xff]
        %v1478 = vld [vmem:[%s1 + $0x260] sm:$0xff]
        %v1479 = vld [vmem:[%s1 + $0x268] sm:$0xff]
        %v1480 = vld [vmem:[%s1 + $0x270] sm:$0xff]
        %v1481 = vld [vmem:[%s1 + $0x278] sm:$0xff]
        %v1482 = vld [vmem:[%s1 + $0x280] sm:$0xff]
        %v1483 = vld [vmem:[%s1 + $0x288] sm:$0xff]
        %v1484 = vld [vmem:[%s1 + $0x290] sm:$0xff]
        %v1485 = vld [vmem:[%s1 + $0x298] sm:$0xff]
        %1487 = vset.pattern.permute.xlu0 0
        %1488 = vperm.xlu0 %1487, %v1234
        %v1489 = vpop.permute.xlu0 %1488
        %1492 = vset.pattern.permute.xlu0 0
        %1493 = vperm.xlu0 %1492, %v1235
        %v1494 = vpop.permute.xlu0 %1493
        %1497 = vset.pattern.permute.xlu0 0
        %1498 = vperm.xlu0 %1497, %v1236
        %v1499 = vpop.permute.xlu0 %1498
        %1502 = vset.pattern.permute.xlu0 0
        %1503 = vperm.xlu0 %1502, %v1237
        %v1504 = vpop.permute.xlu0 %1503
        %1507 = vset.pattern.permute.xlu0 0
        %1508 = vperm.xlu0 %1507, %v1238
        %v1509 = vpop.permute.xlu0 %1508
        %1512 = vset.pattern.permute.xlu0 0
        %1513 = vperm.xlu0 %1512, %v1239
        %v1514 = vpop.permute.xlu0 %1513
        %1517 = vset.pattern.permute.xlu0 0
        %1518 = vperm.xlu0 %1517, %v1240
        %v1519 = vpop.permute.xlu0 %1518
        %1522 = vset.pattern.permute.xlu0 0
        %1523 = vperm.xlu0 %1522, %v1241
        %v1524 = vpop.permute.xlu0 %1523
        %1527 = vset.pattern.permute.xlu0 0
        %1528 = vperm.xlu0 %1527, %v1242
        %v1529 = vpop.permute.xlu0 %1528
        %1532 = vset.pattern.permute.xlu0 0
        %1533 = vperm.xlu0 %1532, %v1243
        %v1534 = vpop.permute.xlu0 %1533
        %1537 = vset.pattern.permute.xlu0 0
        %1538 = vperm.xlu0 %1537, %v1244
        %v1539 = vpop.permute.xlu0 %1538
        %1542 = vset.pattern.permute.xlu0 0
        %1543 = vperm.xlu0 %1542, %v1245
        %v1544 = vpop.permute.xlu0 %1543
        %1547 = vset.pattern.permute.xlu0 0
        %1548 = vperm.xlu0 %1547, %v1246
        %v1549 = vpop.permute.xlu0 %1548
        %1552 = vset.pattern.permute.xlu0 0
        %1553 = vperm.xlu0 %1552, %v1247
        %v1554 = vpop.permute.xlu0 %1553
        %1557 = vset.pattern.permute.xlu0 0
        %1558 = vperm.xlu0 %1557, %v1248
        %v1559 = vpop.permute.xlu0 %1558
        %1562 = vset.pattern.permute.xlu0 0
        %1563 = vperm.xlu0 %1562, %v1249
        %v1564 = vpop.permute.xlu0 %1563
        %1567 = vset.pattern.permute.xlu0 0
        %1568 = vperm.xlu0 %1567, %v1250
        %v1569 = vpop.permute.xlu0 %1568
        %1572 = vset.pattern.permute.xlu0 0
        %1573 = vperm.xlu0 %1572, %v1251
        %v1574 = vpop.permute.xlu0 %1573
        %1577 = vset.pattern.permute.xlu0 0
        %1578 = vperm.xlu0 %1577, %v1252
        %v1579 = vpop.permute.xlu0 %1578
        %1582 = vset.pattern.permute.xlu0 0
        %1583 = vperm.xlu0 %1582, %v1253
        %v1584 = vpop.permute.xlu0 %1583
        %1587 = vset.pattern.permute.xlu0 0
        %1588 = vperm.xlu0 %1587, %v1254
        %v1589 = vpop.permute.xlu0 %1588
        %1592 = vset.pattern.permute.xlu0 0
        %1593 = vperm.xlu0 %1592, %v1255
        %v1594 = vpop.permute.xlu0 %1593
        %1597 = vset.pattern.permute.xlu0 0
        %1598 = vperm.xlu0 %1597, %v1256
        %v1599 = vpop.permute.xlu0 %1598
        %1602 = vset.pattern.permute.xlu0 0
        %1603 = vperm.xlu0 %1602, %v1257
        %v1604 = vpop.permute.xlu0 %1603
        %1607 = vset.pattern.permute.xlu0 0
        %1608 = vperm.xlu0 %1607, %v1258
        %v1609 = vpop.permute.xlu0 %1608
        %1612 = vset.pattern.permute.xlu0 0
        %1613 = vperm.xlu0 %1612, %v1259
        %v1614 = vpop.permute.xlu0 %1613
        %1617 = vset.pattern.permute.xlu0 0
        %1618 = vperm.xlu0 %1617, %v1260
        %v1619 = vpop.permute.xlu0 %1618
        %1622 = vset.pattern.permute.xlu0 0
        %1623 = vperm.xlu0 %1622, %v1261
        %v1624 = vpop.permute.xlu0 %1623
        %1627 = vset.pattern.permute.xlu0 0
        %1628 = vperm.xlu0 %1627, %v1262
        %v1629 = vpop.permute.xlu0 %1628
        %1632 = vset.pattern.permute.xlu0 0
        %1633 = vperm.xlu0 %1632, %v1263
        %v1634 = vpop.permute.xlu0 %1633
        %1637 = vset.pattern.permute.xlu0 0
        %1638 = vperm.xlu0 %1637, %v1264
        %v1639 = vpop.permute.xlu0 %1638
        %1642 = vset.pattern.permute.xlu0 0
        %1643 = vperm.xlu0 %1642, %v1265
        %v1644 = vpop.permute.xlu0 %1643
        %1647 = vset.pattern.permute.xlu0 0
        %1648 = vperm.xlu0 %1647, %v1266
        %v1649 = vpop.permute.xlu0 %1648
        %1652 = vset.pattern.permute.xlu0 0
        %1653 = vperm.xlu0 %1652, %v1267
        %v1654 = vpop.permute.xlu0 %1653
        %1657 = vset.pattern.permute.xlu0 0
        %1658 = vperm.xlu0 %1657, %v1268
        %v1659 = vpop.permute.xlu0 %1658
        %1662 = vset.pattern.permute.xlu0 0
        %1663 = vperm.xlu0 %1662, %v1269
        %v1664 = vpop.permute.xlu0 %1663
        %1667 = vset.pattern.permute.xlu0 0
        %1668 = vperm.xlu0 %1667, %v1270
        %v1669 = vpop.permute.xlu0 %1668
        %1672 = vset.pattern.permute.xlu0 0
        %1673 = vperm.xlu0 %1672, %v1271
        %v1674 = vpop.permute.xlu0 %1673
        %1677 = vset.pattern.permute.xlu0 0
        %1678 = vperm.xlu0 %1677, %v1272
        %v1679 = vpop.permute.xlu0 %1678
        %1682 = vset.pattern.permute.xlu0 0
        %1683 = vperm.xlu0 %1682, %v1273
        %v1684 = vpop.permute.xlu0 %1683
        %1687 = vset.pattern.permute.xlu0 0
        %1688 = vperm.xlu0 %1687, %v1274
        %v1689 = vpop.permute.xlu0 %1688
        %1692 = vset.pattern.permute.xlu0 0
        %1693 = vperm.xlu0 %1692, %v1275
        %v1694 = vpop.permute.xlu0 %1693
        %v1696 = vmul.f32 %v435, %v1489
        %v1697 = vmul.f32 %v436, %v1489
        %v1698 = vmul.f32 %v437, %v1494
        %v1699 = vmul.f32 %v438, %v1494
        %v1700 = vmul.f32 %v439, %v1499
        %v1701 = vmul.f32 %v440, %v1499
        %v1702 = vmul.f32 %v441, %v1504
        %v1703 = vmul.f32 %v442, %v1504
        %v1704 = vmul.f32 %v443, %v1509
        %v1705 = vmul.f32 %v444, %v1509
        %v1706 = vmul.f32 %v445, %v1514
        %v1707 = vmul.f32 %v446, %v1514
        %v1708 = vmul.f32 %v447, %v1519
        %v1709 = vmul.f32 %v448, %v1519
        %v1710 = vmul.f32 %v449, %v1524
        %v1711 = vmul.f32 %v450, %v1524
        %v1712 = vmul.f32 %v451, %v1529
        %v1713 = vmul.f32 %v452, %v1529
        %v1714 = vmul.f32 %v453, %v1534
        %v1715 = vmul.f32 %v454, %v1534
        %v1716 = vmul.f32 %v455, %v1539
        %v1717 = vmul.f32 %v456, %v1539
        %v1718 = vmul.f32 %v457, %v1544
        %v1719 = vmul.f32 %v458, %v1544
        %v1720 = vmul.f32 %v459, %v1549
        %v1721 = vmul.f32 %v460, %v1549
        %v1722 = vmul.f32 %v461, %v1554
        %v1723 = vmul.f32 %v462, %v1554
        %v1724 = vmul.f32 %v463, %v1559
        %v1725 = vmul.f32 %v464, %v1559
        %v1726 = vmul.f32 %v465, %v1564
        %v1727 = vmul.f32 %v466, %v1564
        %v1728 = vmul.f32 %v467, %v1569
        %v1729 = vmul.f32 %v468, %v1569
        %v1730 = vmul.f32 %v469, %v1574
        %v1731 = vmul.f32 %v470, %v1574
        %v1732 = vmul.f32 %v471, %v1579
        %v1733 = vmul.f32 %v472, %v1579
        %v1734 = vmul.f32 %v473, %v1584
        %v1735 = vmul.f32 %v474, %v1584
        %v1736 = vmul.f32 %v475, %v1589
        %v1737 = vmul.f32 %v476, %v1589
        %v1738 = vmul.f32 %v477, %v1594
        %v1739 = vmul.f32 %v478, %v1594
        %v1740 = vmul.f32 %v479, %v1599
        %v1741 = vmul.f32 %v480, %v1599
        %v1742 = vmul.f32 %v481, %v1604
        %v1743 = vmul.f32 %v482, %v1604
        %v1744 = vmul.f32 %v483, %v1609
        %v1745 = vmul.f32 %v484, %v1609
        %v1746 = vmul.f32 %v485, %v1614
        %v1747 = vmul.f32 %v486, %v1614
        %v1748 = vmul.f32 %v487, %v1619
        %v1749 = vmul.f32 %v488, %v1619
        %v1750 = vmul.f32 %v489, %v1624
        %v1751 = vmul.f32 %v490, %v1624
        %v1752 = vmul.f32 %v491, %v1629
        %v1753 = vmul.f32 %v492, %v1629
        %v1754 = vmul.f32 %v493, %v1634
        %v1755 = vmul.f32 %v494, %v1634
        %v1756 = vmul.f32 %v495, %v1639
        %v1757 = vmul.f32 %v496, %v1639
        %v1758 = vmul.f32 %v497, %v1644
        %v1759 = vmul.f32 %v498, %v1644
        %v1760 = vmul.f32 %v499, %v1649
        %v1761 = vmul.f32 %v500, %v1649
        %v1762 = vmul.f32 %v501, %v1654
        %v1763 = vmul.f32 %v502, %v1654
        %v1764 = vmul.f32 %v503, %v1659
        %v1765 = vmul.f32 %v504, %v1659
        %v1766 = vmul.f32 %v505, %v1664
        %v1767 = vmul.f32 %v506, %v1664
        %v1768 = vmul.f32 %v507, %v1669
        %v1769 = vmul.f32 %v508, %v1669
        %v1770 = vmul.f32 %v509, %v1674
        %v1771 = vmul.f32 %v510, %v1674
        %v1772 = vmul.f32 %v511, %v1679
        %v1773 = vmul.f32 %v512, %v1679
        %v1774 = vmul.f32 %v513, %v1684
        %v1775 = vmul.f32 %v514, %v1684
        %v1776 = vmul.f32 %v515, %v1689
        %v1777 = vmul.f32 %v516, %v1689
        %v1778 = vmul.f32 %v517, %v1694
        %v1779 = vmul.f32 %v518, %v1694
        %v1780 = vadd.f32 %v1402, %v1696
        %v1781 = vadd.f32 %v1403, %v1697
        %v1782 = vadd.f32 %v1404, %v1698
        %v1783 = vadd.f32 %v1405, %v1699
        %v1784 = vadd.f32 %v1406, %v1700
        %v1785 = vadd.f32 %v1407, %v1701
        %v1786 = vadd.f32 %v1408, %v1702
        %v1787 = vadd.f32 %v1409, %v1703
        %v1788 = vadd.f32 %v1410, %v1704
        %v1789 = vadd.f32 %v1411, %v1705
        %v1790 = vadd.f32 %v1412, %v1706
        %v1791 = vadd.f32 %v1413, %v1707
        %v1792 = vadd.f32 %v1414, %v1708
        %v1793 = vadd.f32 %v1415, %v1709
        %v1794 = vadd.f32 %v1416, %v1710
        %v1795 = vadd.f32 %v1417, %v1711
        %v1796 = vadd.f32 %v1418, %v1712
        %v1797 = vadd.f32 %v1419, %v1713
        %v1798 = vadd.f32 %v1420, %v1714
        %v1799 = vadd.f32 %v1421, %v1715
        %v1800 = vadd.f32 %v1422, %v1716
        %v1801 = vadd.f32 %v1423, %v1717
        %v1802 = vadd.f32 %v1424, %v1718
        %v1803 = vadd.f32 %v1425, %v1719
        %v1804 = vadd.f32 %v1426, %v1720
        %v1805 = vadd.f32 %v1427, %v1721
        %v1806 = vadd.f32 %v1428, %v1722
        %v1807 = vadd.f32 %v1429, %v1723
        %v1808 = vadd.f32 %v1430, %v1724
        %v1809 = vadd.f32 %v1431, %v1725
        %v1810 = vadd.f32 %v1432, %v1726
        %v1811 = vadd.f32 %v1433, %v1727
        %v1812 = vadd.f32 %v1434, %v1728
        %v1813 = vadd.f32 %v1435, %v1729
        %v1814 = vadd.f32 %v1436, %v1730
        %v1815 = vadd.f32 %v1437, %v1731
        %v1816 = vadd.f32 %v1438, %v1732
        %v1817 = vadd.f32 %v1439, %v1733
        %v1818 = vadd.f32 %v1440, %v1734
        %v1819 = vadd.f32 %v1441, %v1735
        %v1820 = vadd.f32 %v1442, %v1736
        %v1821 = vadd.f32 %v1443, %v1737
        %v1822 = vadd.f32 %v1444, %v1738
        %v1823 = vadd.f32 %v1445, %v1739
        %v1824 = vadd.f32 %v1446, %v1740
        %v1825 = vadd.f32 %v1447, %v1741
        %v1826 = vadd.f32 %v1448, %v1742
        %v1827 = vadd.f32 %v1449, %v1743
        %v1828 = vadd.f32 %v1450, %v1744
        %v1829 = vadd.f32 %v1451, %v1745
        %v1830 = vadd.f32 %v1452, %v1746
        %v1831 = vadd.f32 %v1453, %v1747
        %v1832 = vadd.f32 %v1454, %v1748
        %v1833 = vadd.f32 %v1455, %v1749
        %v1834 = vadd.f32 %v1456, %v1750
        %v1835 = vadd.f32 %v1457, %v1751
        %v1836 = vadd.f32 %v1458, %v1752
        %v1837 = vadd.f32 %v1459, %v1753
        %v1838 = vadd.f32 %v1460, %v1754
        %v1839 = vadd.f32 %v1461, %v1755
        %v1840 = vadd.f32 %v1462, %v1756
        %v1841 = vadd.f32 %v1463, %v1757
        %v1842 = vadd.f32 %v1464, %v1758
        %v1843 = vadd.f32 %v1465, %v1759
        %v1844 = vadd.f32 %v1466, %v1760
        %v1845 = vadd.f32 %v1467, %v1761
        %v1846 = vadd.f32 %v1468, %v1762
        %v1847 = vadd.f32 %v1469, %v1763
        %v1848 = vadd.f32 %v1470, %v1764
        %v1849 = vadd.f32 %v1471, %v1765
        %v1850 = vadd.f32 %v1472, %v1766
        %v1851 = vadd.f32 %v1473, %v1767
        %v1852 = vadd.f32 %v1474, %v1768
        %v1853 = vadd.f32 %v1475, %v1769
        %v1854 = vadd.f32 %v1476, %v1770
        %v1855 = vadd.f32 %v1477, %v1771
        %v1856 = vadd.f32 %v1478, %v1772
        %v1857 = vadd.f32 %v1479, %v1773
        %v1858 = vadd.f32 %v1480, %v1774
        %v1859 = vadd.f32 %v1481, %v1775
        %v1860 = vadd.f32 %v1482, %v1776
        %v1861 = vadd.f32 %v1483, %v1777
        %v1862 = vadd.f32 %v1484, %v1778
        %v1863 = vadd.f32 %v1485, %v1779
        %1865 = vset.pattern.permute.xlu0 0
        %1866 = vperm.xlu0 %1865, %v1360
        %v1867 = vpop.permute.xlu0 %1866
        %1870 = vset.pattern.permute.xlu0 0
        %1871 = vperm.xlu0 %1870, %v1361
        %v1872 = vpop.permute.xlu0 %1871
        %1875 = vset.pattern.permute.xlu0 0
        %1876 = vperm.xlu0 %1875, %v1362
        %v1877 = vpop.permute.xlu0 %1876
        %1880 = vset.pattern.permute.xlu0 0
        %1881 = vperm.xlu0 %1880, %v1363
        %v1882 = vpop.permute.xlu0 %1881
        %1885 = vset.pattern.permute.xlu0 0
        %1886 = vperm.xlu0 %1885, %v1364
        %v1887 = vpop.permute.xlu0 %1886
        %1890 = vset.pattern.permute.xlu0 0
        %1891 = vperm.xlu0 %1890, %v1365
        %v1892 = vpop.permute.xlu0 %1891
        %1895 = vset.pattern.permute.xlu0 0
        %1896 = vperm.xlu0 %1895, %v1366
        %v1897 = vpop.permute.xlu0 %1896
        %1900 = vset.pattern.permute.xlu0 0
        %1901 = vperm.xlu0 %1900, %v1367
        %v1902 = vpop.permute.xlu0 %1901
        %1905 = vset.pattern.permute.xlu0 0
        %1906 = vperm.xlu0 %1905, %v1368
        %v1907 = vpop.permute.xlu0 %1906
        %1910 = vset.pattern.permute.xlu0 0
        %1911 = vperm.xlu0 %1910, %v1369
        %v1912 = vpop.permute.xlu0 %1911
        %1915 = vset.pattern.permute.xlu0 0
        %1916 = vperm.xlu0 %1915, %v1370
        %v1917 = vpop.permute.xlu0 %1916
        %1920 = vset.pattern.permute.xlu0 0
        %1921 = vperm.xlu0 %1920, %v1371
        %v1922 = vpop.permute.xlu0 %1921
        %1925 = vset.pattern.permute.xlu0 0
        %1926 = vperm.xlu0 %1925, %v1372
        %v1927 = vpop.permute.xlu0 %1926
        %1930 = vset.pattern.permute.xlu0 0
        %1931 = vperm.xlu0 %1930, %v1373
        %v1932 = vpop.permute.xlu0 %1931
        %1935 = vset.pattern.permute.xlu0 0
        %1936 = vperm.xlu0 %1935, %v1374
        %v1937 = vpop.permute.xlu0 %1936
        %1940 = vset.pattern.permute.xlu0 0
        %1941 = vperm.xlu0 %1940, %v1375
        %v1942 = vpop.permute.xlu0 %1941
        %1945 = vset.pattern.permute.xlu0 0
        %1946 = vperm.xlu0 %1945, %v1376
        %v1947 = vpop.permute.xlu0 %1946
        %1950 = vset.pattern.permute.xlu0 0
        %1951 = vperm.xlu0 %1950, %v1377
        %v1952 = vpop.permute.xlu0 %1951
        %1955 = vset.pattern.permute.xlu0 0
        %1956 = vperm.xlu0 %1955, %v1378
        %v1957 = vpop.permute.xlu0 %1956
        %1960 = vset.pattern.permute.xlu0 0
        %1961 = vperm.xlu0 %1960, %v1379
        %v1962 = vpop.permute.xlu0 %1961
        %1965 = vset.pattern.permute.xlu0 0
        %1966 = vperm.xlu0 %1965, %v1380
        %v1967 = vpop.permute.xlu0 %1966
        %1970 = vset.pattern.permute.xlu0 0
        %1971 = vperm.xlu0 %1970, %v1381
        %v1972 = vpop.permute.xlu0 %1971
        %1975 = vset.pattern.permute.xlu0 0
        %1976 = vperm.xlu0 %1975, %v1382
        %v1977 = vpop.permute.xlu0 %1976
        %1980 = vset.pattern.permute.xlu0 0
        %1981 = vperm.xlu0 %1980, %v1383
        %v1982 = vpop.permute.xlu0 %1981
        %1985 = vset.pattern.permute.xlu0 0
        %1986 = vperm.xlu0 %1985, %v1384
        %v1987 = vpop.permute.xlu0 %1986
        %1990 = vset.pattern.permute.xlu0 0
        %1991 = vperm.xlu0 %1990, %v1385
        %v1992 = vpop.permute.xlu0 %1991
        %1995 = vset.pattern.permute.xlu0 0
        %1996 = vperm.xlu0 %1995, %v1386
        %v1997 = vpop.permute.xlu0 %1996
        %2000 = vset.pattern.permute.xlu0 0
        %2001 = vperm.xlu0 %2000, %v1387
        %v2002 = vpop.permute.xlu0 %2001
        %2005 = vset.pattern.permute.xlu0 0
        %2006 = vperm.xlu0 %2005, %v1388
        %v2007 = vpop.permute.xlu0 %2006
        %2010 = vset.pattern.permute.xlu0 0
        %2011 = vperm.xlu0 %2010, %v1389
        %v2012 = vpop.permute.xlu0 %2011
        %2015 = vset.pattern.permute.xlu0 0
        %2016 = vperm.xlu0 %2015, %v1390
        %v2017 = vpop.permute.xlu0 %2016
        %2020 = vset.pattern.permute.xlu0 0
        %2021 = vperm.xlu0 %2020, %v1391
        %v2022 = vpop.permute.xlu0 %2021
        %2025 = vset.pattern.permute.xlu0 0
        %2026 = vperm.xlu0 %2025, %v1392
        %v2027 = vpop.permute.xlu0 %2026
        %2030 = vset.pattern.permute.xlu0 0
        %2031 = vperm.xlu0 %2030, %v1393
        %v2032 = vpop.permute.xlu0 %2031
        %2035 = vset.pattern.permute.xlu0 0
        %2036 = vperm.xlu0 %2035, %v1394
        %v2037 = vpop.permute.xlu0 %2036
        %2040 = vset.pattern.permute.xlu0 0
        %2041 = vperm.xlu0 %2040, %v1395
        %v2042 = vpop.permute.xlu0 %2041
        %2045 = vset.pattern.permute.xlu0 0
        %2046 = vperm.xlu0 %2045, %v1396
        %v2047 = vpop.permute.xlu0 %2046
        %2050 = vset.pattern.permute.xlu0 0
        %2051 = vperm.xlu0 %2050, %v1397
        %v2052 = vpop.permute.xlu0 %2051
        %2055 = vset.pattern.permute.xlu0 0
        %2056 = vperm.xlu0 %2055, %v1398
        %v2057 = vpop.permute.xlu0 %2056
        %2060 = vset.pattern.permute.xlu0 0
        %2061 = vperm.xlu0 %2060, %v1399
        %v2062 = vpop.permute.xlu0 %2061
        %2065 = vset.pattern.permute.xlu0 0
        %2066 = vperm.xlu0 %2065, %v1400
        %v2067 = vpop.permute.xlu0 %2066
        %2070 = vset.pattern.permute.xlu0 0
        %2071 = vperm.xlu0 %2070, %v1401
        %v2072 = vpop.permute.xlu0 %2071
        %v2074 = vadd.f32 %v1780, %v1867
        %v2075 = vadd.f32 %v1781, %v1867
        %v2076 = vadd.f32 %v1782, %v1872
        %v2077 = vadd.f32 %v1783, %v1872
        %v2078 = vadd.f32 %v1784, %v1877
        %v2079 = vadd.f32 %v1785, %v1877
        %v2080 = vadd.f32 %v1786, %v1882
        %v2081 = vadd.f32 %v1787, %v1882
        %v2082 = vadd.f32 %v1788, %v1887
        %v2083 = vadd.f32 %v1789, %v1887
        %v2084 = vadd.f32 %v1790, %v1892
        %v2085 = vadd.f32 %v1791, %v1892
        %v2086 = vadd.f32 %v1792, %v1897
        %v2087 = vadd.f32 %v1793, %v1897
        %v2088 = vadd.f32 %v1794, %v1902
        %v2089 = vadd.f32 %v1795, %v1902
        %v2090 = vadd.f32 %v1796, %v1907
        %v2091 = vadd.f32 %v1797, %v1907
        %v2092 = vadd.f32 %v1798, %v1912
        %v2093 = vadd.f32 %v1799, %v1912
        %v2094 = vadd.f32 %v1800, %v1917
        %v2095 = vadd.f32 %v1801, %v1917
        %v2096 = vadd.f32 %v1802, %v1922
        %v2097 = vadd.f32 %v1803, %v1922
        %v2098 = vadd.f32 %v1804, %v1927
        %v2099 = vadd.f32 %v1805, %v1927
        %v2100 = vadd.f32 %v1806, %v1932
        %v2101 = vadd.f32 %v1807, %v1932
        %v2102 = vadd.f32 %v1808, %v1937
        %v2103 = vadd.f32 %v1809, %v1937
        %v2104 = vadd.f32 %v1810, %v1942
        %v2105 = vadd.f32 %v1811, %v1942
        %v2106 = vadd.f32 %v1812, %v1947
        %v2107 = vadd.f32 %v1813, %v1947
        %v2108 = vadd.f32 %v1814, %v1952
        %v2109 = vadd.f32 %v1815, %v1952
        %v2110 = vadd.f32 %v1816, %v1957
        %v2111 = vadd.f32 %v1817, %v1957
        %v2112 = vadd.f32 %v1818, %v1962
        %v2113 = vadd.f32 %v1819, %v1962
        %v2114 = vadd.f32 %v1820, %v1967
        %v2115 = vadd.f32 %v1821, %v1967
        %v2116 = vadd.f32 %v1822, %v1972
        %v2117 = vadd.f32 %v1823, %v1972
        %v2118 = vadd.f32 %v1824, %v1977
        %v2119 = vadd.f32 %v1825, %v1977
        %v2120 = vadd.f32 %v1826, %v1982
        %v2121 = vadd.f32 %v1827, %v1982
        %v2122 = vadd.f32 %v1828, %v1987
        %v2123 = vadd.f32 %v1829, %v1987
        %v2124 = vadd.f32 %v1830, %v1992
        %v2125 = vadd.f32 %v1831, %v1992
        %v2126 = vadd.f32 %v1832, %v1997
        %v2127 = vadd.f32 %v1833, %v1997
        %v2128 = vadd.f32 %v1834, %v2002
        %v2129 = vadd.f32 %v1835, %v2002
        %v2130 = vadd.f32 %v1836, %v2007
        %v2131 = vadd.f32 %v1837, %v2007
        %v2132 = vadd.f32 %v1838, %v2012
        %v2133 = vadd.f32 %v1839, %v2012
        %v2134 = vadd.f32 %v1840, %v2017
        %v2135 = vadd.f32 %v1841, %v2017
        %v2136 = vadd.f32 %v1842, %v2022
        %v2137 = vadd.f32 %v1843, %v2022
        %v2138 = vadd.f32 %v1844, %v2027
        %v2139 = vadd.f32 %v1845, %v2027
        %v2140 = vadd.f32 %v1846, %v2032
        %v2141 = vadd.f32 %v1847, %v2032
        %v2142 = vadd.f32 %v1848, %v2037
        %v2143 = vadd.f32 %v1849, %v2037
        %v2144 = vadd.f32 %v1850, %v2042
        %v2145 = vadd.f32 %v1851, %v2042
        %v2146 = vadd.f32 %v1852, %v2047
        %v2147 = vadd.f32 %v1853, %v2047
        %v2148 = vadd.f32 %v1854, %v2052
        %v2149 = vadd.f32 %v1855, %v2052
        %v2150 = vadd.f32 %v1856, %v2057
        %v2151 = vadd.f32 %v1857, %v2057
        %v2152 = vadd.f32 %v1858, %v2062
        %v2153 = vadd.f32 %v1859, %v2062
        %v2154 = vadd.f32 %v1860, %v2067
        %v2155 = vadd.f32 %v1861, %v2067
        %v2156 = vadd.f32 %v1862, %v2072
        %v2157 = vadd.f32 %v1863, %v2072
        %v2158 = vmax.f32 %v2074, 0.0
        %v2159 = vmax.f32 %v2075, 0.0
        %v2160 = vmax.f32 %v2076, 0.0
        %v2161 = vmax.f32 %v2077, 0.0
        %v2162 = vmax.f32 %v2078, 0.0
        %v2163 = vmax.f32 %v2079, 0.0
        %v2164 = vmax.f32 %v2080, 0.0
        %v2165 = vmax.f32 %v2081, 0.0
        %v2166 = vmax.f32 %v2082, 0.0
        %v2167 = vmax.f32 %v2083, 0.0
        %v2168 = vmax.f32 %v2084, 0.0
        %v2169 = vmax.f32 %v2085, 0.0
        %v2170 = vmax.f32 %v2086, 0.0
        %v2171 = vmax.f32 %v2087, 0.0
        %v2172 = vmax.f32 %v2088, 0.0
        %v2173 = vmax.f32 %v2089, 0.0
        %v2174 = vmax.f32 %v2090, 0.0
        %v2175 = vmax.f32 %v2091, 0.0
        %v2176 = vmax.f32 %v2092, 0.0
        %v2177 = vmax.f32 %v2093, 0.0
        %v2178 = vmax.f32 %v2094, 0.0
        %v2179 = vmax.f32 %v2095, 0.0
        %v2180 = vmax.f32 %v2096, 0.0
        %v2181 = vmax.f32 %v2097, 0.0
        %v2182 = vmax.f32 %v2098, 0.0
        %v2183 = vmax.f32 %v2099, 0.0
        %v2184 = vmax.f32 %v2100, 0.0
        %v2185 = vmax.f32 %v2101, 0.0
        %v2186 = vmax.f32 %v2102, 0.0
        %v2187 = vmax.f32 %v2103, 0.0
        %v2188 = vmax.f32 %v2104, 0.0
        %v2189 = vmax.f32 %v2105, 0.0
        %v2190 = vmax.f32 %v2106, 0.0
        %v2191 = vmax.f32 %v2107, 0.0
        %v2192 = vmax.f32 %v2108, 0.0
        %v2193 = vmax.f32 %v2109, 0.0
        %v2194 = vmax.f32 %v2110, 0.0
        %v2195 = vmax.f32 %v2111, 0.0
        %v2196 = vmax.f32 %v2112, 0.0
        %v2197 = vmax.f32 %v2113, 0.0
        %v2198 = vmax.f32 %v2114, 0.0
        %v2199 = vmax.f32 %v2115, 0.0
        %v2200 = vmax.f32 %v2116, 0.0
        %v2201 = vmax.f32 %v2117, 0.0
        %v2202 = vmax.f32 %v2118, 0.0
        %v2203 = vmax.f32 %v2119, 0.0
        %v2204 = vmax.f32 %v2120, 0.0
        %v2205 = vmax.f32 %v2121, 0.0
        %v2206 = vmax.f32 %v2122, 0.0
        %v2207 = vmax.f32 %v2123, 0.0
        %v2208 = vmax.f32 %v2124, 0.0
        %v2209 = vmax.f32 %v2125, 0.0
        %v2210 = vmax.f32 %v2126, 0.0
        %v2211 = vmax.f32 %v2127, 0.0
        %v2212 = vmax.f32 %v2128, 0.0
        %v2213 = vmax.f32 %v2129, 0.0
        %v2214 = vmax.f32 %v2130, 0.0
        %v2215 = vmax.f32 %v2131, 0.0
        %v2216 = vmax.f32 %v2132, 0.0
        %v2217 = vmax.f32 %v2133, 0.0
        %v2218 = vmax.f32 %v2134, 0.0
        %v2219 = vmax.f32 %v2135, 0.0
        %v2220 = vmax.f32 %v2136, 0.0
        %v2221 = vmax.f32 %v2137, 0.0
        %v2222 = vmax.f32 %v2138, 0.0
        %v2223 = vmax.f32 %v2139, 0.0
        %v2224 = vmax.f32 %v2140, 0.0
        %v2225 = vmax.f32 %v2141, 0.0
        %v2226 = vmax.f32 %v2142, 0.0
        %v2227 = vmax.f32 %v2143, 0.0
        %v2228 = vmax.f32 %v2144, 0.0
        %v2229 = vmax.f32 %v2145, 0.0
        %v2230 = vmax.f32 %v2146, 0.0
        %v2231 = vmax.f32 %v2147, 0.0
        %v2232 = vmax.f32 %v2148, 0.0
        %v2233 = vmax.f32 %v2149, 0.0
        %v2234 = vmax.f32 %v2150, 0.0
        %v2235 = vmax.f32 %v2151, 0.0
        %v2236 = vmax.f32 %v2152, 0.0
        %v2237 = vmax.f32 %v2153, 0.0
        %v2238 = vmax.f32 %v2154, 0.0
        %v2239 = vmax.f32 %v2155, 0.0
        %v2240 = vmax.f32 %v2156, 0.0
        %v2241 = vmax.f32 %v2157, 0.0
        %v2242 = vpack.c.bf16 %v2160, %v2158
        %v2243 = vpack.c.bf16 %v2161, %v2159
        %v2244 = vpack.c.bf16 %v2164, %v2162
        %v2245 = vpack.c.bf16 %v2165, %v2163
        %v2246 = vpack.c.bf16 %v2168, %v2166
        %v2247 = vpack.c.bf16 %v2169, %v2167
        %v2248 = vpack.c.bf16 %v2172, %v2170
        %v2249 = vpack.c.bf16 %v2173, %v2171
        %v2250 = vpack.c.bf16 %v2176, %v2174
        %v2251 = vpack.c.bf16 %v2177, %v2175
        %v2252 = vpack.c.bf16 %v2180, %v2178
        %v2253 = vpack.c.bf16 %v2181, %v2179
        %v2254 = vpack.c.bf16 %v2184, %v2182
        %v2255 = vpack.c.bf16 %v2185, %v2183
        %v2256 = vpack.c.bf16 %v2188, %v2186
        %v2257 = vpack.c.bf16 %v2189, %v2187
        %v2258 = vpack.c.bf16 %v2192, %v2190
        %v2259 = vpack.c.bf16 %v2193, %v2191
        %v2260 = vpack.c.bf16 %v2196, %v2194
        %v2261 = vpack.c.bf16 %v2197, %v2195
        %v2262 = vpack.c.bf16 %v2200, %v2198
        %v2263 = vpack.c.bf16 %v2201, %v2199
        %v2264 = vpack.c.bf16 %v2204, %v2202
        %v2265 = vpack.c.bf16 %v2205, %v2203
        %v2266 = vpack.c.bf16 %v2208, %v2206
        %v2267 = vpack.c.bf16 %v2209, %v2207
        %v2268 = vpack.c.bf16 %v2212, %v2210
        %v2269 = vpack.c.bf16 %v2213, %v2211
        %v2270 = vpack.c.bf16 %v2216, %v2214
        %v2271 = vpack.c.bf16 %v2217, %v2215
        %v2272 = vpack.c.bf16 %v2220, %v2218
        %v2273 = vpack.c.bf16 %v2221, %v2219
        %v2274 = vpack.c.bf16 %v2224, %v2222
        %v2275 = vpack.c.bf16 %v2225, %v2223
        %v2276 = vpack.c.bf16 %v2228, %v2226
        %v2277 = vpack.c.bf16 %v2229, %v2227
        %v2278 = vpack.c.bf16 %v2232, %v2230
        %v2279 = vpack.c.bf16 %v2233, %v2231
        %v2280 = vpack.c.bf16 %v2236, %v2234
        %v2281 = vpack.c.bf16 %v2237, %v2235
        %v2282 = vpack.c.bf16 %v2240, %v2238
        %v2283 = vpack.c.bf16 %v2241, %v2239
        %v2284 = vld [vmem:[%s4] sm:$0xff]
        %v2285 = vld [vmem:[%s4 + $0x8] sm:$0xff]
        %v2286 = vld [vmem:[%s4 + $0x10] sm:$0xff]
        %v2287 = vld [vmem:[%s4 + $0x18] sm:$0xff]
        %v2288 = vld [vmem:[%s4 + $0x20] sm:$0xff]
        %v2289 = vld [vmem:[%s4 + $0x28] sm:$0xff]
        %v2290 = vld [vmem:[%s4 + $0x30] sm:$0xff]
        %v2298 = vunpack.c.l.b16 %v2284
        %v2299 = vunpack.c.h.b16 %v2284
        %v2300 = vunpack.c.l.b16 %v2285
        %v2301 = vunpack.c.h.b16 %v2285
        %v2302 = vunpack.c.l.b16 %v2286
        %v2303 = vunpack.c.h.b16 %v2286
        %v2304 = vunpack.c.l.b16 %v2287
        %v2305 = vunpack.c.h.b16 %v2287
        %v2306 = vunpack.c.l.b16 %v2288
        %v2307 = vunpack.c.h.b16 %v2288
        %v2308 = vunpack.c.l.b16 %v2289
        %v2309 = vunpack.c.h.b16 %v2289
        %v2310 = vunpack.c.l.b16 %v2290
        %v2311 = vunpack.c.h.b16 %v2290
        %v2312 = vpack.c.b16 %v2300, %v2298
        %v2313 = vpack.c.b16 %v2301, %v2299
        %v2314 = vpack.c.b16 %v2304, %v2302
        %v2315 = vpack.c.b16 %v2305, %v2303
        %v2316 = vpack.c.b16 %v2308, %v2306
        %v2317 = vpack.c.b16 %v2309, %v2307
        %v2318 = vpack.c.b16 %v2310, %v2310
        %v2319 = vpack.c.b16 %v2311, %v2311
        %v2325 = vsel %vm519, %v2313, 0
        %v2328 = vsel %vm519, %v2315, 0
        %v2331 = vsel %vm519, %v2317, 0
        %v2334 = vsel %vm519, %v2319, 0
        %v2337 = vsel %vm519, %v2243, 0
        %v2340 = vsel %vm519, %v2245, 0
        %v2343 = vsel %vm519, %v2247, 0
        %v2346 = vsel %vm519, %v2249, 0
        %v2349 = vsel %vm519, %v2251, 0
        %v2352 = vsel %vm519, %v2253, 0
        %v2355 = vsel %vm519, %v2255, 0
        %v2358 = vsel %vm519, %v2257, 0
        %v2361 = vsel %vm519, %v2259, 0
        %v2364 = vsel %vm519, %v2261, 0
        %v2367 = vsel %vm519, %v2263, 0
        %v2370 = vsel %vm519, %v2265, 0
        %v2373 = vsel %vm519, %v2267, 0
        %v2376 = vsel %vm519, %v2269, 0
        %v2379 = vsel %vm519, %v2271, 0
        %v2382 = vsel %vm519, %v2273, 0
        %v2385 = vsel %vm519, %v2275, 0
        %v2388 = vsel %vm519, %v2277, 0
        %v2391 = vsel %vm519, %v2279, 0
        %v2394 = vsel %vm519, %v2281, 0
        %v2397 = vsel %vm519, %v2283, 0
        %2399 = vmatprep.subr.bf16.mxu0 %v2358
        %2400 = vmatpush1.bf16.xpose.msra.mxu0 %v2256
        %2401 = vmatprep.subr.bf16.mxu0 %v2355
        %2402 = vmatpush1.bf16.xpose.msra.mxu0 %v2254
        %2403 = vmatprep.subr.bf16.mxu0 %v2352
        %2404 = vmatpush1.bf16.xpose.msra.mxu0 %v2252
        %2405 = vmatprep.subr.bf16.mxu0 %v2349
        %2406 = vmatpush1.bf16.xpose.msra.mxu0 %v2250
        %2407 = vmatprep.subr.bf16.mxu0 %v2346
        %2408 = vmatpush1.bf16.xpose.msra.mxu0 %v2248
        %2409 = vmatprep.subr.bf16.mxu0 %v2343
        %2410 = vmatpush1.bf16.xpose.msra.mxu0 %v2246
        %2411 = vmatprep.subr.bf16.mxu0 %v2340
        %2412 = vmatpush1.bf16.xpose.msra.mxu0 %v2244
        %2413 = vmatprep.subr.bf16.mxu0 %v2337
        %2414 = vmatpush1.bf16.xpose.msra.mxu0 %v2242
        %2415 = vmatprep.subr.bf16.mxu0 %v2382
        %2416 = vmatpush2.bf16.xpose.msra.mxu0 %v2272
        %2417 = vmatprep.subr.bf16.mxu0 %v2379
        %2418 = vmatpush2.bf16.xpose.msra.mxu0 %v2270
        %2419 = vmatprep.subr.bf16.mxu0 %v2376
        %2420 = vmatpush2.bf16.xpose.msra.mxu0 %v2268
        %2421 = vmatprep.subr.bf16.mxu0 %v2373
        %2422 = vmatpush2.bf16.xpose.msra.mxu0 %v2266
        %2423 = vmatprep.subr.bf16.mxu0 %v2370
        %2424 = vmatpush2.bf16.xpose.msra.mxu0 %v2264
        %2425 = vmatprep.subr.bf16.mxu0 %v2367
        %2426 = vmatpush2.bf16.xpose.msra.mxu0 %v2262
        %2427 = vmatprep.subr.bf16.mxu0 %v2364
        %2428 = vmatpush2.bf16.xpose.msra.mxu0 %v2260
        %2429 = vmatprep.subr.bf16.mxu0 %v2361
        %2430 = vmatpush2.bf16.xpose.msra.mxu0 %v2258
        %2431 = vmatprep.mubr.bf16.mxu0 %v2325
        %2432 = vmatmul.mubr.bf16.gmra.mxu0 %v2312
        %v2433 = vpop.f32.mrf.mxu0
        %v2434 = vadd.f32 0.0, %v2433
        %v2435 = vpop.f32.mrf.mxu0
        %v2436 = vadd.f32 0.0, %v2435
        %v2437 = vpop.f32.mrf.mxu0
        %v2438 = vadd.f32 0.0, %v2437
        %v2439 = vpop.f32.mrf.mxu0
        %v2440 = vadd.f32 0.0, %v2439
        %2441 = vmatprep.mubr.bf16.mxu0 %v2328
        %2442 = vmatmul.mubr.bf16.gmra.mxu0 %v2314
        %v2443 = vpop.f32.mrf.mxu0
        %v2444 = vadd.f32 0.0, %v2443
        %v2445 = vpop.f32.mrf.mxu0
        %v2446 = vadd.f32 0.0, %v2445
        %v2447 = vpop.f32.mrf.mxu0
        %v2448 = vadd.f32 0.0, %v2447
        %v2449 = vpop.f32.mrf.mxu0
        %v2450 = vadd.f32 0.0, %v2449
        %2451 = vmatprep.mubr.bf16.mxu0 %v2331
        %2452 = vmatmul.mubr.bf16.gmra.mxu0 %v2316
        %v2453 = vpop.f32.mrf.mxu0
        %v2454 = vadd.f32 0.0, %v2453
        %v2455 = vpop.f32.mrf.mxu0
        %v2456 = vadd.f32 0.0, %v2455
        %v2457 = vpop.f32.mrf.mxu0
        %v2458 = vadd.f32 0.0, %v2457
        %v2459 = vpop.f32.mrf.mxu0
        %v2460 = vadd.f32 0.0, %v2459
        %2461 = vmatprep.mubr.bf16.mxu0 %v2334
        %2462 = vmatmul.mubr.bf16.gmra.mxu0 %v2318
        %v2463 = vpop.f32.mrf.mxu0
        %v2464 = vadd.f32 0.0, %v2463
        %v2465 = vpop.f32.mrf.mxu0
        %v2466 = vadd.f32 0.0, %v2465
        %v2467 = vpop.f32.mrf.mxu0
        %v2468 = vpop.f32.mrf.mxu0
        %2469 = vdwg.mxu0
        %2470 = vmatprep.subr.bf16.mxu0 0
        %2471 = vmatpush1.bf16.xpose.msra.mxu0 0
        %2472 = vmatprep.subr.bf16.mxu0 0
        %2473 = vmatpush1.bf16.xpose.msra.mxu0 0
        %2474 = vmatprep.subr.bf16.mxu0 0
        %2475 = vmatpush1.bf16.xpose.msra.mxu0 0
        %2476 = vmatprep.subr.bf16.mxu0 %v2397
        %2477 = vmatpush1.bf16.xpose.msra.mxu0 %v2282
        %2478 = vmatprep.subr.bf16.mxu0 %v2394
        %2479 = vmatpush1.bf16.xpose.msra.mxu0 %v2280
        %2480 = vmatprep.subr.bf16.mxu0 %v2391
        %2481 = vmatpush1.bf16.xpose.msra.mxu0 %v2278
        %2482 = vmatprep.subr.bf16.mxu0 %v2388
        %2483 = vmatpush1.bf16.xpose.msra.mxu0 %v2276
        %2484 = vmatprep.subr.bf16.mxu0 %v2385
        %2485 = vmatpush1.bf16.xpose.msra.mxu0 %v2274
        %2486 = vmatprep.subr.bf16.mxu0 0
        %2487 = vmatpush2.bf16.xpose.msra.mxu0 0
        %2488 = vmatprep.subr.bf16.mxu0 0
        %2489 = vmatpush2.bf16.xpose.msra.mxu0 0
        %2490 = vmatprep.subr.bf16.mxu0 0
        %2491 = vmatpush2.bf16.xpose.msra.mxu0 0
        %2492 = vmatprep.subr.bf16.mxu0 0
        %2493 = vmatpush2.bf16.xpose.msra.mxu0 0
        %2494 = vmatprep.subr.bf16.mxu0 0
        %2495 = vmatpush2.bf16.xpose.msra.mxu0 0
        %2496 = vmatprep.subr.bf16.mxu0 0
        %2497 = vmatpush2.bf16.xpose.msra.mxu0 0
        %2498 = vmatprep.subr.bf16.mxu0 0
        %2499 = vmatpush2.bf16.xpose.msra.mxu0 0
        %2500 = vmatprep.subr.bf16.mxu0 0
        %2501 = vmatpush2.bf16.xpose.msra.mxu0 0
        %2502 = vmatprep.mubr.bf16.mxu0 %v2325
        %2503 = vmatmul.mubr.bf16.gmra.mxu0 %v2312
        %v2504 = vpop.f32.mrf.mxu0
        %v2505 = vadd.f32 0.0, %v2504
        %v2506 = vpop.f32.mrf.mxu0
        %v2507 = vpop.f32.mrf.mxu0
        %v2508 = vadd.f32 0.0, %v2507
        %v2509 = vpop.f32.mrf.mxu0
        %2510 = vmatprep.mubr.bf16.mxu0 %v2328
        %2511 = vmatmul.mubr.bf16.gmra.mxu0 %v2314
        %v2512 = vpop.f32.mrf.mxu0
        %v2513 = vadd.f32 0.0, %v2512
        %v2514 = vpop.f32.mrf.mxu0
        %v2515 = vpop.f32.mrf.mxu0
        %v2516 = vadd.f32 0.0, %v2515
        %v2517 = vpop.f32.mrf.mxu0
        %2518 = vmatprep.mubr.bf16.mxu0 %v2331
        %2519 = vmatmul.mubr.bf16.gmra.mxu0 %v2316
        %v2520 = vpop.f32.mrf.mxu0
        %v2521 = vadd.f32 0.0, %v2520
        %v2522 = vpop.f32.mrf.mxu0
        %v2523 = vpop.f32.mrf.mxu0
        %v2524 = vadd.f32 0.0, %v2523
        %v2525 = vpop.f32.mrf.mxu0
        %2526 = vmatprep.mubr.bf16.mxu0 %v2334
        %2527 = vmatmul.mubr.bf16.gmra.mxu0 %v2318
        %v2528 = vpop.f32.mrf.mxu0
        %v2529 = vadd.f32 0.0, %v2528
        %v2530 = vpop.f32.mrf.mxu0
        %v2531 = vpop.f32.mrf.mxu0
        %v2532 = vpop.f32.mrf.mxu0
        %2533 = vdwg.mxu0
        %v2534 = vpack.c.bf16 %v2438, %v2434
        %v2535 = vpack.c.bf16 %v2440, %v2436
        %v2536 = vpack.c.bf16 %v2508, %v2505
        %v2537 = vpack.c.bf16 %v2448, %v2444
        %v2538 = vpack.c.bf16 %v2450, %v2446
        %v2539 = vpack.c.bf16 %v2516, %v2513
        %v2540 = vpack.c.bf16 %v2458, %v2454
        %v2541 = vpack.c.bf16 %v2460, %v2456
        %v2542 = vpack.c.bf16 %v2524, %v2521
        %v2543 = vpack.c.bf16 %v2464, %v2464
        %v2544 = vpack.c.bf16 %v2466, %v2466
        %v2545 = vpack.c.bf16 %v2529, %v2529
        %v2546 = vld [vmem:[%s406] sm:$0xff]
        %v2547 = vld [vmem:[%s406 + $0x8] sm:$0xff]
        %v2548 = vld [vmem:[%s406 + $0x10] sm:$0xff]
        %v2549 = vld [vmem:[%s406 + $0x18] sm:$0xff]
        %v2550 = vld [vmem:[%s406 + $0x20] sm:$0xff]
        %v2551 = vld [vmem:[%s406 + $0x28] sm:$0xff]
        %v2552 = vld [vmem:[%s406 + $0x30] sm:$0xff]
        %v2553 = vld [vmem:[%s406 + $0x38] sm:$0xff]
        %v2554 = vld [vmem:[%s406 + $0x40] sm:$0xff]
        %v2555 = vld [vmem:[%s406 + $0x48] sm:$0xff]
        %v2556 = vld [vmem:[%s406 + $0x50] sm:$0xff]
        %v2557 = vld [vmem:[%s406 + $0x58] sm:$0xff]
        %v2558 = vld [vmem:[%s406 + $0x60] sm:$0xff]
        %v2559 = vld [vmem:[%s406 + $0x68] sm:$0xff]
        %v2560 = vld [vmem:[%s406 + $0x70] sm:$0xff]
        %v2561 = vld [vmem:[%s406 + $0x78] sm:$0xff]
        %v2562 = vld [vmem:[%s406 + $0x80] sm:$0xff]
        %v2563 = vld [vmem:[%s406 + $0x88] sm:$0xff]
        %v2564 = vld [vmem:[%s406 + $0x90] sm:$0xff]
        %v2565 = vld [vmem:[%s406 + $0x98] sm:$0xff]
        %v2566 = vld [vmem:[%s406 + $0xa0] sm:$0xff]
        %v2567 = vld [vmem:[%s406 + $0xa8] sm:$0xff]
        %v2568 = vld [vmem:[%s406 + $0xb0] sm:$0xff]
        %v2569 = vld [vmem:[%s406 + $0xb8] sm:$0xff]
        %v2570 = vld [vmem:[%s406 + $0xc0] sm:$0xff]
        %v2571 = vld [vmem:[%s406 + $0xc8] sm:$0xff]
        %v2572 = vld [vmem:[%s406 + $0xd0] sm:$0xff]
        %v2573 = vld [vmem:[%s406 + $0xd8] sm:$0xff]
        %v2574 = vld [vmem:[%s406 + $0xe0] sm:$0xff]
        %v2575 = vld [vmem:[%s406 + $0xe8] sm:$0xff]
        %v2576 = vld [vmem:[%s406 + $0xf0] sm:$0xff]
        %v2577 = vld [vmem:[%s406 + $0xf8] sm:$0xff]
        %v2578 = vld [vmem:[%s406 + $0x100] sm:$0xff]
        %v2579 = vld [vmem:[%s406 + $0x108] sm:$0xff]
        %v2580 = vld [vmem:[%s406 + $0x110] sm:$0xff]
        %v2581 = vld [vmem:[%s406 + $0x118] sm:$0xff]
        %v2582 = vld [vmem:[%s406 + $0x120] sm:$0xff]
        %v2583 = vld [vmem:[%s406 + $0x128] sm:$0xff]
        %v2584 = vld [vmem:[%s406 + $0x130] sm:$0xff]
        %v2585 = vld [vmem:[%s406 + $0x138] sm:$0xff]
        %v2586 = vld [vmem:[%s406 + $0x140] sm:$0xff]
        %v2587 = vld [vmem:[%s406 + $0x148] sm:$0xff]
        %v2588 = vld [vmem:[%s406 + $0x150] sm:$0xff]
        %v2589 = vld [vmem:[%s406 + $0x158] sm:$0xff]
        %v2590 = vld [vmem:[%s406 + $0x160] sm:$0xff]
        %v2591 = vld [vmem:[%s406 + $0x168] sm:$0xff]
        %v2592 = vld [vmem:[%s406 + $0x170] sm:$0xff]
        %v2593 = vld [vmem:[%s406 + $0x178] sm:$0xff]
        %v2594 = vld [vmem:[%s406 + $0x180] sm:$0xff]
        %v2595 = vld [vmem:[%s406 + $0x188] sm:$0xff]
        %v2596 = vld [vmem:[%s406 + $0x190] sm:$0xff]
        %v2597 = vld [vmem:[%s406 + $0x198] sm:$0xff]
        %v2598 = vld [vmem:[%s406 + $0x1a0] sm:$0xff]
        %v2599 = vld [vmem:[%s406 + $0x1a8] sm:$0xff]
        %v2600 = vld [vmem:[%s406 + $0x1b0] sm:$0xff]
        %v2601 = vld [vmem:[%s406 + $0x1b8] sm:$0xff]
        %v2602 = vld [vmem:[%s406 + $0x1c0] sm:$0xff]
        %v2603 = vld [vmem:[%s406 + $0x1c8] sm:$0xff]
        %v2604 = vld [vmem:[%s406 + $0x1d0] sm:$0xff]
        %v2605 = vld [vmem:[%s406 + $0x1d8] sm:$0xff]
        %v2606 = vld [vmem:[%s406 + $0x1e0] sm:$0xff]
        %v2607 = vld [vmem:[%s406 + $0x1e8] sm:$0xff]
        %v2608 = vld [vmem:[%s406 + $0x1f0] sm:$0xff]
        %v2609 = vld [vmem:[%s406 + $0x1f8] sm:$0xff]
        %v2610 = vld [vmem:[%s406 + $0x200] sm:$0xff]
        %v2611 = vld [vmem:[%s406 + $0x208] sm:$0xff]
        %v2612 = vld [vmem:[%s406 + $0x210] sm:$0xff]
        %v2613 = vld [vmem:[%s406 + $0x218] sm:$0xff]
        %v2614 = vld [vmem:[%s406 + $0x220] sm:$0xff]
        %v2615 = vld [vmem:[%s406 + $0x228] sm:$0xff]
        %v2616 = vld [vmem:[%s406 + $0x230] sm:$0xff]
        %v2617 = vld [vmem:[%s406 + $0x238] sm:$0xff]
        %v2618 = vld [vmem:[%s406 + $0x240] sm:$0xff]
        %v2619 = vld [vmem:[%s406 + $0x248] sm:$0xff]
        %v2620 = vld [vmem:[%s406 + $0x250] sm:$0xff]
        %v2621 = vld [vmem:[%s406 + $0x258] sm:$0xff]
        %v2622 = vld [vmem:[%s406 + $0x260] sm:$0xff]
        %v2623 = vld [vmem:[%s406 + $0x268] sm:$0xff]
        %v2624 = vld [vmem:[%s406 + $0x270] sm:$0xff]
        %v2625 = vld [vmem:[%s406 + $0x278] sm:$0xff]
        %v2626 = vld [vmem:[%s406 + $0x280] sm:$0xff]
        %v2627 = vld [vmem:[%s406 + $0x288] sm:$0xff]
        %v2628 = vld [vmem:[%s406 + $0x290] sm:$0xff]
        %v2629 = vld [vmem:[%s406 + $0x298] sm:$0xff]
        %v2714 = vunpack.c.l.b16 %v2546
        %v2715 = vunpack.c.h.b16 %v2546
        %v2716 = vunpack.c.l.b16 %v2547
        %v2717 = vunpack.c.h.b16 %v2547
        %v2718 = vunpack.c.l.b16 %v2548
        %v2719 = vunpack.c.h.b16 %v2548
        %v2720 = vunpack.c.l.b16 %v2549
        %v2721 = vunpack.c.h.b16 %v2549
        %v2722 = vunpack.c.l.b16 %v2550
        %v2723 = vunpack.c.h.b16 %v2550
        %v2724 = vunpack.c.l.b16 %v2551
        %v2725 = vunpack.c.h.b16 %v2551
        %v2726 = vunpack.c.l.b16 %v2552
        %v2727 = vunpack.c.h.b16 %v2552
        %v2728 = vunpack.c.l.b16 %v2553
        %v2729 = vunpack.c.h.b16 %v2553
        %v2730 = vunpack.c.l.b16 %v2554
        %v2731 = vunpack.c.h.b16 %v2554
        %v2732 = vunpack.c.l.b16 %v2555
        %v2733 = vunpack.c.h.b16 %v2555
        %v2734 = vunpack.c.l.b16 %v2556
        %v2735 = vunpack.c.h.b16 %v2556
        %v2736 = vunpack.c.l.b16 %v2557
        %v2737 = vunpack.c.h.b16 %v2557
        %v2738 = vunpack.c.l.b16 %v2558
        %v2739 = vunpack.c.h.b16 %v2558
        %v2740 = vunpack.c.l.b16 %v2559
        %v2741 = vunpack.c.h.b16 %v2559
        %v2742 = vunpack.c.l.b16 %v2560
        %v2743 = vunpack.c.h.b16 %v2560
        %v2744 = vunpack.c.l.b16 %v2561
        %v2745 = vunpack.c.h.b16 %v2561
        %v2746 = vunpack.c.l.b16 %v2562
        %v2747 = vunpack.c.h.b16 %v2562
        %v2748 = vunpack.c.l.b16 %v2563
        %v2749 = vunpack.c.h.b16 %v2563
        %v2750 = vunpack.c.l.b16 %v2564
        %v2751 = vunpack.c.h.b16 %v2564
        %v2752 = vunpack.c.l.b16 %v2565
        %v2753 = vunpack.c.h.b16 %v2565
        %v2754 = vunpack.c.l.b16 %v2566
        %v2755 = vunpack.c.h.b16 %v2566
        %v2756 = vunpack.c.l.b16 %v2567
        %v2757 = vunpack.c.h.b16 %v2567
        %v2758 = vunpack.c.l.b16 %v2568
        %v2759 = vunpack.c.h.b16 %v2568
        %v2760 = vunpack.c.l.b16 %v2569
        %v2761 = vunpack.c.h.b16 %v2569
        %v2762 = vunpack.c.l.b16 %v2570
        %v2763 = vunpack.c.h.b16 %v2570
        %v2764 = vunpack.c.l.b16 %v2571
        %v2765 = vunpack.c.h.b16 %v2571
        %v2766 = vunpack.c.l.b16 %v2572
        %v2767 = vunpack.c.h.b16 %v2572
        %v2768 = vunpack.c.l.b16 %v2573
        %v2769 = vunpack.c.h.b16 %v2573
        %v2770 = vunpack.c.l.b16 %v2574
        %v2771 = vunpack.c.h.b16 %v2574
        %v2772 = vunpack.c.l.b16 %v2575
        %v2773 = vunpack.c.h.b16 %v2575
        %v2774 = vunpack.c.l.b16 %v2576
        %v2775 = vunpack.c.h.b16 %v2576
        %v2776 = vunpack.c.l.b16 %v2577
        %v2777 = vunpack.c.h.b16 %v2577
        %v2778 = vunpack.c.l.b16 %v2578
        %v2779 = vunpack.c.h.b16 %v2578
        %v2780 = vunpack.c.l.b16 %v2579
        %v2781 = vunpack.c.h.b16 %v2579
        %v2782 = vunpack.c.l.b16 %v2580
        %v2783 = vunpack.c.h.b16 %v2580
        %v2784 = vunpack.c.l.b16 %v2581
        %v2785 = vunpack.c.h.b16 %v2581
        %v2786 = vunpack.c.l.b16 %v2582
        %v2787 = vunpack.c.h.b16 %v2582
        %v2788 = vunpack.c.l.b16 %v2583
        %v2789 = vunpack.c.h.b16 %v2583
        %v2790 = vunpack.c.l.b16 %v2584
        %v2791 = vunpack.c.h.b16 %v2584
        %v2792 = vunpack.c.l.b16 %v2585
        %v2793 = vunpack.c.h.b16 %v2585
        %v2794 = vunpack.c.l.b16 %v2586
        %v2795 = vunpack.c.h.b16 %v2586
        %v2796 = vunpack.c.l.b16 %v2587
        %v2797 = vunpack.c.h.b16 %v2587
        %v2798 = vunpack.c.l.b16 %v2588
        %v2799 = vunpack.c.h.b16 %v2588
        %v2800 = vunpack.c.l.b16 %v2589
        %v2801 = vunpack.c.h.b16 %v2589
        %v2802 = vunpack.c.l.b16 %v2590
        %v2803 = vunpack.c.h.b16 %v2590
        %v2804 = vunpack.c.l.b16 %v2591
        %v2805 = vunpack.c.h.b16 %v2591
        %v2806 = vunpack.c.l.b16 %v2592
        %v2807 = vunpack.c.h.b16 %v2592
        %v2808 = vunpack.c.l.b16 %v2593
        %v2809 = vunpack.c.h.b16 %v2593
        %v2810 = vunpack.c.l.b16 %v2594
        %v2811 = vunpack.c.h.b16 %v2594
        %v2812 = vunpack.c.l.b16 %v2595
        %v2813 = vunpack.c.h.b16 %v2595
        %v2814 = vunpack.c.l.b16 %v2596
        %v2815 = vunpack.c.h.b16 %v2596
        %v2816 = vunpack.c.l.b16 %v2597
        %v2817 = vunpack.c.h.b16 %v2597
        %v2818 = vunpack.c.l.b16 %v2598
        %v2819 = vunpack.c.h.b16 %v2598
        %v2820 = vunpack.c.l.b16 %v2599
        %v2821 = vunpack.c.h.b16 %v2599
        %v2822 = vunpack.c.l.b16 %v2600
        %v2823 = vunpack.c.h.b16 %v2600
        %v2824 = vunpack.c.l.b16 %v2601
        %v2825 = vunpack.c.h.b16 %v2601
        %v2826 = vunpack.c.l.b16 %v2602
        %v2827 = vunpack.c.h.b16 %v2602
        %v2828 = vunpack.c.l.b16 %v2603
        %v2829 = vunpack.c.h.b16 %v2603
        %v2830 = vunpack.c.l.b16 %v2604
        %v2831 = vunpack.c.h.b16 %v2604
        %v2832 = vunpack.c.l.b16 %v2605
        %v2833 = vunpack.c.h.b16 %v2605
        %v2834 = vunpack.c.l.b16 %v2606
        %v2835 = vunpack.c.h.b16 %v2606
        %v2836 = vunpack.c.l.b16 %v2607
        %v2837 = vunpack.c.h.b16 %v2607
        %v2838 = vunpack.c.l.b16 %v2608
        %v2839 = vunpack.c.h.b16 %v2608
        %v2840 = vunpack.c.l.b16 %v2609
        %v2841 = vunpack.c.h.b16 %v2609
        %v2842 = vunpack.c.l.b16 %v2610
        %v2843 = vunpack.c.h.b16 %v2610
        %v2844 = vunpack.c.l.b16 %v2611
        %v2845 = vunpack.c.h.b16 %v2611
        %v2846 = vunpack.c.l.b16 %v2612
        %v2847 = vunpack.c.h.b16 %v2612
        %v2848 = vunpack.c.l.b16 %v2613
        %v2849 = vunpack.c.h.b16 %v2613
        %v2850 = vunpack.c.l.b16 %v2614
        %v2851 = vunpack.c.h.b16 %v2614
        %v2852 = vunpack.c.l.b16 %v2615
        %v2853 = vunpack.c.h.b16 %v2615
        %v2854 = vunpack.c.l.b16 %v2616
        %v2855 = vunpack.c.h.b16 %v2616
        %v2856 = vunpack.c.l.b16 %v2617
        %v2857 = vunpack.c.h.b16 %v2617
        %v2858 = vunpack.c.l.b16 %v2618
        %v2859 = vunpack.c.h.b16 %v2618
        %v2860 = vunpack.c.l.b16 %v2619
        %v2861 = vunpack.c.h.b16 %v2619
        %v2862 = vunpack.c.l.b16 %v2620
        %v2863 = vunpack.c.h.b16 %v2620
        %v2864 = vunpack.c.l.b16 %v2621
        %v2865 = vunpack.c.h.b16 %v2621
        %v2866 = vunpack.c.l.b16 %v2622
        %v2867 = vunpack.c.h.b16 %v2622
        %v2868 = vunpack.c.l.b16 %v2623
        %v2869 = vunpack.c.h.b16 %v2623
        %v2870 = vunpack.c.l.b16 %v2624
        %v2871 = vunpack.c.h.b16 %v2624
        %v2872 = vunpack.c.l.b16 %v2625
        %v2873 = vunpack.c.h.b16 %v2625
        %v2874 = vunpack.c.l.b16 %v2626
        %v2875 = vunpack.c.h.b16 %v2626
        %v2876 = vunpack.c.l.b16 %v2627
        %v2877 = vunpack.c.h.b16 %v2627
        %v2878 = vunpack.c.l.b16 %v2628
        %v2879 = vunpack.c.h.b16 %v2628
        %v2880 = vunpack.c.l.b16 %v2629
        %v2881 = vunpack.c.h.b16 %v2629
        %v2882 = vpack.c.b16 %v2718, %v2714
        %v2883 = vpack.c.b16 %v2719, %v2715
        %v2884 = vpack.c.b16 %v2720, %v2716
        %v2885 = vpack.c.b16 %v2721, %v2717
        %v2886 = vpack.c.b16 %v2726, %v2722
        %v2887 = vpack.c.b16 %v2727, %v2723
        %v2888 = vpack.c.b16 %v2728, %v2724
        %v2889 = vpack.c.b16 %v2729, %v2725
        %v2890 = vpack.c.b16 %v2734, %v2730
        %v2891 = vpack.c.b16 %v2735, %v2731
        %v2892 = vpack.c.b16 %v2736, %v2732
        %v2893 = vpack.c.b16 %v2737, %v2733
        %v2894 = vpack.c.b16 %v2742, %v2738
        %v2895 = vpack.c.b16 %v2743, %v2739
        %v2896 = vpack.c.b16 %v2744, %v2740
        %v2897 = vpack.c.b16 %v2745, %v2741
        %v2898 = vpack.c.b16 %v2750, %v2746
        %v2899 = vpack.c.b16 %v2751, %v2747
        %v2900 = vpack.c.b16 %v2752, %v2748
        %v2901 = vpack.c.b16 %v2753, %v2749
        %v2902 = vpack.c.b16 %v2758, %v2754
        %v2903 = vpack.c.b16 %v2759, %v2755
        %v2904 = vpack.c.b16 %v2760, %v2756
        %v2905 = vpack.c.b16 %v2761, %v2757
        %v2906 = vpack.c.b16 %v2766, %v2762
        %v2907 = vpack.c.b16 %v2767, %v2763
        %v2908 = vpack.c.b16 %v2768, %v2764
        %v2909 = vpack.c.b16 %v2769, %v2765
        %v2910 = vpack.c.b16 %v2774, %v2770
        %v2911 = vpack.c.b16 %v2775, %v2771
        %v2912 = vpack.c.b16 %v2776, %v2772
        %v2913 = vpack.c.b16 %v2777, %v2773
        %v2914 = vpack.c.b16 %v2782, %v2778
        %v2915 = vpack.c.b16 %v2783, %v2779
        %v2916 = vpack.c.b16 %v2784, %v2780
        %v2917 = vpack.c.b16 %v2785, %v2781
        %v2918 = vpack.c.b16 %v2790, %v2786
        %v2919 = vpack.c.b16 %v2791, %v2787
        %v2920 = vpack.c.b16 %v2792, %v2788
        %v2921 = vpack.c.b16 %v2793, %v2789
        %v2922 = vpack.c.b16 %v2798, %v2794
        %v2923 = vpack.c.b16 %v2799, %v2795
        %v2924 = vpack.c.b16 %v2800, %v2796
        %v2925 = vpack.c.b16 %v2801, %v2797
        %v2926 = vpack.c.b16 %v2806, %v2802
        %v2927 = vpack.c.b16 %v2807, %v2803
        %v2928 = vpack.c.b16 %v2808, %v2804
        %v2929 = vpack.c.b16 %v2809, %v2805
        %v2930 = vpack.c.b16 %v2814, %v2810
        %v2931 = vpack.c.b16 %v2815, %v2811
        %v2932 = vpack.c.b16 %v2816, %v2812
        %v2933 = vpack.c.b16 %v2817, %v2813
        %v2934 = vpack.c.b16 %v2822, %v2818
        %v2935 = vpack.c.b16 %v2823, %v2819
        %v2936 = vpack.c.b16 %v2824, %v2820
        %v2937 = vpack.c.b16 %v2825, %v2821
        %v2938 = vpack.c.b16 %v2830, %v2826
        %v2939 = vpack.c.b16 %v2831, %v2827
        %v2940 = vpack.c.b16 %v2832, %v2828
        %v2941 = vpack.c.b16 %v2833, %v2829
        %v2942 = vpack.c.b16 %v2838, %v2834
        %v2943 = vpack.c.b16 %v2839, %v2835
        %v2944 = vpack.c.b16 %v2840, %v2836
        %v2945 = vpack.c.b16 %v2841, %v2837
        %v2946 = vpack.c.b16 %v2846, %v2842
        %v2947 = vpack.c.b16 %v2847, %v2843
        %v2948 = vpack.c.b16 %v2848, %v2844
        %v2949 = vpack.c.b16 %v2849, %v2845
        %v2950 = vpack.c.b16 %v2854, %v2850
        %v2951 = vpack.c.b16 %v2855, %v2851
        %v2952 = vpack.c.b16 %v2856, %v2852
        %v2953 = vpack.c.b16 %v2857, %v2853
        %v2954 = vpack.c.b16 %v2862, %v2858
        %v2955 = vpack.c.b16 %v2863, %v2859
        %v2956 = vpack.c.b16 %v2864, %v2860
        %v2957 = vpack.c.b16 %v2865, %v2861
        %v2958 = vpack.c.b16 %v2870, %v2866
        %v2959 = vpack.c.b16 %v2871, %v2867
        %v2960 = vpack.c.b16 %v2872, %v2868
        %v2961 = vpack.c.b16 %v2873, %v2869
        %v2962 = vpack.c.b16 %v2878, %v2874
        %v2963 = vpack.c.b16 %v2879, %v2875
        %v2964 = vpack.c.b16 %v2880, %v2876
        %v2965 = vpack.c.b16 %v2881, %v2877
        %vm3050 = vcmask 654336
        %v3052 = vsel %vm3050, %v2536, 0
        %v3055 = vsel %vm3050, %v2539, 0
        %v3058 = vsel %vm3050, %v2542, 0
        %v3061 = vsel %vm3050, %v2545, 0
        %3063 = vmatprep.subr.bf16.mxu0 %v2911
        %3064 = vmatpush1.bf16.msra.mxu0 %v2910
        %3065 = vmatprep.subr.bf16.mxu0 %v2907
        %3066 = vmatpush1.bf16.msra.mxu0 %v2906
        %3067 = vmatprep.subr.bf16.mxu0 %v2903
        %3068 = vmatpush1.bf16.msra.mxu0 %v2902
        %3069 = vmatprep.subr.bf16.mxu0 %v2899
        %3070 = vmatpush1.bf16.msra.mxu0 %v2898
        %3071 = vmatprep.subr.bf16.mxu0 %v2895
        %3072 = vmatpush1.bf16.msra.mxu0 %v2894
        %3073 = vmatprep.subr.bf16.mxu0 %v2891
        %3074 = vmatpush1.bf16.msra.mxu0 %v2890
        %3075 = vmatprep.subr.bf16.mxu0 %v2887
        %3076 = vmatpush1.bf16.msra.mxu0 %v2886
        %3077 = vmatprep.subr.bf16.mxu0 %v2883
        %3078 = vmatpush1.bf16.msra.mxu0 %v2882
        %3079 = vmatprep.subr.bf16.mxu0 %v2943
        %3080 = vmatpush2.bf16.msra.mxu0 %v2942
        %3081 = vmatprep.subr.bf16.mxu0 %v2939
        %3082 = vmatpush2.bf16.msra.mxu0 %v2938
        %3083 = vmatprep.subr.bf16.mxu0 %v2935
        %3084 = vmatpush2.bf16.msra.mxu0 %v2934
        %3085 = vmatprep.subr.bf16.mxu0 %v2931
        %3086 = vmatpush2.bf16.msra.mxu0 %v2930
        %3087 = vmatprep.subr.bf16.mxu0 %v2927
        %3088 = vmatpush2.bf16.msra.mxu0 %v2926
        %3089 = vmatprep.subr.bf16.mxu0 %v2923
        %3090 = vmatpush2.bf16.msra.mxu0 %v2922
        %3091 = vmatprep.subr.bf16.mxu0 %v2919
        %3092 = vmatpush2.bf16.msra.mxu0 %v2918
        %3093 = vmatprep.subr.bf16.mxu0 %v2915
        %3094 = vmatpush2.bf16.msra.mxu0 %v2914
        %3095 = vmatprep.mubr.bf16.mxu0 %v2535
        %3096 = vmatmul.mubr.bf16.gmra.mxu0 %v2534
        %v3097 = vpop.f32.mrf.mxu0
        %v3098 = vadd.f32 0.0, %v3097
        %v3099 = vpop.f32.mrf.mxu0
        %v3100 = vadd.f32 0.0, %v3099
        %v3101 = vpop.f32.mrf.mxu0
        %v3102 = vadd.f32 0.0, %v3101
        %v3103 = vpop.f32.mrf.mxu0
        %v3104 = vadd.f32 0.0, %v3103
        %3105 = vmatprep.mubr.bf16.mxu0 %v2538
        %3106 = vmatmul.mubr.bf16.gmra.mxu0 %v2537
        %v3107 = vpop.f32.mrf.mxu0
        %v3108 = vadd.f32 0.0, %v3107
        %v3109 = vpop.f32.mrf.mxu0
        %v3110 = vadd.f32 0.0, %v3109
        %v3111 = vpop.f32.mrf.mxu0
        %v3112 = vadd.f32 0.0, %v3111
        %v3113 = vpop.f32.mrf.mxu0
        %v3114 = vadd.f32 0.0, %v3113
        %3115 = vmatprep.mubr.bf16.mxu0 %v2541
        %3116 = vmatmul.mubr.bf16.gmra.mxu0 %v2540
        %v3117 = vpop.f32.mrf.mxu0
        %v3118 = vadd.f32 0.0, %v3117
        %v3119 = vpop.f32.mrf.mxu0
        %v3120 = vadd.f32 0.0, %v3119
        %v3121 = vpop.f32.mrf.mxu0
        %v3122 = vadd.f32 0.0, %v3121
        %v3123 = vpop.f32.mrf.mxu0
        %v3124 = vadd.f32 0.0, %v3123
        %3125 = vmatprep.mubr.bf16.mxu0 %v2544
        %3126 = vmatmul.mubr.bf16.gmra.mxu0 %v2543
        %v3127 = vpop.f32.mrf.mxu0
        %v3128 = vadd.f32 0.0, %v3127
        %v3129 = vpop.f32.mrf.mxu0
        %v3130 = vadd.f32 0.0, %v3129
        %v3131 = vpop.f32.mrf.mxu0
        %v3132 = vpop.f32.mrf.mxu0
        %3133 = vdwg.mxu0
        %3134 = vmatprep.subr.bf16.mxu0 0
        %3135 = vmatpush1.bf16.msra.mxu0 0
        %3136 = vmatprep.subr.bf16.mxu0 0
        %3137 = vmatpush1.bf16.msra.mxu0 0
        %3138 = vmatprep.subr.bf16.mxu0 0
        %3139 = vmatpush1.bf16.msra.mxu0 0
        %3140 = vmatprep.subr.bf16.mxu0 %v2963
        %3141 = vmatpush1.bf16.msra.mxu0 %v2962
        %3142 = vmatprep.subr.bf16.mxu0 %v2959
        %3143 = vmatpush1.bf16.msra.mxu0 %v2958
        %3144 = vmatprep.subr.bf16.mxu0 %v2955
        %3145 = vmatpush1.bf16.msra.mxu0 %v2954
        %3146 = vmatprep.subr.bf16.mxu0 %v2951
        %3147 = vmatpush1.bf16.msra.mxu0 %v2950
        %3148 = vmatprep.subr.bf16.mxu0 %v2947
        %3149 = vmatpush1.bf16.msra.mxu0 %v2946
        %3150 = vmatprep.subr.bf16.mxu0 0
        %3151 = vmatpush2.bf16.msra.mxu0 0
        %3152 = vmatprep.subr.bf16.mxu0 0
        %3153 = vmatpush2.bf16.msra.mxu0 0
        %3154 = vmatprep.subr.bf16.mxu0 0
        %3155 = vmatpush2.bf16.msra.mxu0 0
        %3156 = vmatprep.subr.bf16.mxu0 0
        %3157 = vmatpush2.bf16.msra.mxu0 0
        %3158 = vmatprep.subr.bf16.mxu0 0
        %3159 = vmatpush2.bf16.msra.mxu0 0
        %3160 = vmatprep.subr.bf16.mxu0 0
        %3161 = vmatpush2.bf16.msra.mxu0 0
        %3162 = vmatprep.subr.bf16.mxu0 0
        %3163 = vmatpush2.bf16.msra.mxu0 0
        %3164 = vmatprep.subr.bf16.mxu0 0
        %3165 = vmatpush2.bf16.msra.mxu0 0
        %3166 = vmatprep.mubr.bf16.mxu0 0
        %3167 = vmatmul.mubr.bf16.gmra.mxu0 %v3052
        %v3168 = vpop.f32.mrf.mxu0
        %v3169 = vadd.f32 %v3098, %v3168
        %v3170 = vpop.f32.mrf.mxu0
        %v3171 = vadd.f32 %v3100, %v3170
        %v3172 = vpop.f32.mrf.mxu0
        %v3173 = vadd.f32 %v3102, %v3172
        %v3174 = vpop.f32.mrf.mxu0
        %v3175 = vadd.f32 %v3104, %v3174
        %3176 = vmatprep.mubr.bf16.mxu0 0
        %3177 = vmatmul.mubr.bf16.gmra.mxu0 %v3055
        %v3178 = vpop.f32.mrf.mxu0
        %v3179 = vadd.f32 %v3108, %v3178
        %v3180 = vpop.f32.mrf.mxu0
        %v3181 = vadd.f32 %v3110, %v3180
        %v3182 = vpop.f32.mrf.mxu0
        %v3183 = vadd.f32 %v3112, %v3182
        %v3184 = vpop.f32.mrf.mxu0
        %v3185 = vadd.f32 %v3114, %v3184
        %3186 = vmatprep.mubr.bf16.mxu0 0
        %3187 = vmatmul.mubr.bf16.gmra.mxu0 %v3058
        %v3188 = vpop.f32.mrf.mxu0
        %v3189 = vadd.f32 %v3118, %v3188
        %v3190 = vpop.f32.mrf.mxu0
        %v3191 = vadd.f32 %v3120, %v3190
        %v3192 = vpop.f32.mrf.mxu0
        %v3193 = vadd.f32 %v3122, %v3192
        %v3194 = vpop.f32.mrf.mxu0
        %v3195 = vadd.f32 %v3124, %v3194
        %3196 = vmatprep.mubr.bf16.mxu0 0
        %3197 = vmatmul.mubr.bf16.gmra.mxu0 %v3061
        %v3198 = vpop.f32.mrf.mxu0
        %v3199 = vadd.f32 %v3128, %v3198
        %v3200 = vpop.f32.mrf.mxu0
        %v3201 = vadd.f32 %v3130, %v3200
        %v3202 = vpop.f32.mrf.mxu0
        %v3203 = vpop.f32.mrf.mxu0
        %3204 = vdwg.mxu0
        %3205 = vmatprep.subr.bf16.mxu0 %v2913
        %3206 = vmatpush1.bf16.msra.mxu0 %v2912
        %3207 = vmatprep.subr.bf16.mxu0 %v2909
        %3208 = vmatpush1.bf16.msra.mxu0 %v2908
        %3209 = vmatprep.subr.bf16.mxu0 %v2905
        %3210 = vmatpush1.bf16.msra.mxu0 %v2904
        %3211 = vmatprep.subr.bf16.mxu0 %v2901
        %3212 = vmatpush1.bf16.msra.mxu0 %v2900
        %3213 = vmatprep.subr.bf16.mxu0 %v2897
        %3214 = vmatpush1.bf16.msra.mxu0 %v2896
        %3215 = vmatprep.subr.bf16.mxu0 %v2893
        %3216 = vmatpush1.bf16.msra.mxu0 %v2892
        %3217 = vmatprep.subr.bf16.mxu0 %v2889
        %3218 = vmatpush1.bf16.msra.mxu0 %v2888
        %3219 = vmatprep.subr.bf16.mxu0 %v2885
        %3220 = vmatpush1.bf16.msra.mxu0 %v2884
        %3221 = vmatprep.subr.bf16.mxu0 %v2945
        %3222 = vmatpush2.bf16.msra.mxu0 %v2944
        %3223 = vmatprep.subr.bf16.mxu0 %v2941
        %3224 = vmatpush2.bf16.msra.mxu0 %v2940
        %3225 = vmatprep.subr.bf16.mxu0 %v2937
        %3226 = vmatpush2.bf16.msra.mxu0 %v2936
        %3227 = vmatprep.subr.bf16.mxu0 %v2933
        %3228 = vmatpush2.bf16.msra.mxu0 %v2932
        %3229 = vmatprep.subr.bf16.mxu0 %v2929
        %3230 = vmatpush2.bf16.msra.mxu0 %v2928
        %3231 = vmatprep.subr.bf16.mxu0 %v2925
        %3232 = vmatpush2.bf16.msra.mxu0 %v2924
        %3233 = vmatprep.subr.bf16.mxu0 %v2921
        %3234 = vmatpush2.bf16.msra.mxu0 %v2920
        %3235 = vmatprep.subr.bf16.mxu0 %v2917
        %3236 = vmatpush2.bf16.msra.mxu0 %v2916
        %3237 = vmatprep.mubr.bf16.mxu0 %v2535
        %3238 = vmatmul.mubr.bf16.gmra.mxu0 %v2534
        %v3239 = vpop.f32.mrf.mxu0
        %v3240 = vadd.f32 0.0, %v3239
        %v3241 = vpop.f32.mrf.mxu0
        %v3242 = vadd.f32 0.0, %v3241
        %v3243 = vpop.f32.mrf.mxu0
        %v3244 = vadd.f32 0.0, %v3243
        %v3245 = vpop.f32.mrf.mxu0
        %v3246 = vadd.f32 0.0, %v3245
        %3247 = vmatprep.mubr.bf16.mxu0 %v2538
        %3248 = vmatmul.mubr.bf16.gmra.mxu0 %v2537
        %v3249 = vpop.f32.mrf.mxu0
        %v3250 = vadd.f32 0.0, %v3249
        %v3251 = vpop.f32.mrf.mxu0
        %v3252 = vadd.f32 0.0, %v3251
        %v3253 = vpop.f32.mrf.mxu0
        %v3254 = vadd.f32 0.0, %v3253
        %v3255 = vpop.f32.mrf.mxu0
        %v3256 = vadd.f32 0.0, %v3255
        %3257 = vmatprep.mubr.bf16.mxu0 %v2541
        %3258 = vmatmul.mubr.bf16.gmra.mxu0 %v2540
        %v3259 = vpop.f32.mrf.mxu0
        %v3260 = vadd.f32 0.0, %v3259
        %v3261 = vpop.f32.mrf.mxu0
        %v3262 = vadd.f32 0.0, %v3261
        %v3263 = vpop.f32.mrf.mxu0
        %v3264 = vadd.f32 0.0, %v3263
        %v3265 = vpop.f32.mrf.mxu0
        %v3266 = vadd.f32 0.0, %v3265
        %3267 = vmatprep.mubr.bf16.mxu0 %v2544
        %3268 = vmatmul.mubr.bf16.gmra.mxu0 %v2543
        %v3269 = vpop.f32.mrf.mxu0
        %v3270 = vadd.f32 0.0, %v3269
        %v3271 = vpop.f32.mrf.mxu0
        %v3272 = vadd.f32 0.0, %v3271
        %v3273 = vpop.f32.mrf.mxu0
        %v3274 = vpop.f32.mrf.mxu0
        %3275 = vdwg.mxu0
        %3276 = vmatprep.subr.bf16.mxu0 0
        %3277 = vmatpush1.bf16.msra.mxu0 0
        %3278 = vmatprep.subr.bf16.mxu0 0
        %3279 = vmatpush1.bf16.msra.mxu0 0
        %3280 = vmatprep.subr.bf16.mxu0 0
        %3281 = vmatpush1.bf16.msra.mxu0 0
        %3282 = vmatprep.subr.bf16.mxu0 %v2965
        %3283 = vmatpush1.bf16.msra.mxu0 %v2964
        %3284 = vmatprep.subr.bf16.mxu0 %v2961
        %3285 = vmatpush1.bf16.msra.mxu0 %v2960
        %3286 = vmatprep.subr.bf16.mxu0 %v2957
        %3287 = vmatpush1.bf16.msra.mxu0 %v2956
        %3288 = vmatprep.subr.bf16.mxu0 %v2953
        %3289 = vmatpush1.bf16.msra.mxu0 %v2952
        %3290 = vmatprep.subr.bf16.mxu0 %v2949
        %3291 = vmatpush1.bf16.msra.mxu0 %v2948
        %3292 = vmatprep.subr.bf16.mxu0 0
        %3293 = vmatpush2.bf16.msra.mxu0 0
        %3294 = vmatprep.subr.bf16.mxu0 0
        %3295 = vmatpush2.bf16.msra.mxu0 0
        %3296 = vmatprep.subr.bf16.mxu0 0
        %3297 = vmatpush2.bf16.msra.mxu0 0
        %3298 = vmatprep.subr.bf16.mxu0 0
        %3299 = vmatpush2.bf16.msra.mxu0 0
        %3300 = vmatprep.subr.bf16.mxu0 0
        %3301 = vmatpush2.bf16.msra.mxu0 0
        %3302 = vmatprep.subr.bf16.mxu0 0
        %3303 = vmatpush2.bf16.msra.mxu0 0
        %3304 = vmatprep.subr.bf16.mxu0 0
        %3305 = vmatpush2.bf16.msra.mxu0 0
        %3306 = vmatprep.subr.bf16.mxu0 0
        %3307 = vmatpush2.bf16.msra.mxu0 0
        %3308 = vmatprep.mubr.bf16.mxu0 0
        %3309 = vmatmul.mubr.bf16.gmra.mxu0 %v3052
        %v3310 = vpop.f32.mrf.mxu0
        %v3311 = vadd.f32 %v3240, %v3310
        %v3312 = vpop.f32.mrf.mxu0
        %v3313 = vadd.f32 %v3242, %v3312
        %v3314 = vpop.f32.mrf.mxu0
        %v3315 = vadd.f32 %v3244, %v3314
        %v3316 = vpop.f32.mrf.mxu0
        %v3317 = vadd.f32 %v3246, %v3316
        %3318 = vmatprep.mubr.bf16.mxu0 0
        %3319 = vmatmul.mubr.bf16.gmra.mxu0 %v3055
        %v3320 = vpop.f32.mrf.mxu0
        %v3321 = vadd.f32 %v3250, %v3320
        %v3322 = vpop.f32.mrf.mxu0
        %v3323 = vadd.f32 %v3252, %v3322
        %v3324 = vpop.f32.mrf.mxu0
        %v3325 = vadd.f32 %v3254, %v3324
        %v3326 = vpop.f32.mrf.mxu0
        %v3327 = vadd.f32 %v3256, %v3326
        %3328 = vmatprep.mubr.bf16.mxu0 0
        %3329 = vmatmul.mubr.bf16.gmra.mxu0 %v3058
        %v3330 = vpop.f32.mrf.mxu0
        %v3331 = vadd.f32 %v3260, %v3330
        %v3332 = vpop.f32.mrf.mxu0
        %v3333 = vadd.f32 %v3262, %v3332
        %v3334 = vpop.f32.mrf.mxu0
        %v3335 = vadd.f32 %v3264, %v3334
        %v3336 = vpop.f32.mrf.mxu0
        %v3337 = vadd.f32 %v3266, %v3336
        %3338 = vmatprep.mubr.bf16.mxu0 0
        %3339 = vmatmul.mubr.bf16.gmra.mxu0 %v3061
        %v3340 = vpop.f32.mrf.mxu0
        %v3341 = vadd.f32 %v3270, %v3340
        %v3342 = vpop.f32.mrf.mxu0
        %v3343 = vadd.f32 %v3272, %v3342
        %v3344 = vpop.f32.mrf.mxu0
        %v3345 = vpop.f32.mrf.mxu0
        %3346 = vdwg.mxu0
        %3347 = vst [vmem:[%s431] sm:$0xff] %v3169
        %3348 = vst [vmem:[%s431 + $0x8] sm:$0xff] %v3171
        %3349 = vst [vmem:[%s431 + $0x10] sm:$0xff] %v3311
        %3350 = vst [vmem:[%s431 + $0x18] sm:$0xff] %v3313
        %3351 = vst [vmem:[%s431 + $0x20] sm:$0xff] %v3173
        %3352 = vst [vmem:[%s431 + $0x28] sm:$0xff] %v3175
        %3353 = vst [vmem:[%s431 + $0x30] sm:$0xff] %v3315
        %3354 = vst [vmem:[%s431 + $0x38] sm:$0xff] %v3317
        %3355 = vst [vmem:[%s431 + $0x40] sm:$0xff] %v3179
        %3356 = vst [vmem:[%s431 + $0x48] sm:$0xff] %v3181
        %3357 = vst [vmem:[%s431 + $0x50] sm:$0xff] %v3321
        %3358 = vst [vmem:[%s431 + $0x58] sm:$0xff] %v3323
        %3359 = vst [vmem:[%s431 + $0x60] sm:$0xff] %v3183
        %3360 = vst [vmem:[%s431 + $0x68] sm:$0xff] %v3185
        %3361 = vst [vmem:[%s431 + $0x70] sm:$0xff] %v3325
        %3362 = vst [vmem:[%s431 + $0x78] sm:$0xff] %v3327
        %3363 = vst [vmem:[%s431 + $0x80] sm:$0xff] %v3189
        %3364 = vst [vmem:[%s431 + $0x88] sm:$0xff] %v3191
        %3365 = vst [vmem:[%s431 + $0x90] sm:$0xff] %v3331
        %3366 = vst [vmem:[%s431 + $0x98] sm:$0xff] %v3333
        %3367 = vst [vmem:[%s431 + $0xa0] sm:$0xff] %v3193
        %3368 = vst [vmem:[%s431 + $0xa8] sm:$0xff] %v3195
        %3369 = vst [vmem:[%s431 + $0xb0] sm:$0xff] %v3335
        %3370 = vst [vmem:[%s431 + $0xb8] sm:$0xff] %v3337
        %3371 = vst [vmem:[%s431 + $0xc0] sm:$0xff] %v3199
        %3372 = vst [vmem:[%s431 + $0xc8] sm:$0xff] %v3201
        %3373 = vst [vmem:[%s431 + $0xd0] sm:$0xff] %v3341
        %3374 = vst [vmem:[%s431 + $0xd8] sm:$0xff] %v3343
        %s3375 = sand.u32 %s156, 1
        %s3376 = sand.u32 %s156, 1
        %s3377 = smul.addr %s3376, 224
        %s3378 = scalar_lea.vmem [#allocation3], %s3377
        // Predicated region
        $region68: #{fused_bn_add_relu_conv.1} parent=62 // pred_check
          %p3379 = pneg %p166
        $region69: #{fused_bn_add_relu_conv.1} parent=62 // pred_check_branch
          %3381 = sbr.rel (%p3379) target = $region71
        $region70: #{fused_bn_add_relu_conv.1} parent=62 // pred_region
          %s3382 = smul.u32 4, %s17
          %s3383 = smul.addr %s3382, 8
          %s3384 = scalar_lea.vmem %s6, %s3383
          // Predicated region
          $region72: #{fused_bn_add_relu_conv.1} parent=70 // pred_check
            _
          $region73: #{fused_bn_add_relu_conv.1} parent=70 // pred_check_branch
            %3386 = sbr.rel (0) target = $region75
          $region74: #{fused_bn_add_relu_conv.1} parent=70 // pred_region
            // Predicated region
            $region76: #{fused_bn_add_relu_conv.1} parent=74 // pred_check
              _
            $region77: #{fused_bn_add_relu_conv.1} parent=74 // pred_check_branch
              %3388 = sbr.rel (0) target = $region79
            $region78: #{fused_bn_add_relu_conv.1} parent=74 // pred_region
              loop: start=0, step=1, limit=1
              $region80: #{fused_bn_add_relu_conv.1} parent=78 // loop_pre_header
                _
              $region81: #{fused_bn_add_relu_conv.1} parent=78 // loop_header
                %s3390 = sphi 0, %s3394
                %p3391 = scmp.ge.s32.totalorder %s3390, 1
                %s3395 = sphi %s3378, %s3378
                %s3396 = sphi %s3384, %s3384
              $region82: #{fused_bn_add_relu_conv.1} parent=78 // loop_header_branch
                %3393 = sbr.rel (%p3391) target = $region86
              $region83: #{fused_bn_add_relu_conv.1} parent=78 // loop_body
                %v3397 = vld [vmem:[%s3395] sm:$0xff]
                %3398 = vst [vmem:[%s3396] sm:$0xff] %v3397
                %v3399 = vld [vmem:[%s3395 + $0x8] sm:$0xff]
                %3400 = vst [vmem:[%s3396 + $0x8] sm:$0xff] %v3399
                %v3401 = vld [vmem:[%s3395 + $0x10] sm:$0xff]
                %3402 = vst [vmem:[%s3396 + $0x10] sm:$0xff] %v3401
                %v3403 = vld [vmem:[%s3395 + $0x18] sm:$0xff]
                %3404 = vst [vmem:[%s3396 + $0x18] sm:$0xff] %v3403
                %v3405 = vld [vmem:[%s3395 + $0x20] sm:$0xff]
                %3406 = vst [vmem:[%s3396 + $0x40] sm:$0xff] %v3405
                %v3407 = vld [vmem:[%s3395 + $0x28] sm:$0xff]
                %3408 = vst [vmem:[%s3396 + $0x48] sm:$0xff] %v3407
                %v3409 = vld [vmem:[%s3395 + $0x30] sm:$0xff]
                %3410 = vst [vmem:[%s3396 + $0x50] sm:$0xff] %v3409
                %v3411 = vld [vmem:[%s3395 + $0x38] sm:$0xff]
                %3412 = vst [vmem:[%s3396 + $0x58] sm:$0xff] %v3411
                %v3413 = vld [vmem:[%s3395 + $0x40] sm:$0xff]
                %3414 = vst [vmem:[%s3396 + $0x80] sm:$0xff] %v3413
                %v3415 = vld [vmem:[%s3395 + $0x48] sm:$0xff]
                %3416 = vst [vmem:[%s3396 + $0x88] sm:$0xff] %v3415
                %v3417 = vld [vmem:[%s3395 + $0x50] sm:$0xff]
                %3418 = vst [vmem:[%s3396 + $0x90] sm:$0xff] %v3417
                %v3419 = vld [vmem:[%s3395 + $0x58] sm:$0xff]
                %3420 = vst [vmem:[%s3396 + $0x98] sm:$0xff] %v3419
                %v3421 = vld [vmem:[%s3395 + $0x60] sm:$0xff]
                %3422 = vst [vmem:[%s3396 + $0xc0] sm:$0xff] %v3421
                %v3423 = vld [vmem:[%s3395 + $0x68] sm:$0xff]
                %3424 = vst [vmem:[%s3396 + $0xc8] sm:$0xff] %v3423
                %v3425 = vld [vmem:[%s3395 + $0x70] sm:$0xff]
                %3426 = vst [vmem:[%s3396 + $0xd0] sm:$0xff] %v3425
                %v3427 = vld [vmem:[%s3395 + $0x78] sm:$0xff]
                %3428 = vst [vmem:[%s3396 + $0xd8] sm:$0xff] %v3427
                %v3429 = vld [vmem:[%s3395 + $0x80] sm:$0xff]
                %3430 = vst [vmem:[%s3396 + $0x100] sm:$0xff] %v3429
                %v3431 = vld [vmem:[%s3395 + $0x88] sm:$0xff]
                %3432 = vst [vmem:[%s3396 + $0x108] sm:$0xff] %v3431
                %v3433 = vld [vmem:[%s3395 + $0x90] sm:$0xff]
                %3434 = vst [vmem:[%s3396 + $0x110] sm:$0xff] %v3433
                %v3435 = vld [vmem:[%s3395 + $0x98] sm:$0xff]
                %3436 = vst [vmem:[%s3396 + $0x118] sm:$0xff] %v3435
                %v3437 = vld [vmem:[%s3395 + $0xa0] sm:$0xff]
                %3438 = vst [vmem:[%s3396 + $0x140] sm:$0xff] %v3437
                %v3439 = vld [vmem:[%s3395 + $0xa8] sm:$0xff]
                %3440 = vst [vmem:[%s3396 + $0x148] sm:$0xff] %v3439
                %v3441 = vld [vmem:[%s3395 + $0xb0] sm:$0xff]
                %3442 = vst [vmem:[%s3396 + $0x150] sm:$0xff] %v3441
                %v3443 = vld [vmem:[%s3395 + $0xb8] sm:$0xff]
                %3444 = vst [vmem:[%s3396 + $0x158] sm:$0xff] %v3443
                %v3445 = vld [vmem:[%s3395 + $0xc0] sm:$0xff]
                %3446 = vst [vmem:[%s3396 + $0x180] sm:$0xff] %v3445
                %v3447 = vld [vmem:[%s3395 + $0xc8] sm:$0xff]
                %3448 = vst [vmem:[%s3396 + $0x188] sm:$0xff] %v3447
                %v3449 = vld [vmem:[%s3395 + $0xd0] sm:$0xff]
                %3450 = vst [vmem:[%s3396 + $0x190] sm:$0xff] %v3449
                %v3451 = vld [vmem:[%s3395 + $0xd8] sm:$0xff]
                %3452 = vst [vmem:[%s3396 + $0x198] sm:$0xff] %v3451
              $region84: #{fused_bn_add_relu_conv.1} parent=78 // loop_footer
                %s3394 = sadd.s32 1, %s3390
              $region85: #{fused_bn_add_relu_conv.1} parent=78 // loop_footer_branch
                %3389 = sbr.rel target = $region81
              $region86: #{fused_bn_add_relu_conv.1} parent=78 // loop_exit
                _
            $region79: #{fused_bn_add_relu_conv.1} parent=74 // pred_fallthru
              _
            // Predicated region
            $region87: #{fused_bn_add_relu_conv.1} parent=74 // pred_check
              _
            $region88: #{fused_bn_add_relu_conv.1} parent=74 // pred_check_branch
              %3454 = sbr.rel target = $region90
            $region89: #{fused_bn_add_relu_conv.1} parent=74 // pred_region
              _
            $region90: #{fused_bn_add_relu_conv.1} parent=74 // pred_fallthru
              _
          $region75: #{fused_bn_add_relu_conv.1} parent=70 // pred_fallthru
            _
          %3455 = vnop
        $region71: #{fused_bn_add_relu_conv.1} parent=62 // pred_fallthru
          _
      $region63: #{fused_bn_add_relu_conv.1} parent=5 // pred_fallthru
        _
      %p3456 = scmp.le.s32.totalorder 2, %s12
      // Predicated region
      $region91: #{fused_bn_add_relu_conv.1} parent=5 // pred_check
        %p3457 = pneg %p3456
      $region92: #{fused_bn_add_relu_conv.1} parent=5 // pred_check_branch
        %3459 = sbr.rel (%p3457) target = $region94
      $region93: #{fused_bn_add_relu_conv.1} parent=5 // pred_region
        %s3460 = ssub.s32 %s12, 2
        // Predicated region
        $region95: #{fused_bn_add_relu_conv.1} parent=93 // pred_check
          %p3461 = pneg %p172
        $region96: #{fused_bn_add_relu_conv.1} parent=93 // pred_check_branch
          %3463 = sbr.rel (%p3461) target = $region98
        $region97: #{fused_bn_add_relu_conv.1} parent=93 // pred_region
          %s3464 = sand.u32 %s157, 1
          %s3465 = sand.u32 %s157, 1
          %s3466 = smul.addr %s3465, 224
          %s3467 = scalar_lea.vmem [#allocation3], %s3466
        $region98: #{fused_bn_add_relu_conv.1} parent=93 // pred_fallthru
          _
      $region94: #{fused_bn_add_relu_conv.1} parent=5 // pred_fallthru
        _
    $region6: #{fused_bn_add_relu_conv.1} parent=1 // loop_footer
      %s16 = sadd.s32 1, %s12
    $region7: #{fused_bn_add_relu_conv.1} parent=1 // loop_footer_branch
      %11 = sbr.rel target = $region3
    $region8: #{fused_bn_add_relu_conv.1} parent=1 // loop_exit
      _

</llo_original>
